<compile_context>
chip_gen: v5e
topology: v5e:2x2
jax: 0.10.0
libtpu: 0.0.40
codegen_flags: <defaults>
</compile_context>

<pallas_src>
import functools

import jax
import jax.numpy as jnp
from jax.experimental import pallas as pl
from jax.experimental.pallas import tpu as pltpu


# ---------------------------------------------------------------------------
# Tile-size helpers
# ---------------------------------------------------------------------------
def _pick_tile(n, target):
    """Largest divisor of n that is <= target and MXU/vreg friendly.

    Prefers multiples of 256 (v6e/v7x MXU), then 128 (v5e MXU / lane width), then 32,
    then 8 (sublanes).  Falls back to n itself (single block).
    """
    target = max(8, min(target, n))
    for mult in (256, 128, 32, 8):
        t = (target // mult) * mult
        while t >= mult:
            if n % t == 0:
                return t
            t -= mult
    return n


def _qkv_row_tile(H, W, target_rows):
    """Number of image rows (th) covered by one QKV block.

    th must be even and divide H, and (th//2)*(W//2) (pooled positions produced per
    block) must be a multiple of 128 so the pooled output blocks are legal tiles --
    unless the block covers the whole image (th == H).  Prefer the largest th with
    th*W <= target_rows; else the smallest legal th; else fall back to th == H.
    """
    best = None
    smallest = None
    for th in range(2, H, 2):
        if H % th:
            continue
        if ((th // 2) * (W // 2)) % 128:
            continue
        if smallest is None:
            smallest = th
        if th * W <= target_rows:
            best = th
    if best is not None:
        return best
    if smallest is not None:
        return smallest
    return H


# ---------------------------------------------------------------------------
# Kernel 1: theta/phi/g 1x1 convs (one x read) + fused 2x2 max-pool of phi/g
# ---------------------------------------------------------------------------
def _qkv_pool_kernel(x_ref, w_t_ref, w_p_ref, w_g_ref, b_t_ref, b_p_ref, b_g_ref,
                     theta_ref, phi_ref, g_ref, phi_scr, g_scr, *, th, W):
    x = x_ref[...].astype(jnp.bfloat16)                               # (th*W, C)

    theta = jnp.dot(x, w_t_ref[...], preferred_element_type=jnp.float32) + b_t_ref[...]
    theta_ref[...] = theta.astype(theta_ref.dtype)

    phi = jnp.dot(x, w_p_ref[...], preferred_element_type=jnp.float32) + b_p_ref[...]
    g = jnp.dot(x, w_g_ref[...], preferred_element_type=jnp.float32) + b_g_ref[...]

    # MaxPool2d(2, 2) over the (th, W) spatial grid covered by this block.
    #   Stage 1 (H direction): pairwise max of adjacent image rows -> VMEM scratch.
    #   Stage 2 (W direction): pairwise max of adjacent columns via stride-2 sublane reads.
    hp = th // 2
    for j in range(hp):                                               # static unroll, hp small
        r0, r1, r2 = 2 * j * W, (2 * j + 1) * W, (2 * j + 2) * W
        phi_scr[j * W:(j + 1) * W, :] = jnp.maximum(phi[r0:r1, :], phi[r1:r2, :])
        g_scr[j * W:(j + 1) * W, :] = jnp.maximum(g[r0:r1, :], g[r1:r2, :])
    n_half = (hp * W) // 2
    phi_ref[...] = jnp.maximum(phi_scr[pl.ds(0, n_half, 2), :],
                               phi_scr[pl.ds(1, n_half, 2), :]).astype(phi_ref.dtype)
    g_ref[...] = jnp.maximum(g_scr[pl.ds(0, n_half, 2), :],
                             g_scr[pl.ds(1, n_half, 2), :]).astype(g_ref.dtype)


def qkv_pool_conv(x_seq, H, W, w_t, w_p, w_g, b_t, b_p, b_g, *,
                  target_rows=512, vmem_limit_bytes=None):
    """x_seq: (B, H*W, C) f32 -> theta (B, Nq, Ci), phi_p (B, Nkv, Ci), g_p (B, Nkv, Ci) bf16."""
    B, Nq, C = x_seq.shape
    Ci = w_t.shape[1]
    Hp, Wp = H // 2, W // 2
    Nkv = Hp * Wp
    th = _qkv_row_tile(H, W, target_rows)
    R = th * W
    nkv_t = (th // 2) * Wp

    kernel = functools.partial(_qkv_pool_kernel, th=th, W=W)
    const = lambda b, r: (0, 0)
    return pl.pallas_call(
        kernel,
        out_shape=(jax.ShapeDtypeStruct((B, Nq, Ci), jnp.bfloat16),
                   jax.ShapeDtypeStruct((B, Nkv, Ci), jnp.bfloat16),
                   jax.ShapeDtypeStruct((B, Nkv, Ci), jnp.bfloat16)),
        grid=(B, H // th),
        in_specs=[
            pl.BlockSpec((pl.Squeezed(), R, C), lambda b, r: (b, r, 0)),
            # TODO(synk): pipeline_mode=pl.Buffered(1) on these loop-invariant weight/bias
            # blocks to halve their VMEM footprint (matters most on v7x's 64 MiB VMEM).
            pl.BlockSpec((C, Ci), const),
            pl.BlockSpec((C, Ci), const),
            pl.BlockSpec((C, Ci), const),
            pl.BlockSpec((1, Ci), const),
            pl.BlockSpec((1, Ci), const),
            pl.BlockSpec((1, Ci), const),
        ],
        out_specs=(
            pl.BlockSpec((pl.Squeezed(), R, Ci), lambda b, r: (b, r, 0)),
            pl.BlockSpec((pl.Squeezed(), nkv_t, Ci), lambda b, r: (b, r, 0)),
            pl.BlockSpec((pl.Squeezed(), nkv_t, Ci), lambda b, r: (b, r, 0)),
        ),
        scratch_shapes=[pltpu.VMEM(((th // 2) * W, Ci), jnp.float32),
                        pltpu.VMEM(((th // 2) * W, Ci), jnp.float32)],
        compiler_params=pltpu.CompilerParams(
            dimension_semantics=("parallel", "parallel"),
            vmem_limit_bytes=vmem_limit_bytes),
    )(x_seq, w_t, w_p, w_g, b_t, b_p, b_g)


# ---------------------------------------------------------------------------
# Kernel 2: attention + W conv + folded BatchNorm + residual, tiled over queries
# ---------------------------------------------------------------------------
def _attn_wconv_res_kernel(theta_ref, phiT_ref, g_ref, w_ref, scale_ref, shift_ref,
                           x_ref, o_ref):
    # phi arrives pre-transposed (Ci, Nkv): plain MXU matmul, no per-step XLU transpose.
    s = jnp.dot(theta_ref[...], phiT_ref[...], preferred_element_type=jnp.float32)  # (tq, Nkv)
    m = jnp.max(s, axis=-1, keepdims=True)
    # TODO(synk): on v6e/v7x with small Ci compute the exp in bf16 (bf16 EUP, ~2x) while
    # keeping the denom sum in f32; kept f32 here so the same kernel is also safe on v5e.
    p = jnp.exp(s - m)
    denom = jnp.sum(p, axis=-1, keepdims=True)
    y = jnp.dot(p.astype(jnp.bfloat16), g_ref[...], preferred_element_type=jnp.float32)  # (tq, Ci)
    # Exact reciprocal on the tiny (tq, 1) tile (approx=True EUP reciprocal would only buy
    # a free slot at ~1e-3 relative error).
    y = y * (1.0 / denom)
    wy = jnp.dot(y.astype(jnp.bfloat16), w_ref[...], preferred_element_type=jnp.float32)  # (tq, C)
    o_ref[...] = (wy * scale_ref[...] + shift_ref[...] + x_ref[...]).astype(o_ref.dtype)


def attention_wconv_residual(theta, phi_t, g_p, w_out, scale, shift, x_seq, *,
                             tq=256, vmem_limit_bytes=None):
    """theta (B,Nq,Ci) bf16, phi_t (B,Ci,Nkv) bf16, g_p (B,Nkv,Ci) bf16 -> z (B,Nq,C) f32."""
    B, Nq, Ci = theta.shape
    Nkv = g_p.shape[1]
    C = w_out.shape[1]
    tq = _pick_tile(Nq, tq)
    const = lambda b, q: (0, 0)
    return pl.pallas_call(
        _attn_wconv_res_kernel,
        out_shape=jax.ShapeDtypeStruct((B, Nq, C), x_seq.dtype),
        grid=(B, Nq // tq),
        in_specs=[
            pl.BlockSpec((pl.Squeezed(), tq, Ci), lambda b, q: (b, q, 0)),
            # phi^T / g blocks only change at batch boundaries (re-DMA'd once per batch).
            # TODO(synk): pipeline_mode=pl.Buffered(1) + flash-style Nkv tiling to bound
            # VMEM for very large feature maps (mainly for v7x's 64 MiB VMEM).
            pl.BlockSpec((pl.Squeezed(), Ci, Nkv), lambda b, q: (b, 0, 0)),
            pl.BlockSpec((pl.Squeezed(), Nkv, Ci), lambda b, q: (b, 0, 0)),
            pl.BlockSpec((Ci, C), const),
            pl.BlockSpec((1, C), const),
            pl.BlockSpec((1, C), const),
            pl.BlockSpec((pl.Squeezed(), tq, C), lambda b, q: (b, q, 0)),
        ],
        out_specs=pl.BlockSpec((pl.Squeezed(), tq, C), lambda b, q: (b, q, 0)),
        # z has the same shape/dtype as the x residual input and x has no later consumer:
        # reuse its HBM buffer instead of allocating a fresh (B, Nq, C) output.
        input_output_aliases={6: 0},
        compiler_params=pltpu.CompilerParams(
            dimension_semantics=("parallel", "parallel"),
            vmem_limit_bytes=vmem_limit_bytes),
    )(theta, phi_t, g_p, w_out, scale, shift, x_seq)


# ---------------------------------------------------------------------------
# Full forward pass
# ---------------------------------------------------------------------------
def nonlocal_block_forward_nhwc(x_nhwc, params, *, qkv_rows=512, tq=256,
                                vmem_limit_bytes=None):
    """NonLocal block forward on channels-last input; x_nhwc: (B, H, W, C) f32."""
    B, H, W, C = x_nhwc.shape
    if H % 2 or W % 2:
        # TODO(synk): PyTorch MaxPool2d(2,2) floors odd spatial dims; not supported here.
        raise ValueError("sub_sample=True 2x2 max-pool requires even H and W")
    Ci = params["theta_w"].shape[1]
    bf = jnp.bfloat16
    x_seq = x_nhwc.reshape(B, H * W, C)           # free reshape (merges adjacent dims)

    theta, phi_p, g_p = qkv_pool_conv(
        x_seq, H, W,
        params["theta_w"].astype(bf), params["phi_w"].astype(bf), params["g_w"].astype(bf),
        params["theta_b"].reshape(1, Ci), params["phi_b"].reshape(1, Ci),
        params["g_b"].reshape(1, Ci),
        target_rows=qkv_rows, vmem_limit_bytes=vmem_limit_bytes)

    # Pre-transpose pooled phi once (small: B*Nkv*Ci bf16, ~1/16 of an x pass) so every
    # per-query-tile score matmul is a plain (tq, Ci) @ (Ci, Nkv) with no XLU transpose.
    # TODO(synk): fold this transpose into kernel 1's epilogue to skip the extra HBM pass.
    phi_t = jnp.swapaxes(phi_p, 1, 2)

    # BatchNorm (eval-mode running stats) folded to affine; W-conv bias folded into shift.
    eps = 1e-5
    scale = params["bn_gamma"] / jnp.sqrt(params["bn_var"] + eps)
    shift = params["bn_beta"] - params["bn_mean"] * scale
    total_shift = params["W_b"] * scale + shift

    z_seq = attention_wconv_residual(
        theta, phi_t, g_p, params["W_w"].astype(bf),
        scale.reshape(1, C), total_shift.reshape(1, C), x_seq,
        tq=tq, vmem_limit_bytes=vmem_limit_bytes)
    return z_seq.reshape(B, H, W, C)


def nonlocal_block_forward(x, params, *, qkv_rows=512, tq=256, vmem_limit_bytes=None):
    """x: (B, C, H, W) NCHW f32 -> z: (B, C, H, W) f32 (matches the PyTorch module I/O).

    The two transposes below are full HBM passes; keep activations NHWC end-to-end in the
    surrounding model (call nonlocal_block_forward_nhwc directly) to drop them.
    """
    x_nhwc = jnp.transpose(x, (0, 2, 3, 1))
    z = nonlocal_block_forward_nhwc(x_nhwc, params, qkv_rows=qkv_rows, tq=tq,
                                    vmem_limit_bytes=vmem_limit_bytes)
    return jnp.transpose(z, (0, 3, 1, 2))


# ---------------------------------------------------------------------------
# Deterministic parameter construction (mirrors _NonLocalBlockND.__init__)
# ---------------------------------------------------------------------------
def make_params(key, in_channels, inter_channels):
    ks = jax.random.split(key, 8)
    C, Ci = in_channels, inter_channels

    def w(k, cin, cout):
        # stored as (Cin, Cout); corresponds to torch Conv2d weight[:, :, 0, 0].T
        return jax.random.normal(k, (cin, cout), jnp.float32) * 0.1

    def b(k, cout):
        return jax.random.normal(k, (cout,), jnp.float32) * 0.1

    return {
        "g_w": w(ks[0], C, Ci), "g_b": b(ks[1], Ci),
        "theta_w": w(ks[2], C, Ci), "theta_b": b(ks[3], Ci),
        "phi_w": w(ks[4], C, Ci), "phi_b": b(ks[5], Ci),
        "W_w": w(ks[6], Ci, C), "W_b": b(ks[7], C),
        # BatchNorm2d: __init__ sets weight=0, bias=0; eval-mode running stats.
        "bn_gamma": jnp.zeros((C,), jnp.float32),
        "bn_beta": jnp.zeros((C,), jnp.float32),
        "bn_mean": jnp.zeros((C,), jnp.float32),
        "bn_var": jnp.ones((C,), jnp.float32),
    }


# Pure-JAX f32 reference for validation.
def reference_forward(x, params):
    B, C, H, W = x.shape
    Ci = params["theta_w"].shape[1]
    Hp, Wp = H // 2, W // 2
    x_cl = jnp.transpose(x, (0, 2, 3, 1))

    def c1x1(a, wm, bv):
        return jnp.einsum("bhwc,cd->bhwd", a, wm) + bv

    theta = c1x1(x_cl, params["theta_w"], params["theta_b"]).reshape(B, H * W, Ci)
    phi = c1x1(x_cl, params["phi_w"], params["phi_b"])
    g = c1x1(x_cl, params["g_w"], params["g_b"])
    pool = lambda a: a.reshape(B, Hp, 2, Wp, 2, Ci).max(axis=(2, 4)).reshape(B, Hp * Wp, Ci)
    phi_p, g_p = pool(phi), pool(g)
    f = jnp.einsum("bqc,bkc->bqk", theta, phi_p)
    f = jax.nn.softmax(f, axis=-1)
    y = jnp.einsum("bqk,bkc->bqc", f, g_p).reshape(B, H, W, Ci)
    eps = 1e-5
    scale = params["bn_gamma"] / jnp.sqrt(params["bn_var"] + eps)
    shift = params["bn_beta"] - params["bn_mean"] * scale
    w_y = (jnp.einsum("bhwc,cd->bhwd", y, params["W_w"]) + params["W_b"]) * scale + shift
    return (w_y + x_cl).transpose(0, 3, 1, 2)


if __name__ == "__main__":
    # Small shapes; H=W=32 so the QKV kernel runs >1 row-tile per batch (grid (2, 2)) and
    # the attention kernel runs 4 query tiles per batch (grid (2, 4)).
    B, C, H, W = 2, 16, 32, 32
    inter = max(C // 2, 1)   # inter_channels = in_channels // 2 (per __init__)

    key = jax.random.PRNGKey(0)
    kx, kp = jax.random.split(key)
    x = jax.random.normal(kx, (B, C, H, W), jnp.float32)

    fwd = jax.jit(nonlocal_block_forward)

    # Check 1: module default init (BN gamma = beta = 0) -> the W branch is zero, so z == x.
    params0 = make_params(kp, C, inter)
    z0 = jax.block_until_ready(fwd(x, params0))
    assert z0.shape == (B, C, H, W)
    assert jnp.allclose(z0, x, atol=1e-6)

    # Check 2: nonzero BN affine so the conv / pool / softmax / attention path matters.
    kg, kb = jax.random.split(jax.random.PRNGKey(1))
    params1 = dict(params0)
    params1["bn_gamma"] = 1.0 + 0.5 * jax.random.normal(kg, (C,), jnp.float32)
    params1["bn_beta"] = 0.1 * jax.random.normal(kb, (C,), jnp.float32)
    z1 = jax.block_until_ready(fwd(x, params1))
    z1_ref = reference_forward(x, params1)
    err = float(jnp.max(jnp.abs(z1 - z1_ref)))
    # bf16 matmuls / bf16 theta-phi-g storage vs the f32 reference -> loose but meaningful.
    assert jnp.allclose(z1, z1_ref, atol=2e-2, rtol=2e-2), err

    print("KERNEL_OK")
</pallas_src>

<mosaic_0001>
module attributes {stable_mosaic.version = 11 : i64} {
  func.func @_attn_wconv_res_kernel(%arg0: i32, %arg1: i32, %arg2: memref<1x256x8xbf16, #tpu.memory_space<vmem>>, %arg3: memref<1x8x256xbf16, #tpu.memory_space<vmem>>, %arg4: memref<1x256x8xbf16, #tpu.memory_space<vmem>>, %arg5: memref<8x16xbf16, #tpu.memory_space<vmem>>, %arg6: memref<1x16xf32, #tpu.memory_space<vmem>>, %arg7: memref<1x16xf32, #tpu.memory_space<vmem>>, %arg8: memref<1x256x16xf32, #tpu.memory_space<vmem>>, %arg9: memref<1x256x16xf32, #tpu.memory_space<vmem>>) attributes {dimension_semantics = [#tpu.dimension_semantics<parallel>, #tpu.dimension_semantics<parallel>], iteration_bounds = array<i64: 2, 4>, scalar_prefetch = 0 : i64, scratch_operands = 0 : i64, tpu.core_type = #tpu.core_type<tc>, window_params = [{transform_indices = @transform_0, window_bounds = array<i64: 1, 256, 8>}, {transform_indices = @transform_1, window_bounds = array<i64: 1, 8, 256>}, {transform_indices = @transform_2, window_bounds = array<i64: 1, 256, 8>}, {pipeline_mode = #tpu.pipeline_mode<synchronous>, transform_indices = @transform_3, window_bounds = array<i64: 8, 16>}, {pipeline_mode = #tpu.pipeline_mode<synchronous>, transform_indices = @transform_4, window_bounds = array<i64: 1, 16>}, {pipeline_mode = #tpu.pipeline_mode<synchronous>, transform_indices = @transform_5, window_bounds = array<i64: 1, 16>}, {transform_indices = @transform_6, window_bounds = array<i64: 1, 256, 16>}, {transform_indices = @transform_7, window_bounds = array<i64: 1, 256, 16>}]} {
    %c0 = arith.constant 0 : index
    %c0_0 = arith.constant 0 : index
    %c0_1 = arith.constant 0 : index
    %0 = vector.load %arg2[%c0, %c0_0, %c0_1] : memref<1x256x8xbf16, #tpu.memory_space<vmem>>, vector<1x256x8xbf16>
    %1 = vector.shape_cast %0 : vector<1x256x8xbf16> to vector<256x8xbf16>
    %c0_2 = arith.constant 0 : index
    %c0_3 = arith.constant 0 : index
    %c0_4 = arith.constant 0 : index
    %2 = vector.load %arg3[%c0_2, %c0_3, %c0_4] : memref<1x8x256xbf16, #tpu.memory_space<vmem>>, vector<1x8x256xbf16>
    %3 = vector.shape_cast %2 : vector<1x8x256xbf16> to vector<8x256xbf16>
    %cst = arith.constant dense<0.000000e+00> : vector<256x256xf32>
    %4 = tpu.matmul %1, %3, %cst {dimension_numbers = #tpu.dot_dimension_numbers<[1], [0], [0], [1], [0, 0, 1, 1], [], []>} : vector<256x8xbf16>, vector<8x256xbf16>, vector<256x256xf32> -> vector<256x256xf32>
    %cst_5 = arith.constant dense<0xFF800000> : vector<256xf32>
    %5 = vector.multi_reduction <maximumf>, %4, %cst_5 [1] : vector<256x256xf32> to vector<256xf32>
    %6 = vector.shape_cast %5 : vector<256xf32> to vector<256x1xf32>
    %7 = vector.broadcast %6 : vector<256x1xf32> to vector<256x256xf32>
    %8 = arith.subf %4, %7 : vector<256x256xf32>
    %9 = math.exp %8 : vector<256x256xf32>
    %cst_6 = arith.constant dense<0.000000e+00> : vector<256xf32>
    %10 = vector.multi_reduction <add>, %9, %cst_6 [1] : vector<256x256xf32> to vector<256xf32>
    %11 = vector.shape_cast %10 : vector<256xf32> to vector<256x1xf32>
    %12 = arith.truncf %9 : vector<256x256xf32> to vector<256x256xbf16>
    %c0_7 = arith.constant 0 : index
    %c0_8 = arith.constant 0 : index
    %c0_9 = arith.constant 0 : index
    %13 = vector.load %arg4[%c0_7, %c0_8, %c0_9] : memref<1x256x8xbf16, #tpu.memory_space<vmem>>, vector<1x256x8xbf16>
    %14 = vector.shape_cast %13 : vector<1x256x8xbf16> to vector<256x8xbf16>
    %cst_10 = arith.constant dense<0.000000e+00> : vector<256x8xf32>
    %15 = tpu.matmul %12, %14, %cst_10 {dimension_numbers = #tpu.dot_dimension_numbers<[1], [0], [0], [1], [0, 0, 1, 1], [], []>} : vector<256x256xbf16>, vector<256x8xbf16>, vector<256x8xf32> -> vector<256x8xf32>
    %cst_11 = arith.constant 1.000000e+00 : f32
    %16 = vector.broadcast %cst_11 : f32 to vector<256x1xf32>
    %17 = arith.divf %16, %11 : vector<256x1xf32>
    %18 = vector.broadcast %17 : vector<256x1xf32> to vector<256x8xf32>
    %19 = arith.mulf %15, %18 : vector<256x8xf32>
    %20 = arith.truncf %19 : vector<256x8xf32> to vector<256x8xbf16>
    %c0_12 = arith.constant 0 : index
    %c0_13 = arith.constant 0 : index
    %21 = vector.load %arg5[%c0_12, %c0_13] : memref<8x16xbf16, #tpu.memory_space<vmem>>, vector<8x16xbf16>
    %cst_14 = arith.constant dense<0.000000e+00> : vector<256x16xf32>
    %22 = tpu.matmul %20, %21, %cst_14 {dimension_numbers = #tpu.dot_dimension_numbers<[1], [0], [0], [1], [0, 0, 1, 1], [], []>} : vector<256x8xbf16>, vector<8x16xbf16>, vector<256x16xf32> -> vector<256x16xf32>
    %c0_15 = arith.constant 0 : index
    %c0_16 = arith.constant 0 : index
    %23 = vector.load %arg6[%c0_15, %c0_16] : memref<1x16xf32, #tpu.memory_space<vmem>>, vector<1x16xf32>
    %24 = vector.broadcast %23 : vector<1x16xf32> to vector<256x16xf32>
    %25 = arith.mulf %22, %24 : vector<256x16xf32>
    %c0_17 = arith.constant 0 : index
    %c0_18 = arith.constant 0 : index
    %26 = vector.load %arg7[%c0_17, %c0_18] : memref<1x16xf32, #tpu.memory_space<vmem>>, vector<1x16xf32>
    %27 = vector.broadcast %26 : vector<1x16xf32> to vector<256x16xf32>
    %28 = arith.addf %25, %27 : vector<256x16xf32>
    %c0_19 = arith.constant 0 : index
    %c0_20 = arith.constant 0 : index
    %c0_21 = arith.constant 0 : index
    %29 = vector.load %arg8[%c0_19, %c0_20, %c0_21] : memref<1x256x16xf32, #tpu.memory_space<vmem>>, vector<1x256x16xf32>
    %30 = vector.shape_cast %29 : vector<1x256x16xf32> to vector<256x16xf32>
    %31 = arith.addf %28, %30 : vector<256x16xf32>
    %c0_22 = arith.constant 0 : index
    %c0_23 = arith.constant 0 : index
    %c0_24 = arith.constant 0 : index
    %32 = vector.load %arg9[%c0_22, %c0_23, %c0_24] : memref<1x256x16xf32, #tpu.memory_space<vmem>>, vector<1x256x16xf32>
    %33 = vector.shape_cast %32 : vector<1x256x16xf32> to vector<256x16xf32>
    %34 = vector.shape_cast %31 : vector<256x16xf32> to vector<1x256x16xf32>
    tpu.vector_store %arg9[%c0_22, %c0_23, %c0_24], %34 {strides = array<i32>} : memref<1x256x16xf32, #tpu.memory_space<vmem>>, vector<1x256x16xf32>,
    return
  }
  func.func @transform_0(%arg0: i32, %arg1: i32) -> (i32, i32, i32) {
    %c0_i32 = arith.constant 0 : i32
    %c0_i32_0 = arith.constant 0 : i32
    return %arg0, %arg1, %c0_i32 : i32, i32, i32
  }
  func.func @transform_1(%arg0: i32, %arg1: i32) -> (i32, i32, i32) {
    %c0_i32 = arith.constant 0 : i32
    %c0_i32_0 = arith.constant 0 : i32
    %c0_i32_1 = arith.constant 0 : i32
    return %arg0, %c0_i32, %c0_i32_0 : i32, i32, i32
  }
  func.func @transform_2(%arg0: i32, %arg1: i32) -> (i32, i32, i32) {
    %c0_i32 = arith.constant 0 : i32
    %c0_i32_0 = arith.constant 0 : i32
    %c0_i32_1 = arith.constant 0 : i32
    return %arg0, %c0_i32, %c0_i32_0 : i32, i32, i32
  }
  func.func @transform_3(%arg0: i32, %arg1: i32) -> (i32, i32) {
    %c0_i32 = arith.constant 0 : i32
    %c0_i32_0 = arith.constant 0 : i32
    %c0_i32_1 = arith.constant 0 : i32
    return %c0_i32, %c0_i32_0 : i32, i32
  }
  func.func @transform_4(%arg0: i32, %arg1: i32) -> (i32, i32) {
    %c0_i32 = arith.constant 0 : i32
    %c0_i32_0 = arith.constant 0 : i32
    %c0_i32_1 = arith.constant 0 : i32
    return %c0_i32, %c0_i32_0 : i32, i32
  }
  func.func @transform_5(%arg0: i32, %arg1: i32) -> (i32, i32) {
    %c0_i32 = arith.constant 0 : i32
    %c0_i32_0 = arith.constant 0 : i32
    %c0_i32_1 = arith.constant 0 : i32
    return %c0_i32, %c0_i32_0 : i32, i32
  }
  func.func @transform_6(%arg0: i32, %arg1: i32) -> (i32, i32, i32) {
    %c0_i32 = arith.constant 0 : i32
    %c0_i32_0 = arith.constant 0 : i32
    return %arg0, %arg1, %c0_i32 : i32, i32, i32
  }
  func.func @transform_7(%arg0: i32, %arg1: i32) -> (i32, i32, i32) {
    %c0_i32 = arith.constant 0 : i32
    %c0_i32_0 = arith.constant 0 : i32
    return %arg0, %arg1, %c0_i32 : i32, i32, i32
  }
}

module attributes {stable_mosaic.version = 11 : i64} {
  func.func @_qkv_pool_kernel(%arg0: i32, %arg1: i32, %arg2: memref<1x512x16xf32, #tpu.memory_space<vmem>>, %arg3: memref<16x8xbf16, #tpu.memory_space<vmem>>, %arg4: memref<16x8xbf16, #tpu.memory_space<vmem>>, %arg5: memref<16x8xbf16, #tpu.memory_space<vmem>>, %arg6: memref<1x8xf32, #tpu.memory_space<vmem>>, %arg7: memref<1x8xf32, #tpu.memory_space<vmem>>, %arg8: memref<1x8xf32, #tpu.memory_space<vmem>>, %arg9: memref<1x512x8xbf16, #tpu.memory_space<vmem>>, %arg10: memref<1x128x8xbf16, #tpu.memory_space<vmem>>, %arg11: memref<1x128x8xbf16, #tpu.memory_space<vmem>>, %arg12: memref<256x8xf32, #tpu.memory_space<vmem>>, %arg13: memref<256x8xf32, #tpu.memory_space<vmem>>) attributes {dimension_semantics = [#tpu.dimension_semantics<parallel>, #tpu.dimension_semantics<parallel>], iteration_bounds = array<i64: 2, 2>, scalar_prefetch = 0 : i64, scratch_operands = 2 : i64, tpu.core_type = #tpu.core_type<tc>, window_params = [{transform_indices = @transform_0, window_bounds = array<i64: 1, 512, 16>}, {pipeline_mode = #tpu.pipeline_mode<synchronous>, transform_indices = @transform_1, window_bounds = array<i64: 16, 8>}, {pipeline_mode = #tpu.pipeline_mode<synchronous>, transform_indices = @transform_2, window_bounds = array<i64: 16, 8>}, {pipeline_mode = #tpu.pipeline_mode<synchronous>, transform_indices = @transform_3, window_bounds = array<i64: 16, 8>}, {pipeline_mode = #tpu.pipeline_mode<synchronous>, transform_indices = @transform_4, window_bounds = array<i64: 1, 8>}, {pipeline_mode = #tpu.pipeline_mode<synchronous>, transform_indices = @transform_5, window_bounds = array<i64: 1, 8>}, {pipeline_mode = #tpu.pipeline_mode<synchronous>, transform_indices = @transform_6, window_bounds = array<i64: 1, 8>}, {transform_indices = @transform_7, window_bounds = array<i64: 1, 512, 8>}, {transform_indices = @transform_8, window_bounds = array<i64: 1, 128, 8>}, {transform_indices = @transform_9, window_bounds = array<i64: 1, 128, 8>}]} {
    %c0 = arith.constant 0 : index
    %c0_0 = arith.constant 0 : index
    %c0_1 = arith.constant 0 : index
    %0 = vector.load %arg2[%c0, %c0_0, %c0_1] : memref<1x512x16xf32, #tpu.memory_space<vmem>>, vector<1x512x16xf32>
    %1 = vector.shape_cast %0 : vector<1x512x16xf32> to vector<512x16xf32>
    %2 = arith.truncf %1 : vector<512x16xf32> to vector<512x16xbf16>
    %c0_2 = arith.constant 0 : index
    %c0_3 = arith.constant 0 : index
    %3 = vector.load %arg3[%c0_2, %c0_3] : memref<16x8xbf16, #tpu.memory_space<vmem>>, vector<16x8xbf16>
    %cst = arith.constant dense<0.000000e+00> : vector<512x8xf32>
    %4 = tpu.matmul %2, %3, %cst {dimension_numbers = #tpu.dot_dimension_numbers<[1], [0], [0], [1], [0, 0, 1, 1], [], []>} : vector<512x16xbf16>, vector<16x8xbf16>, vector<512x8xf32> -> vector<512x8xf32>
    %c0_4 = arith.constant 0 : index
    %c0_5 = arith.constant 0 : index
    %5 = vector.load %arg6[%c0_4, %c0_5] : memref<1x8xf32, #tpu.memory_space<vmem>>, vector<1x8xf32>
    %6 = vector.broadcast %5 : vector<1x8xf32> to vector<512x8xf32>
    %7 = arith.addf %4, %6 : vector<512x8xf32>
    %8 = arith.truncf %7 : vector<512x8xf32> to vector<512x8xbf16>
    %c0_6 = arith.constant 0 : index
    %c0_7 = arith.constant 0 : index
    %c0_8 = arith.constant 0 : index
    %9 = vector.load %arg9[%c0_6, %c0_7, %c0_8] : memref<1x512x8xbf16, #tpu.memory_space<vmem>>, vector<1x512x8xbf16>
    %10 = vector.shape_cast %9 : vector<1x512x8xbf16> to vector<512x8xbf16>
    %11 = vector.shape_cast %8 : vector<512x8xbf16> to vector<1x512x8xbf16>
    tpu.vector_store %arg9[%c0_6, %c0_7, %c0_8], %11 {strides = array<i32>} : memref<1x512x8xbf16, #tpu.memory_space<vmem>>, vector<1x512x8xbf16>,
    %c0_9 = arith.constant 0 : index
    %c0_10 = arith.constant 0 : index
    %12 = vector.load %arg4[%c0_9, %c0_10] : memref<16x8xbf16, #tpu.memory_space<vmem>>, vector<16x8xbf16>
    %cst_11 = arith.constant dense<0.000000e+00> : vector<512x8xf32>
    %13 = tpu.matmul %2, %12, %cst_11 {dimension_numbers = #tpu.dot_dimension_numbers<[1], [0], [0], [1], [0, 0, 1, 1], [], []>} : vector<512x16xbf16>, vector<16x8xbf16>, vector<512x8xf32> -> vector<512x8xf32>
    %c0_12 = arith.constant 0 : index
    %c0_13 = arith.constant 0 : index
    %14 = vector.load %arg7[%c0_12, %c0_13] : memref<1x8xf32, #tpu.memory_space<vmem>>, vector<1x8xf32>
    %15 = vector.broadcast %14 : vector<1x8xf32> to vector<512x8xf32>
    %16 = arith.addf %13, %15 : vector<512x8xf32>
    %c0_14 = arith.constant 0 : index
    %c0_15 = arith.constant 0 : index
    %17 = vector.load %arg5[%c0_14, %c0_15] : memref<16x8xbf16, #tpu.memory_space<vmem>>, vector<16x8xbf16>
    %cst_16 = arith.constant dense<0.000000e+00> : vector<512x8xf32>
    %18 = tpu.matmul %2, %17, %cst_16 {dimension_numbers = #tpu.dot_dimension_numbers<[1], [0], [0], [1], [0, 0, 1, 1], [], []>} : vector<512x16xbf16>, vector<16x8xbf16>, vector<512x8xf32> -> vector<512x8xf32>
    %c0_17 = arith.constant 0 : index
    %c0_18 = arith.constant 0 : index
    %19 = vector.load %arg8[%c0_17, %c0_18] : memref<1x8xf32, #tpu.memory_space<vmem>>, vector<1x8xf32>
    %20 = vector.broadcast %19 : vector<1x8xf32> to vector<512x8xf32>
    %21 = arith.addf %18, %20 : vector<512x8xf32>
    %22 = vector.extract_strided_slice %16 {offsets = [0, 0], sizes = [32, 8], strides = [1, 1]} : vector<512x8xf32> to vector<32x8xf32>
    %23 = vector.extract_strided_slice %16 {offsets = [32, 0], sizes = [32, 8], strides = [1, 1]} : vector<512x8xf32> to vector<32x8xf32>
    %24 = arith.maximumf %22, %23 : vector<32x8xf32>
    %c0_19 = arith.constant 0 : index
    %c0_20 = arith.constant 0 : index
    %25 = vector.load %arg12[%c0_19, %c0_20] : memref<256x8xf32, #tpu.memory_space<vmem>>, vector<32x8xf32>
    tpu.vector_store %arg12[%c0_19, %c0_20], %24 {strides = array<i32>} : memref<256x8xf32, #tpu.memory_space<vmem>>, vector<32x8xf32>,
    %26 = vector.extract_strided_slice %21 {offsets = [0, 0], sizes = [32, 8], strides = [1, 1]} : vector<512x8xf32> to vector<32x8xf32>
    %27 = vector.extract_strided_slice %21 {offsets = [32, 0], sizes = [32, 8], strides = [1, 1]} : vector<512x8xf32> to vector<32x8xf32>
    %28 = arith.maximumf %26, %27 : vector<32x8xf32>
    %c0_21 = arith.constant 0 : index
    %c0_22 = arith.constant 0 : index
    %29 = vector.load %arg13[%c0_21, %c0_22] : memref<256x8xf32, #tpu.memory_space<vmem>>, vector<32x8xf32>
    tpu.vector_store %arg13[%c0_21, %c0_22], %28 {strides = array<i32>} : memref<256x8xf32, #tpu.memory_space<vmem>>, vector<32x8xf32>,
    %30 = vector.extract_strided_slice %16 {offsets = [64, 0], sizes = [32, 8], strides = [1, 1]} : vector<512x8xf32> to vector<32x8xf32>
    %31 = vector.extract_strided_slice %16 {offsets = [96, 0], sizes = [32, 8], strides = [1, 1]} : vector<512x8xf32> to vector<32x8xf32>
    %32 = arith.maximumf %30, %31 : vector<32x8xf32>
    %c32 = arith.constant 32 : index
    %c0_23 = arith.constant 0 : index
    %33 = vector.load %arg12[%c32, %c0_23] : memref<256x8xf32, #tpu.memory_space<vmem>>, vector<32x8xf32>
    tpu.vector_store %arg12[%c32, %c0_23], %32 {strides = array<i32>} : memref<256x8xf32, #tpu.memory_space<vmem>>, vector<32x8xf32>,
    %34 = vector.extract_strided_slice %21 {offsets = [64, 0], sizes = [32, 8], strides = [1, 1]} : vector<512x8xf32> to vector<32x8xf32>
    %35 = vector.extract_strided_slice %21 {offsets = [96, 0], sizes = [32, 8], strides = [1, 1]} : vector<512x8xf32> to vector<32x8xf32>
    %36 = arith.maximumf %34, %35 : vector<32x8xf32>
    %c32_24 = arith.constant 32 : index
    %c0_25 = arith.constant 0 : index
    %37 = vector.load %arg13[%c32_24, %c0_25] : memref<256x8xf32, #tpu.memory_space<vmem>>, vector<32x8xf32>
    tpu.vector_store %arg13[%c32_24, %c0_25], %36 {strides = array<i32>} : memref<256x8xf32, #tpu.memory_space<vmem>>, vector<32x8xf32>,
    %38 = vector.extract_strided_slice %16 {offsets = [128, 0], sizes = [32, 8], strides = [1, 1]} : vector<512x8xf32> to vector<32x8xf32>
    %39 = vector.extract_strided_slice %16 {offsets = [160, 0], sizes = [32, 8], strides = [1, 1]} : vector<512x8xf32> to vector<32x8xf32>
    %40 = arith.maximumf %38, %39 : vector<32x8xf32>
    %c64 = arith.constant 64 : index
    %c0_26 = arith.constant 0 : index
    %41 = vector.load %arg12[%c64, %c0_26] : memref<256x8xf32, #tpu.memory_space<vmem>>, vector<32x8xf32>
    tpu.vector_store %arg12[%c64, %c0_26], %40 {strides = array<i32>} : memref<256x8xf32, #tpu.memory_space<vmem>>, vector<32x8xf32>,
    %42 = vector.extract_strided_slice %21 {offsets = [128, 0], sizes = [32, 8], strides = [1, 1]} : vector<512x8xf32> to vector<32x8xf32>
    %43 = vector.extract_strided_slice %21 {offsets = [160, 0], sizes = [32, 8], strides = [1, 1]} : vector<512x8xf32> to vector<32x8xf32>
    %44 = arith.maximumf %42, %43 : vector<32x8xf32>
    %c64_27 = arith.constant 64 : index
    %c0_28 = arith.constant 0 : index
    %45 = vector.load %arg13[%c64_27, %c0_28] : memref<256x8xf32, #tpu.memory_space<vmem>>, vector<32x8xf32>
    tpu.vector_store %arg13[%c64_27, %c0_28], %44 {strides = array<i32>} : memref<256x8xf32, #tpu.memory_space<vmem>>, vector<32x8xf32>,
    %46 = vector.extract_strided_slice %16 {offsets = [192, 0], sizes = [32, 8], strides = [1, 1]} : vector<512x8xf32> to vector<32x8xf32>
    %47 = vector.extract_strided_slice %16 {offsets = [224, 0], sizes = [32, 8], strides = [1, 1]} : vector<512x8xf32> to vector<32x8xf32>
    %48 = arith.maximumf %46, %47 : vector<32x8xf32>
    %c96 = arith.constant 96 : index
    %c0_29 = arith.constant 0 : index
    %49 = vector.load %arg12[%c96, %c0_29] : memref<256x8xf32, #tpu.memory_space<vmem>>, vector<32x8xf32>
    tpu.vector_store %arg12[%c96, %c0_29], %48 {strides = array<i32>} : memref<256x8xf32, #tpu.memory_space<vmem>>, vector<32x8xf32>,
    %50 = vector.extract_strided_slice %21 {offsets = [192, 0], sizes = [32, 8], strides = [1, 1]} : vector<512x8xf32> to vector<32x8xf32>
    %51 = vector.extract_strided_slice %21 {offsets = [224, 0], sizes = [32, 8], strides = [1, 1]} : vector<512x8xf32> to vector<32x8xf32>
    %52 = arith.maximumf %50, %51 : vector<32x8xf32>
    %c96_30 = arith.constant 96 : index
    %c0_31 = arith.constant 0 : index
    %53 = vector.load %arg13[%c96_30, %c0_31] : memref<256x8xf32, #tpu.memory_space<vmem>>, vector<32x8xf32>
    tpu.vector_store %arg13[%c96_30, %c0_31], %52 {strides = array<i32>} : memref<256x8xf32, #tpu.memory_space<vmem>>, vector<32x8xf32>,
    %54 = vector.extract_strided_slice %16 {offsets = [256, 0], sizes = [32, 8], strides = [1, 1]} : vector<512x8xf32> to vector<32x8xf32>
    %55 = vector.extract_strided_slice %16 {offsets = [288, 0], sizes = [32, 8], strides = [1, 1]} : vector<512x8xf32> to vector<32x8xf32>
    %56 = arith.maximumf %54, %55 : vector<32x8xf32>
    %c128 = arith.constant 128 : index
    %c0_32 = arith.constant 0 : index
    %57 = vector.load %arg12[%c128, %c0_32] : memref<256x8xf32, #tpu.memory_space<vmem>>, vector<32x8xf32>
    tpu.vector_store %arg12[%c128, %c0_32], %56 {strides = array<i32>} : memref<256x8xf32, #tpu.memory_space<vmem>>, vector<32x8xf32>,
    %58 = vector.extract_strided_slice %21 {offsets = [256, 0], sizes = [32, 8], strides = [1, 1]} : vector<512x8xf32> to vector<32x8xf32>
    %59 = vector.extract_strided_slice %21 {offsets = [288, 0], sizes = [32, 8], strides = [1, 1]} : vector<512x8xf32> to vector<32x8xf32>
    %60 = arith.maximumf %58, %59 : vector<32x8xf32>
    %c128_33 = arith.constant 128 : index
    %c0_34 = arith.constant 0 : index
    %61 = vector.load %arg13[%c128_33, %c0_34] : memref<256x8xf32, #tpu.memory_space<vmem>>, vector<32x8xf32>
    tpu.vector_store %arg13[%c128_33, %c0_34], %60 {strides = array<i32>} : memref<256x8xf32, #tpu.memory_space<vmem>>, vector<32x8xf32>,
    %62 = vector.extract_strided_slice %16 {offsets = [320, 0], sizes = [32, 8], strides = [1, 1]} : vector<512x8xf32> to vector<32x8xf32>
    %63 = vector.extract_strided_slice %16 {offsets = [352, 0], sizes = [32, 8], strides = [1, 1]} : vector<512x8xf32> to vector<32x8xf32>
    %64 = arith.maximumf %62, %63 : vector<32x8xf32>
    %c160 = arith.constant 160 : index
    %c0_35 = arith.constant 0 : index
    %65 = vector.load %arg12[%c160, %c0_35] : memref<256x8xf32, #tpu.memory_space<vmem>>, vector<32x8xf32>
    tpu.vector_store %arg12[%c160, %c0_35], %64 {strides = array<i32>} : memref<256x8xf32, #tpu.memory_space<vmem>>, vector<32x8xf32>,
    %66 = vector.extract_strided_slice %21 {offsets = [320, 0], sizes = [32, 8], strides = [1, 1]} : vector<512x8xf32> to vector<32x8xf32>
    %67 = vector.extract_strided_slice %21 {offsets = [352, 0], sizes = [32, 8], strides = [1, 1]} : vector<512x8xf32> to vector<32x8xf32>
    %68 = arith.maximumf %66, %67 : vector<32x8xf32>
    %c160_36 = arith.constant 160 : index
    %c0_37 = arith.constant 0 : index
    %69 = vector.load %arg13[%c160_36, %c0_37] : memref<256x8xf32, #tpu.memory_space<vmem>>, vector<32x8xf32>
    tpu.vector_store %arg13[%c160_36, %c0_37], %68 {strides = array<i32>} : memref<256x8xf32, #tpu.memory_space<vmem>>, vector<32x8xf32>,
    %70 = vector.extract_strided_slice %16 {offsets = [384, 0], sizes = [32, 8], strides = [1, 1]} : vector<512x8xf32> to vector<32x8xf32>
    %71 = vector.extract_strided_slice %16 {offsets = [416, 0], sizes = [32, 8], strides = [1, 1]} : vector<512x8xf32> to vector<32x8xf32>
    %72 = arith.maximumf %70, %71 : vector<32x8xf32>
    %c192 = arith.constant 192 : index
    %c0_38 = arith.constant 0 : index
    %73 = vector.load %arg12[%c192, %c0_38] : memref<256x8xf32, #tpu.memory_space<vmem>>, vector<32x8xf32>
    tpu.vector_store %arg12[%c192, %c0_38], %72 {strides = array<i32>} : memref<256x8xf32, #tpu.memory_space<vmem>>, vector<32x8xf32>,
    %74 = vector.extract_strided_slice %21 {offsets = [384, 0], sizes = [32, 8], strides = [1, 1]} : vector<512x8xf32> to vector<32x8xf32>
    %75 = vector.extract_strided_slice %21 {offsets = [416, 0], sizes = [32, 8], strides = [1, 1]} : vector<512x8xf32> to vector<32x8xf32>
    %76 = arith.maximumf %74, %75 : vector<32x8xf32>
    %c192_39 = arith.constant 192 : index
    %c0_40 = arith.constant 0 : index
    %77 = vector.load %arg13[%c192_39, %c0_40] : memref<256x8xf32, #tpu.memory_space<vmem>>, vector<32x8xf32>
    tpu.vector_store %arg13[%c192_39, %c0_40], %76 {strides = array<i32>} : memref<256x8xf32, #tpu.memory_space<vmem>>, vector<32x8xf32>,
    %78 = vector.extract_strided_slice %16 {offsets = [448, 0], sizes = [32, 8], strides = [1, 1]} : vector<512x8xf32> to vector<32x8xf32>
    %79 = vector.extract_strided_slice %16 {offsets = [480, 0], sizes = [32, 8], strides = [1, 1]} : vector<512x8xf32> to vector<32x8xf32>
    %80 = arith.maximumf %78, %79 : vector<32x8xf32>
    %c224 = arith.constant 224 : index
    %c0_41 = arith.constant 0 : index
    %81 = vector.load %arg12[%c224, %c0_41] : memref<256x8xf32, #tpu.memory_space<vmem>>, vector<32x8xf32>
    tpu.vector_store %arg12[%c224, %c0_41], %80 {strides = array<i32>} : memref<256x8xf32, #tpu.memory_space<vmem>>, vector<32x8xf32>,
    %82 = vector.extract_strided_slice %21 {offsets = [448, 0], sizes = [32, 8], strides = [1, 1]} : vector<512x8xf32> to vector<32x8xf32>
    %83 = vector.extract_strided_slice %21 {offsets = [480, 0], sizes = [32, 8], strides = [1, 1]} : vector<512x8xf32> to vector<32x8xf32>
    %84 = arith.maximumf %82, %83 : vector<32x8xf32>
    %c224_42 = arith.constant 224 : index
    %c0_43 = arith.constant 0 : index
    %85 = vector.load %arg13[%c224_42, %c0_43] : memref<256x8xf32, #tpu.memory_space<vmem>>, vector<32x8xf32>
    tpu.vector_store %arg13[%c224_42, %c0_43], %84 {strides = array<i32>} : memref<256x8xf32, #tpu.memory_space<vmem>>, vector<32x8xf32>,
    %c0_44 = arith.constant 0 : index
    %c0_45 = arith.constant 0 : index
    %86 = tpu.strided_load %arg12[%c0_44, %c0_45] {strides = array<i32: 2, 1>} : memref<256x8xf32, #tpu.memory_space<vmem>>, vector<128x8xf32>
    %c1 = arith.constant 1 : index
    %c0_46 = arith.constant 0 : index
    %87 = tpu.strided_load %arg12[%c1, %c0_46] {strides = array<i32: 2, 1>} : memref<256x8xf32, #tpu.memory_space<vmem>>, vector<128x8xf32>
    %88 = arith.maximumf %86, %87 : vector<128x8xf32>
    %89 = arith.truncf %88 : vector<128x8xf32> to vector<128x8xbf16>
    %c0_47 = arith.constant 0 : index
    %c0_48 = arith.constant 0 : index
    %c0_49 = arith.constant 0 : index
    %90 = vector.load %arg10[%c0_47, %c0_48, %c0_49] : memref<1x128x8xbf16, #tpu.memory_space<vmem>>, vector<1x128x8xbf16>
    %91 = vector.shape_cast %90 : vector<1x128x8xbf16> to vector<128x8xbf16>
    %92 = vector.shape_cast %89 : vector<128x8xbf16> to vector<1x128x8xbf16>
    tpu.vector_store %arg10[%c0_47, %c0_48, %c0_49], %92 {strides = array<i32>} : memref<1x128x8xbf16, #tpu.memory_space<vmem>>, vector<1x128x8xbf16>,
    %c0_50 = arith.constant 0 : index
    %c0_51 = arith.constant 0 : index
    %93 = tpu.strided_load %arg13[%c0_50, %c0_51] {strides = array<i32: 2, 1>} : memref<256x8xf32, #tpu.memory_space<vmem>>, vector<128x8xf32>
    %c1_52 = arith.constant 1 : index
    %c0_53 = arith.constant 0 : index
    %94 = tpu.strided_load %arg13[%c1_52, %c0_53] {strides = array<i32: 2, 1>} : memref<256x8xf32, #tpu.memory_space<vmem>>, vector<128x8xf32>
    %95 = arith.maximumf %93, %94 : vector<128x8xf32>
    %96 = arith.truncf %95 : vector<128x8xf32> to vector<128x8xbf16>
    %c0_54 = arith.constant 0 : index
    %c0_55 = arith.constant 0 : index
    %c0_56 = arith.constant 0 : index
    %97 = vector.load %arg11[%c0_54, %c0_55, %c0_56] : memref<1x128x8xbf16, #tpu.memory_space<vmem>>, vector<1x128x8xbf16>
    %98 = vector.shape_cast %97 : vector<1x128x8xbf16> to vector<128x8xbf16>
    %99 = vector.shape_cast %96 : vector<128x8xbf16> to vector<1x128x8xbf16>
    tpu.vector_store %arg11[%c0_54, %c0_55, %c0_56], %99 {strides = array<i32>} : memref<1x128x8xbf16, #tpu.memory_space<vmem>>, vector<1x128x8xbf16>,
    return
  }
  func.func @transform_0(%arg0: i32, %arg1: i32) -> (i32, i32, i32) {
    %c0_i32 = arith.constant 0 : i32
    %c0_i32_0 = arith.constant 0 : i32
    return %arg0, %arg1, %c0_i32 : i32, i32, i32
  }
  func.func @transform_1(%arg0: i32, %arg1: i32) -> (i32, i32) {
    %c0_i32 = arith.constant 0 : i32
    %c0_i32_0 = arith.constant 0 : i32
    %c0_i32_1 = arith.constant 0 : i32
    return %c0_i32, %c0_i32_0 : i32, i32
  }
  func.func @transform_2(%arg0: i32, %arg1: i32) -> (i32, i32) {
    %c0_i32 = arith.constant 0 : i32
    %c0_i32_0 = arith.constant 0 : i32
    %c0_i32_1 = arith.constant 0 : i32
    return %c0_i32, %c0_i32_0 : i32, i32
  }
  func.func @transform_3(%arg0: i32, %arg1: i32) -> (i32, i32) {
    %c0_i32 = arith.constant 0 : i32
    %c0_i32_0 = arith.constant 0 : i32
    %c0_i32_1 = arith.constant 0 : i32
    return %c0_i32, %c0_i32_0 : i32, i32
  }
  func.func @transform_4(%arg0: i32, %arg1: i32) -> (i32, i32) {
    %c0_i32 = arith.constant 0 : i32
    %c0_i32_0 = arith.constant 0 : i32
    %c0_i32_1 = arith.constant 0 : i32
    return %c0_i32, %c0_i32_0 : i32, i32
  }
  func.func @transform_5(%arg0: i32, %arg1: i32) -> (i32, i32) {
    %c0_i32 = arith.constant 0 : i32
    %c0_i32_0 = arith.constant 0 : i32
    %c0_i32_1 = arith.constant 0 : i32
    return %c0_i32, %c0_i32_0 : i32, i32
  }
  func.func @transform_6(%arg0: i32, %arg1: i32) -> (i32, i32) {
    %c0_i32 = arith.constant 0 : i32
    %c0_i32_0 = arith.constant 0 : i32
    %c0_i32_1 = arith.constant 0 : i32
    return %c0_i32, %c0_i32_0 : i32, i32
  }
  func.func @transform_7(%arg0: i32, %arg1: i32) -> (i32, i32, i32) {
    %c0_i32 = arith.constant 0 : i32
    %c0_i32_0 = arith.constant 0 : i32
    return %arg0, %arg1, %c0_i32 : i32, i32, i32
  }
  func.func @transform_8(%arg0: i32, %arg1: i32) -> (i32, i32, i32) {
    %c0_i32 = arith.constant 0 : i32
    %c0_i32_0 = arith.constant 0 : i32
    return %arg0, %arg1, %c0_i32 : i32, i32, i32
  }
  func.func @transform_9(%arg0: i32, %arg1: i32) -> (i32, i32, i32) {
    %c0_i32 = arith.constant 0 : i32
    %c0_i32_0 = arith.constant 0 : i32
    return %arg0, %arg1, %c0_i32 : i32, i32, i32
  }
}

</mosaic_0001>

<llo_original>
// kernel: nonlocal_block_forward.3
$region0: #{nonlocal_block_forward.3}
  #allocation0 [shape = 'u32[]', space=smem, size = 0x4, offset = 0x4, fixed_abs, tag = 'smem constant byte address 0x4 - core index']
  #allocation1 [shape = 'u32[72,128]{1,0:T(1,128)}', space=vmem, size = 0x9000, scoped, tag = 'internal scratch']
  %s0 = inlined_call_operand.vmem [shape: bf16[2,1024,8], index: 0, kind: input, shape index: {}]
  %s1 = inlined_call_operand.vmem [shape: bf16[2,8,256], index: 1, kind: input, shape index: {}]
  %s2 = inlined_call_operand.vmem [shape: bf16[2,256,8], index: 2, kind: input, shape index: {}]
  %s3 = inlined_call_operand.vmem [shape: bf16[8,16], index: 3, kind: input, shape index: {}]
  %s4 = inlined_call_operand.vmem [shape: f32[1,16], index: 4, kind: input, shape index: {}]
  %s5 = inlined_call_operand.vmem [shape: f32[1,16], index: 5, kind: input, shape index: {}]
  %s6 = inlined_call_operand.vmem [shape: f32[2,1024,16], index: 6, kind: input, shape index: {}, may-alias: {6,7}]
  %s7 = inlined_call_operand.vmem [shape: f32[2,1024,16], index: 7, kind: output, shape index: {}, may-alias: {6,7}]
  %s8 = sld [smem:[#allocation0]]
  $region61: #{nonlocal_block_forward.3} parent=0
    _
  %s10 = ssub.s32 1, %s8
  %s11 = scalar_select 0, %s10, %s8
  loop: start=0, step=1, limit=10
  $region2: #{nonlocal_block_forward.3} parent=0 // loop_pre_header
    _
  $region3: #{nonlocal_block_forward.3} parent=0 // loop_header
    %s13 = sphi 0, %s17
    %p14 = scmp.ge.s32.totalorder %s13, 10
    %s20 = sphi 0, %s32
    %s21 = sphi 0, %s28
    %s22 = sphi 0, %s20
    %s23 = sphi 0, %s21
    %s24 = sphi 0, %s22
    %s25 = sphi 0, %s23
    %s37 = sphi 0, %s39
    %s40 = sphi 0, %s37
    %s41 = sphi 0, %s40
    %s57 = sphi 0, %s41
    %s63 = sphi 0, %s65
    %s66 = sphi 0, %s63
    %s67 = sphi 0, %s66
    %s83 = sphi 0, %s67
    %s89 = sphi 0, %s91
    %s92 = sphi 0, %s89
    %s93 = sphi 0, %s92
    %s109 = sphi 0, %s93
    %s113 = sphi 0, %s113
    %s115 = sphi 0, %s113
    %s116 = sphi 0, %s115
    %s130 = sphi 0, %s116
    %s134 = sphi 0, %s134
    %s136 = sphi 0, %s134
    %s137 = sphi 0, %s136
    %s151 = sphi 0, %s137
    %s155 = sphi 0, %s155
    %s157 = sphi 0, %s155
    %s158 = sphi 0, %s157
    %s172 = sphi 0, %s158
    %s180 = sphi 0, %s182
    %s183 = sphi 0, %s180
    %s184 = sphi 0, %s183
    %s200 = sphi 0, %s184
    %s208 = sphi 0, %s210
    %s211 = sphi 0, %s208
    %s212 = sphi 0, %s211
    %s228 = sphi 0, %s212
  $region4: #{nonlocal_block_forward.3} parent=0 // loop_header_branch
    %16 = sbr.rel (%p14) target = $region8
  $region5: #{nonlocal_block_forward.3} parent=0 // loop_body
    %s18 = ssub.s32 %s13, 1
    %s19 = ssub.s32 %s13, 2
    %s26 = sadd.s32 1, %s21
    %p27 = scmp.ge.s32.totalorder %s26, 4
    %s28 = scalar_select %p27, 0, %s26
    %s29 = sadd.s32 1, %s20
    %s30 = scalar_select %p27, %s29, %s20
    %p31 = scmp.ge.s32.totalorder %s30, 2
    %s32 = scalar_select %p31, 0, %s30
    %s33 = ssub.s32 %s20, %s32
    %s34 = ssub.s32 %s21, %s28
    %s35 = sor.u32 %s33, %s34
    %p36 = scmp.eq.s32.totalorder %s35, 0
    %s38 = sadd.s32 %s37, 1
    %s39 = scalar_select %p36, %s37, %s38
    %p42 = pneg %p36
    %p43 = scmp.eq.s32.totalorder %s13, 7
    %p44 = por %p42, %p43
    %p45 = scmp.ne.s32.totalorder %s37, %s40
    %p46 = scmp.eq.s32.totalorder %s13, 0
    %p47 = por %p45, %p46
    %p48 = scmp.ne.s32.totalorder %s37, %s40
    %p49 = scmp.eq.s32.totalorder %s18, 7
    %p50 = por %p48, %p49
    %p51 = scmp.ne.s32.totalorder %s40, %s41
    %p52 = scmp.eq.s32.totalorder %s18, 0
    %p53 = por %p51, %p52
    %p54 = scmp.ne.s32.totalorder %s40, %s41
    %p55 = scmp.eq.s32.totalorder %s19, 7
    %p56 = por %p54, %p55
    %p58 = scmp.ne.s32.totalorder %s41, %s57
    %p59 = scmp.eq.s32.totalorder %s19, 0
    %p60 = por %p58, %p59
    %s61 = ssub.s32 %s20, %s32
    %p62 = scmp.eq.s32.totalorder %s61, 0
    %s64 = sadd.s32 %s63, 1
    %s65 = scalar_select %p62, %s63, %s64
    %p68 = pneg %p62
    %p69 = scmp.eq.s32.totalorder %s13, 7
    %p70 = por %p68, %p69
    %p71 = scmp.ne.s32.totalorder %s63, %s66
    %p72 = scmp.eq.s32.totalorder %s13, 0
    %p73 = por %p71, %p72
    %p74 = scmp.ne.s32.totalorder %s63, %s66
    %p75 = scmp.eq.s32.totalorder %s18, 7
    %p76 = por %p74, %p75
    %p77 = scmp.ne.s32.totalorder %s66, %s67
    %p78 = scmp.eq.s32.totalorder %s18, 0
    %p79 = por %p77, %p78
    %p80 = scmp.ne.s32.totalorder %s66, %s67
    %p81 = scmp.eq.s32.totalorder %s19, 7
    %p82 = por %p80, %p81
    %p84 = scmp.ne.s32.totalorder %s67, %s83
    %p85 = scmp.eq.s32.totalorder %s19, 0
    %p86 = por %p84, %p85
    %s87 = ssub.s32 %s20, %s32
    %p88 = scmp.eq.s32.totalorder %s87, 0
    %s90 = sadd.s32 %s89, 1
    %s91 = scalar_select %p88, %s89, %s90
    %p94 = pneg %p88
    %p95 = scmp.eq.s32.totalorder %s13, 7
    %p96 = por %p94, %p95
    %p97 = scmp.ne.s32.totalorder %s89, %s92
    %p98 = scmp.eq.s32.totalorder %s13, 0
    %p99 = por %p97, %p98
    %p100 = scmp.ne.s32.totalorder %s89, %s92
    %p101 = scmp.eq.s32.totalorder %s18, 7
    %p102 = por %p100, %p101
    %p103 = scmp.ne.s32.totalorder %s92, %s93
    %p104 = scmp.eq.s32.totalorder %s18, 0
    %p105 = por %p103, %p104
    %p106 = scmp.ne.s32.totalorder %s92, %s93
    %p107 = scmp.eq.s32.totalorder %s19, 7
    %p108 = por %p106, %p107
    %p110 = scmp.ne.s32.totalorder %s93, %s109
    %p111 = scmp.eq.s32.totalorder %s19, 0
    %p112 = por %p110, %p111
    %s114 = sadd.s32 %s113, 1
    %p117 = scmp.eq.s32.totalorder %s13, 7
    %p118 = scmp.ne.s32.totalorder %s113, %s115
    %p119 = scmp.eq.s32.totalorder %s13, 0
    %p120 = por %p118, %p119
    %p121 = scmp.ne.s32.totalorder %s113, %s115
    %p122 = scmp.eq.s32.totalorder %s18, 7
    %p123 = por %p121, %p122
    %p124 = scmp.ne.s32.totalorder %s115, %s116
    %p125 = scmp.eq.s32.totalorder %s18, 0
    %p126 = por %p124, %p125
    %p127 = scmp.ne.s32.totalorder %s115, %s116
    %p128 = scmp.eq.s32.totalorder %s19, 7
    %p129 = por %p127, %p128
    %p131 = scmp.ne.s32.totalorder %s116, %s130
    %p132 = scmp.eq.s32.totalorder %s19, 0
    %p133 = por %p131, %p132
    %s135 = sadd.s32 %s134, 1
    %p138 = scmp.eq.s32.totalorder %s13, 7
    %p139 = scmp.ne.s32.totalorder %s134, %s136
    %p140 = scmp.eq.s32.totalorder %s13, 0
    %p141 = por %p139, %p140
    %p142 = scmp.ne.s32.totalorder %s134, %s136
    %p143 = scmp.eq.s32.totalorder %s18, 7
    %p144 = por %p142, %p143
    %p145 = scmp.ne.s32.totalorder %s136, %s137
    %p146 = scmp.eq.s32.totalorder %s18, 0
    %p147 = por %p145, %p146
    %p148 = scmp.ne.s32.totalorder %s136, %s137
    %p149 = scmp.eq.s32.totalorder %s19, 7
    %p150 = por %p148, %p149
    %p152 = scmp.ne.s32.totalorder %s137, %s151
    %p153 = scmp.eq.s32.totalorder %s19, 0
    %p154 = por %p152, %p153
    %s156 = sadd.s32 %s155, 1
    %p159 = scmp.eq.s32.totalorder %s13, 7
    %p160 = scmp.ne.s32.totalorder %s155, %s157
    %p161 = scmp.eq.s32.totalorder %s13, 0
    %p162 = por %p160, %p161
    %p163 = scmp.ne.s32.totalorder %s155, %s157
    %p164 = scmp.eq.s32.totalorder %s18, 7
    %p165 = por %p163, %p164
    %p166 = scmp.ne.s32.totalorder %s157, %s158
    %p167 = scmp.eq.s32.totalorder %s18, 0
    %p168 = por %p166, %p167
    %p169 = scmp.ne.s32.totalorder %s157, %s158
    %p170 = scmp.eq.s32.totalorder %s19, 7
    %p171 = por %p169, %p170
    %p173 = scmp.ne.s32.totalorder %s158, %s172
    %p174 = scmp.eq.s32.totalorder %s19, 0
    %p175 = por %p173, %p174
    %s176 = ssub.s32 %s20, %s32
    %s177 = ssub.s32 %s21, %s28
    %s178 = sor.u32 %s176, %s177
    %p179 = scmp.eq.s32.totalorder %s178, 0
    %s181 = sadd.s32 %s180, 1
    %s182 = scalar_select %p179, %s180, %s181
    %p185 = pneg %p179
    %p186 = scmp.eq.s32.totalorder %s13, 7
    %p187 = por %p185, %p186
    %p188 = scmp.ne.s32.totalorder %s180, %s183
    %p189 = scmp.eq.s32.totalorder %s13, 0
    %p190 = por %p188, %p189
    %p191 = scmp.ne.s32.totalorder %s180, %s183
    %p192 = scmp.eq.s32.totalorder %s18, 7
    %p193 = por %p191, %p192
    %p194 = scmp.ne.s32.totalorder %s183, %s184
    %p195 = scmp.eq.s32.totalorder %s18, 0
    %p196 = por %p194, %p195
    %p197 = scmp.ne.s32.totalorder %s183, %s184
    %p198 = scmp.eq.s32.totalorder %s19, 7
    %p199 = por %p197, %p198
    %p201 = scmp.ne.s32.totalorder %s184, %s200
    %p202 = scmp.eq.s32.totalorder %s19, 0
    %p203 = por %p201, %p202
    %s204 = ssub.s32 %s20, %s32
    %s205 = ssub.s32 %s21, %s28
    %s206 = sor.u32 %s204, %s205
    %p207 = scmp.eq.s32.totalorder %s206, 0
    %s209 = sadd.s32 %s208, 1
    %s210 = scalar_select %p207, %s208, %s209
    %p213 = pneg %p207
    %p214 = scmp.eq.s32.totalorder %s13, 7
    %p215 = por %p213, %p214
    %p216 = scmp.ne.s32.totalorder %s208, %s211
    %p217 = scmp.eq.s32.totalorder %s13, 0
    %p218 = por %p216, %p217
    %p219 = scmp.ne.s32.totalorder %s208, %s211
    %p220 = scmp.eq.s32.totalorder %s18, 7
    %p221 = por %p219, %p220
    %p222 = scmp.ne.s32.totalorder %s211, %s212
    %p223 = scmp.eq.s32.totalorder %s18, 0
    %p224 = por %p222, %p223
    %p225 = scmp.ne.s32.totalorder %s211, %s212
    %p226 = scmp.eq.s32.totalorder %s19, 7
    %p227 = por %p225, %p226
    %p229 = scmp.ne.s32.totalorder %s212, %s228
    %p230 = scmp.eq.s32.totalorder %s19, 0
    %p231 = por %p229, %p230
    %p232 = scmp.le.s32.totalorder 1, %s13
    %p233 = scmp.lt.s32.totalorder %s13, 9
    %p234 = pnand %p232, %p233
    %p235 = pneg %p234
    // Predicated region
    $region9: #{nonlocal_block_forward.3} parent=5 // pred_check
      _
    $region10: #{nonlocal_block_forward.3} parent=5 // pred_check_branch
      %237 = sbr.rel (%p234) target = $region12
    $region11: #{nonlocal_block_forward.3} parent=5 // pred_region
      %s238 = ssub.s32 %s13, 1
      // Predicated region
      $region13: #{nonlocal_block_forward.3} parent=11 // pred_check
        %p239 = pneg %p126
      $region14: #{nonlocal_block_forward.3} parent=11 // pred_check_branch
        %241 = sbr.rel (%p239) target = $region16
      $region15: #{nonlocal_block_forward.3} parent=11 // pred_region
        _
      $region16: #{nonlocal_block_forward.3} parent=11 // pred_fallthru
        _
      // Predicated region
      $region17: #{nonlocal_block_forward.3} parent=11 // pred_check
        %p242 = pneg %p147
      $region18: #{nonlocal_block_forward.3} parent=11 // pred_check_branch
        %244 = sbr.rel (%p242) target = $region20
      $region19: #{nonlocal_block_forward.3} parent=11 // pred_region
        _
      $region20: #{nonlocal_block_forward.3} parent=11 // pred_fallthru
        _
      // Predicated region
      $region21: #{nonlocal_block_forward.3} parent=11 // pred_check
        %p245 = pneg %p168
      $region22: #{nonlocal_block_forward.3} parent=11 // pred_check_branch
        %247 = sbr.rel (%p245) target = $region24
      $region23: #{nonlocal_block_forward.3} parent=11 // pred_region
        _
      $region24: #{nonlocal_block_forward.3} parent=11 // pred_fallthru
        _
    $region12: #{nonlocal_block_forward.3} parent=5 // pred_fallthru
      _
    %p248 = scmp.lt.s32.totalorder %s13, 8
    // Predicated region
    $region25: #{nonlocal_block_forward.3} parent=5 // pred_check
      %p249 = pneg %p248
    $region26: #{nonlocal_block_forward.3} parent=5 // pred_check_branch
      %251 = sbr.rel (%p249) target = $region28
    $region27: #{nonlocal_block_forward.3} parent=5 // pred_region
      // Predicated region
      $region29: #{nonlocal_block_forward.3} parent=27 // pred_check
        %p252 = pneg %p47
      $region30: #{nonlocal_block_forward.3} parent=27 // pred_check_branch
        %254 = sbr.rel (%p252) target = $region32
      $region31: #{nonlocal_block_forward.3} parent=27 // pred_region
        %s255 = smul.u32 32, %s21
        %p256 = scmp.lt.s32.totalorder %s20, 1
        %s257 = scalar_select %p256, %s20, 1
        %p258 = scmp.lt.s32.totalorder %s255, 127
        %s259 = scalar_select %p258, %s255, 127
        %s260 = smul.addr %s257, 128
        %s261 = sadd.s32 %s259, %s260
        %s262 = smul.addr %s261, 4
        %s263 = scalar_lea.vmem %s0, %s262
        %s264 = smul.u32 32, %s21
      $region32: #{nonlocal_block_forward.3} parent=27 // pred_fallthru
        _
      // Predicated region
      $region33: #{nonlocal_block_forward.3} parent=27 // pred_check
        %p265 = pneg %p73
      $region34: #{nonlocal_block_forward.3} parent=27 // pred_check_branch
        %267 = sbr.rel (%p265) target = $region36
      $region35: #{nonlocal_block_forward.3} parent=27 // pred_region
        %p268 = scmp.lt.s32.totalorder %s20, 1
        %s269 = scalar_select %p268, %s20, 1
        %s270 = smul.addr %s269, 2
        %s271 = smul.addr %s270, 4
        %s272 = scalar_lea.vmem %s1, %s271
      $region36: #{nonlocal_block_forward.3} parent=27 // pred_fallthru
        _
      // Predicated region
      $region37: #{nonlocal_block_forward.3} parent=27 // pred_check
        %p273 = pneg %p99
      $region38: #{nonlocal_block_forward.3} parent=27 // pred_check_branch
        %275 = sbr.rel (%p273) target = $region40
      $region39: #{nonlocal_block_forward.3} parent=27 // pred_region
        %p276 = scmp.lt.s32.totalorder %s20, 1
        %s277 = scalar_select %p276, %s20, 1
        %s278 = smul.addr %s277, 32
        %s279 = smul.addr %s278, 4
        %s280 = scalar_lea.vmem %s2, %s279
      $region40: #{nonlocal_block_forward.3} parent=27 // pred_fallthru
        _
      // Predicated region
      $region41: #{nonlocal_block_forward.3} parent=27 // pred_check
        %p281 = pneg %p190
      $region42: #{nonlocal_block_forward.3} parent=27 // pred_check_branch
        %283 = sbr.rel (%p281) target = $region44
      $region43: #{nonlocal_block_forward.3} parent=27 // pred_region
        %s284 = smul.u32 32, %s21
        %p285 = scmp.lt.s32.totalorder %s20, 1
        %s286 = scalar_select %p285, %s20, 1
        %p287 = scmp.lt.s32.totalorder %s284, 127
        %s288 = scalar_select %p287, %s284, 127
        %s289 = smul.addr %s286, 128
        %s290 = sadd.s32 %s288, %s289
        %s291 = smul.addr %s290, 8
        %s292 = scalar_lea.vmem %s6, %s291
        %s293 = smul.u32 32, %s21
      $region44: #{nonlocal_block_forward.3} parent=27 // pred_fallthru
        _
    $region28: #{nonlocal_block_forward.3} parent=5 // pred_fallthru
      _
    %p294 = scmp.le.s32.totalorder 1, %s13
    %p295 = scmp.lt.s32.totalorder %s13, 9
    %p296 = pnand %p294, %p295
    %p297 = pneg %p296
    // Predicated region
    $region45: #{nonlocal_block_forward.3} parent=5 // pred_check
      _
    $region46: #{nonlocal_block_forward.3} parent=5 // pred_check_branch
      %299 = sbr.rel (%p296) target = $region48
    $region47: #{nonlocal_block_forward.3} parent=5 // pred_region
      %s300 = ssub.s32 %s13, 1
      %s301 = smul.u32 32, %s23
      %p302 = scmp.lt.s32.totalorder %s22, 1
      %s303 = scalar_select %p302, %s22, 1
      %p304 = scmp.lt.s32.totalorder %s301, 127
      %s305 = scalar_select %p304, %s301, 127
      %s306 = smul.addr %s303, 128
      %s307 = sadd.s32 %s305, %s306
      %s308 = smul.addr %s307, 4
      %s309 = scalar_lea.vmem %s0, %s308
      %p310 = pneg %p53
      %p311 = pneg %p50
      %p312 = scmp.lt.s32.totalorder %s22, 1
      %s313 = scalar_select %p312, %s22, 1
      %s314 = smul.addr %s313, 2
      %s315 = smul.addr %s314, 4
      %s316 = scalar_lea.vmem %s1, %s315
      %p317 = pneg %p79
      %p318 = pneg %p76
      %p319 = scmp.lt.s32.totalorder %s22, 1
      %s320 = scalar_select %p319, %s22, 1
      %s321 = smul.addr %s320, 32
      %s322 = smul.addr %s321, 4
      %s323 = scalar_lea.vmem %s2, %s322
      %p324 = pneg %p105
      %p325 = pneg %p102
      %p326 = pneg %p126
      %p327 = pneg %p123
      %p328 = pneg %p147
      %p329 = pneg %p144
      %p330 = pneg %p168
      %p331 = pneg %p165
      %s332 = smul.u32 32, %s23
      %p333 = scmp.lt.s32.totalorder %s22, 1
      %s334 = scalar_select %p333, %s22, 1
      %p335 = scmp.lt.s32.totalorder %s332, 127
      %s336 = scalar_select %p335, %s332, 127
      %s337 = smul.addr %s334, 128
      %s338 = sadd.s32 %s336, %s337
      %s339 = smul.addr %s338, 8
      %s340 = scalar_lea.vmem %s6, %s339
      %p341 = pneg %p196
      %p342 = pneg %p193
      %p343 = pneg %p224
      %p344 = pneg %p221
      %s345 = smul.u32 32, %s23
      %p346 = scmp.lt.s32.totalorder %s22, 1
      %s347 = scalar_select %p346, %s22, 1
      %p348 = scmp.lt.s32.totalorder %s345, 127
      %s349 = scalar_select %p348, %s345, 127
      %s350 = smul.addr %s347, 128
      %s351 = sadd.s32 %s349, %s350
      %s352 = smul.addr %s351, 8
      %s353 = scalar_lea.vmem %s7, %s352
      %s354 = smul.u32 32, %s23
      %p355 = scmp.lt.s32.totalorder %s22, 1
      %s356 = scalar_select %p355, %s22, 1
      %p357 = scmp.lt.s32.totalorder %s354, 127
      %s358 = scalar_select %p357, %s354, 127
      %s359 = smul.addr %s356, 128
      %s360 = sadd.s32 %s358, %s359
      %s361 = smul.addr %s360, 4
      %s362 = scalar_lea.vmem %s0, %s361
      %s363 = smul.u32 32, %s23
      %p364 = scmp.lt.s32.totalorder %s22, 1
      %s365 = scalar_select %p364, %s22, 1
      %s366 = smul.addr %s365, 2
      %s367 = smul.addr %s366, 4
      %s368 = scalar_lea.vmem %s1, %s367
      %p369 = scmp.lt.s32.totalorder %s22, 1
      %s370 = scalar_select %p369, %s22, 1
      %s371 = smul.addr %s370, 32
      %s372 = smul.addr %s371, 4
      %s373 = scalar_lea.vmem %s2, %s372
      %s374 = smul.u32 32, %s23
      %p375 = scmp.lt.s32.totalorder %s22, 1
      %s376 = scalar_select %p375, %s22, 1
      %p377 = scmp.lt.s32.totalorder %s374, 127
      %s378 = scalar_select %p377, %s374, 127
      %s379 = smul.addr %s376, 128
      %s380 = sadd.s32 %s378, %s379
      %s381 = smul.addr %s380, 8
      %s382 = scalar_lea.vmem %s6, %s381
      %s383 = smul.u32 32, %s23
      %s384 = smul.u32 32, %s23
      %p385 = scmp.lt.s32.totalorder %s22, 1
      %s386 = scalar_select %p385, %s22, 1
      %p387 = scmp.lt.s32.totalorder %s384, 127
      %s388 = scalar_select %p387, %s384, 127
      %s389 = smul.addr %s386, 128
      %s390 = sadd.s32 %s388, %s389
      %s391 = smul.addr %s390, 8
      %s392 = scalar_lea.vmem %s7, %s391
      %s393 = smul.u32 32, %s23
      %v395 = vld [vmem:[%s362] sm:$0xf]
      %v396 = vld [vmem:[%s362 + $0x4] sm:$0xf]
      %v397 = vld [vmem:[%s362 + $0x8] sm:$0xf]
      %v398 = vld [vmem:[%s362 + $0xc] sm:$0xf]
      %v399 = vld [vmem:[%s362 + $0x10] sm:$0xf]
      %v400 = vld [vmem:[%s362 + $0x14] sm:$0xf]
      %v401 = vld [vmem:[%s362 + $0x18] sm:$0xf]
      %v402 = vld [vmem:[%s362 + $0x1c] sm:$0xf]
      %v403 = vld [vmem:[%s362 + $0x20] sm:$0xf]
      %v404 = vld [vmem:[%s362 + $0x24] sm:$0xf]
      %v405 = vld [vmem:[%s362 + $0x28] sm:$0xf]
      %v406 = vld [vmem:[%s362 + $0x2c] sm:$0xf]
      %v407 = vld [vmem:[%s362 + $0x30] sm:$0xf]
      %v408 = vld [vmem:[%s362 + $0x34] sm:$0xf]
      %v409 = vld [vmem:[%s362 + $0x38] sm:$0xf]
      %v410 = vld [vmem:[%s362 + $0x3c] sm:$0xf]
      %v411 = vld [vmem:[%s362 + $0x40] sm:$0xf]
      %v412 = vld [vmem:[%s362 + $0x44] sm:$0xf]
      %v413 = vld [vmem:[%s362 + $0x48] sm:$0xf]
      %v414 = vld [vmem:[%s362 + $0x4c] sm:$0xf]
      %v415 = vld [vmem:[%s362 + $0x50] sm:$0xf]
      %v416 = vld [vmem:[%s362 + $0x54] sm:$0xf]
      %v417 = vld [vmem:[%s362 + $0x58] sm:$0xf]
      %v418 = vld [vmem:[%s362 + $0x5c] sm:$0xf]
      %v419 = vld [vmem:[%s362 + $0x60] sm:$0xf]
      %v420 = vld [vmem:[%s362 + $0x64] sm:$0xf]
      %v421 = vld [vmem:[%s362 + $0x68] sm:$0xf]
      %v422 = vld [vmem:[%s362 + $0x6c] sm:$0xf]
      %v423 = vld [vmem:[%s362 + $0x70] sm:$0xf]
      %v424 = vld [vmem:[%s362 + $0x74] sm:$0xf]
      %v425 = vld [vmem:[%s362 + $0x78] sm:$0xf]
      %v426 = vld [vmem:[%s362 + $0x7c] sm:$0xf]
      %v427 = vld [vmem:[%s368] sm:$0xff]
      %v460 = vunpack.c.l.b16 %v395
      %v461 = vunpack.c.l.b16 %v396
      %v462 = vunpack.c.l.b16 %v397
      %v463 = vunpack.c.l.b16 %v398
      %v464 = vunpack.c.l.b16 %v399
      %v465 = vunpack.c.l.b16 %v400
      %v466 = vunpack.c.l.b16 %v401
      %v467 = vunpack.c.l.b16 %v402
      %v468 = vunpack.c.l.b16 %v403
      %v469 = vunpack.c.l.b16 %v404
      %v470 = vunpack.c.l.b16 %v405
      %v471 = vunpack.c.l.b16 %v406
      %v472 = vunpack.c.l.b16 %v407
      %v473 = vunpack.c.l.b16 %v408
      %v474 = vunpack.c.l.b16 %v409
      %v475 = vunpack.c.l.b16 %v410
      %v476 = vunpack.c.l.b16 %v411
      %v477 = vunpack.c.l.b16 %v412
      %v478 = vunpack.c.l.b16 %v413
      %v479 = vunpack.c.l.b16 %v414
      %v480 = vunpack.c.l.b16 %v415
      %v481 = vunpack.c.l.b16 %v416
      %v482 = vunpack.c.l.b16 %v417
      %v483 = vunpack.c.l.b16 %v418
      %v484 = vunpack.c.l.b16 %v419
      %v485 = vunpack.c.l.b16 %v420
      %v486 = vunpack.c.l.b16 %v421
      %v487 = vunpack.c.l.b16 %v422
      %v488 = vunpack.c.l.b16 %v423
      %v489 = vunpack.c.l.b16 %v424
      %v490 = vunpack.c.l.b16 %v425
      %v491 = vunpack.c.l.b16 %v426
      %v492 = vpack.c.b16 %v461, %v460
      %v493 = vpack.c.b16 %v463, %v462
      %v494 = vpack.c.b16 %v465, %v464
      %v495 = vpack.c.b16 %v467, %v466
      %v496 = vpack.c.b16 %v469, %v468
      %v497 = vpack.c.b16 %v471, %v470
      %v498 = vpack.c.b16 %v473, %v472
      %v499 = vpack.c.b16 %v475, %v474
      %v500 = vpack.c.b16 %v477, %v476
      %v501 = vpack.c.b16 %v479, %v478
      %v502 = vpack.c.b16 %v481, %v480
      %v503 = vpack.c.b16 %v483, %v482
      %v504 = vpack.c.b16 %v485, %v484
      %v505 = vpack.c.b16 %v487, %v486
      %v506 = vpack.c.b16 %v489, %v488
      %v507 = vpack.c.b16 %v491, %v490
      %v509 = vunpack.c.l.b16 %v427
      %v510 = vunpack.c.h.b16 %v427
      %v511 = vpack.c.b16 %v509, %v509
      %v512 = vpack.c.b16 %v510, %v510
      %vm513 = vcmask 64512
      %v515 = vsel %vm513, %v492, 0
      %v518 = vsel %vm513, %v493, 0
      %v521 = vsel %vm513, %v494, 0
      %v524 = vsel %vm513, %v495, 0
      %v527 = vsel %vm513, %v496, 0
      %v530 = vsel %vm513, %v497, 0
      %v533 = vsel %vm513, %v498, 0
      %v536 = vsel %vm513, %v499, 0
      %v539 = vsel %vm513, %v500, 0
      %v542 = vsel %vm513, %v501, 0
      %v545 = vsel %vm513, %v502, 0
      %v548 = vsel %vm513, %v503, 0
      %v551 = vsel %vm513, %v504, 0
      %v554 = vsel %vm513, %v505, 0
      %v557 = vsel %vm513, %v506, 0
      %v560 = vsel %vm513, %v507, 0
      %vm562 = vcmask 1043456
      %v564 = vsel %vm562, %v511, 0
      %v567 = vsel %vm562, %v512, 0
      %569 = vmatpush.bf16.msra.mxu0 0
      %570 = vmatpush.bf16.msra.mxu0 0
      %571 = vmatpush.bf16.msra.mxu0 0
      %572 = vmatpush.bf16.msra.mxu0 0
      %573 = vmatpush.bf16.msra.mxu0 0
      %574 = vmatpush.bf16.msra.mxu0 0
      %575 = vmatpush.bf16.msra.mxu0 0
      %576 = vmatpush.bf16.msra.mxu0 %v564
      %577 = vmatmul.bf16.gmra.mxu0 %v515
      %v578 = vpop.f32.mrf.mxu0
      %v579 = vadd.f32 0.0, %v578
      %v580 = vpop.f32.mrf.mxu0
      %v581 = vadd.f32 0.0, %v580
      %582 = vmatmul.bf16.gmra.mxu0 %v518
      %v583 = vpop.f32.mrf.mxu0
      %v584 = vadd.f32 0.0, %v583
      %v585 = vpop.f32.mrf.mxu0
      %v586 = vadd.f32 0.0, %v585
      %587 = vmatmul.bf16.gmra.mxu0 %v521
      %v588 = vpop.f32.mrf.mxu0
      %v589 = vadd.f32 0.0, %v588
      %v590 = vpop.f32.mrf.mxu0
      %v591 = vadd.f32 0.0, %v590
      %592 = vmatmul.bf16.gmra.mxu0 %v524
      %v593 = vpop.f32.mrf.mxu0
      %v594 = vadd.f32 0.0, %v593
      %v595 = vpop.f32.mrf.mxu0
      %v596 = vadd.f32 0.0, %v595
      %597 = vmatmul.bf16.gmra.mxu0 %v527
      %v598 = vpop.f32.mrf.mxu0
      %v599 = vadd.f32 0.0, %v598
      %v600 = vpop.f32.mrf.mxu0
      %v601 = vadd.f32 0.0, %v600
      %602 = vmatmul.bf16.gmra.mxu0 %v530
      %v603 = vpop.f32.mrf.mxu0
      %v604 = vadd.f32 0.0, %v603
      %v605 = vpop.f32.mrf.mxu0
      %v606 = vadd.f32 0.0, %v605
      %607 = vmatmul.bf16.gmra.mxu0 %v533
      %v608 = vpop.f32.mrf.mxu0
      %v609 = vadd.f32 0.0, %v608
      %v610 = vpop.f32.mrf.mxu0
      %v611 = vadd.f32 0.0, %v610
      %612 = vmatmul.bf16.gmra.mxu0 %v536
      %v613 = vpop.f32.mrf.mxu0
      %v614 = vadd.f32 0.0, %v613
      %v615 = vpop.f32.mrf.mxu0
      %v616 = vadd.f32 0.0, %v615
      %617 = vmatmul.bf16.gmra.mxu0 %v539
      %v618 = vpop.f32.mrf.mxu0
      %v619 = vadd.f32 0.0, %v618
      %v620 = vpop.f32.mrf.mxu0
      %v621 = vadd.f32 0.0, %v620
      %622 = vmatmul.bf16.gmra.mxu0 %v542
      %v623 = vpop.f32.mrf.mxu0
      %v624 = vadd.f32 0.0, %v623
      %v625 = vpop.f32.mrf.mxu0
      %v626 = vadd.f32 0.0, %v625
      %627 = vmatmul.bf16.gmra.mxu0 %v545
      %v628 = vpop.f32.mrf.mxu0
      %v629 = vadd.f32 0.0, %v628
      %v630 = vpop.f32.mrf.mxu0
      %v631 = vadd.f32 0.0, %v630
      %632 = vmatmul.bf16.gmra.mxu0 %v548
      %v633 = vpop.f32.mrf.mxu0
      %v634 = vadd.f32 0.0, %v633
      %v635 = vpop.f32.mrf.mxu0
      %v636 = vadd.f32 0.0, %v635
      %637 = vmatmul.bf16.gmra.mxu0 %v551
      %v638 = vpop.f32.mrf.mxu0
      %v639 = vadd.f32 0.0, %v638
      %v640 = vpop.f32.mrf.mxu0
      %v641 = vadd.f32 0.0, %v640
      %642 = vmatmul.bf16.gmra.mxu0 %v554
      %v643 = vpop.f32.mrf.mxu0
      %v644 = vadd.f32 0.0, %v643
      %v645 = vpop.f32.mrf.mxu0
      %v646 = vadd.f32 0.0, %v645
      %647 = vmatmul.bf16.gmra.mxu0 %v557
      %v648 = vpop.f32.mrf.mxu0
      %v649 = vadd.f32 0.0, %v648
      %v650 = vpop.f32.mrf.mxu0
      %v651 = vadd.f32 0.0, %v650
      %652 = vmatmul.bf16.gmra.mxu0 %v560
      %v653 = vpop.f32.mrf.mxu0
      %v654 = vadd.f32 0.0, %v653
      %v655 = vpop.f32.mrf.mxu0
      %v656 = vadd.f32 0.0, %v655
      %657 = vdwg.mxu0
      %658 = vmatpush.bf16.msra.mxu0 0
      %659 = vmatpush.bf16.msra.mxu0 0
      %660 = vmatpush.bf16.msra.mxu0 0
      %661 = vmatpush.bf16.msra.mxu0 0
      %662 = vmatpush.bf16.msra.mxu0 0
      %663 = vmatpush.bf16.msra.mxu0 0
      %664 = vmatpush.bf16.msra.mxu0 0
      %665 = vmatpush.bf16.msra.mxu0 %v567
      %666 = vmatmul.bf16.gmra.mxu0 %v515
      %v667 = vpop.f32.mrf.mxu0
      %v668 = vadd.f32 0.0, %v667
      %v669 = vpop.f32.mrf.mxu0
      %v670 = vadd.f32 0.0, %v669
      %671 = vmatmul.bf16.gmra.mxu0 %v518
      %v672 = vpop.f32.mrf.mxu0
      %v673 = vadd.f32 0.0, %v672
      %v674 = vpop.f32.mrf.mxu0
      %v675 = vadd.f32 0.0, %v674
      %676 = vmatmul.bf16.gmra.mxu0 %v521
      %v677 = vpop.f32.mrf.mxu0
      %v678 = vadd.f32 0.0, %v677
      %v679 = vpop.f32.mrf.mxu0
      %v680 = vadd.f32 0.0, %v679
      %681 = vmatmul.bf16.gmra.mxu0 %v524
      %v682 = vpop.f32.mrf.mxu0
      %v683 = vadd.f32 0.0, %v682
      %v684 = vpop.f32.mrf.mxu0
      %v685 = vadd.f32 0.0, %v684
      %686 = vmatmul.bf16.gmra.mxu0 %v527
      %v687 = vpop.f32.mrf.mxu0
      %v688 = vadd.f32 0.0, %v687
      %v689 = vpop.f32.mrf.mxu0
      %v690 = vadd.f32 0.0, %v689
      %691 = vmatmul.bf16.gmra.mxu0 %v530
      %v692 = vpop.f32.mrf.mxu0
      %v693 = vadd.f32 0.0, %v692
      %v694 = vpop.f32.mrf.mxu0
      %v695 = vadd.f32 0.0, %v694
      %696 = vmatmul.bf16.gmra.mxu0 %v533
      %v697 = vpop.f32.mrf.mxu0
      %v698 = vadd.f32 0.0, %v697
      %v699 = vpop.f32.mrf.mxu0
      %v700 = vadd.f32 0.0, %v699
      %701 = vmatmul.bf16.gmra.mxu0 %v536
      %v702 = vpop.f32.mrf.mxu0
      %v703 = vadd.f32 0.0, %v702
      %v704 = vpop.f32.mrf.mxu0
      %v705 = vadd.f32 0.0, %v704
      %706 = vmatmul.bf16.gmra.mxu0 %v539
      %v707 = vpop.f32.mrf.mxu0
      %v708 = vadd.f32 0.0, %v707
      %v709 = vpop.f32.mrf.mxu0
      %v710 = vadd.f32 0.0, %v709
      %711 = vmatmul.bf16.gmra.mxu0 %v542
      %v712 = vpop.f32.mrf.mxu0
      %v713 = vadd.f32 0.0, %v712
      %v714 = vpop.f32.mrf.mxu0
      %v715 = vadd.f32 0.0, %v714
      %716 = vmatmul.bf16.gmra.mxu0 %v545
      %v717 = vpop.f32.mrf.mxu0
      %v718 = vadd.f32 0.0, %v717
      %v719 = vpop.f32.mrf.mxu0
      %v720 = vadd.f32 0.0, %v719
      %721 = vmatmul.bf16.gmra.mxu0 %v548
      %v722 = vpop.f32.mrf.mxu0
      %v723 = vadd.f32 0.0, %v722
      %v724 = vpop.f32.mrf.mxu0
      %v725 = vadd.f32 0.0, %v724
      %726 = vmatmul.bf16.gmra.mxu0 %v551
      %v727 = vpop.f32.mrf.mxu0
      %v728 = vadd.f32 0.0, %v727
      %v729 = vpop.f32.mrf.mxu0
      %v730 = vadd.f32 0.0, %v729
      %731 = vmatmul.bf16.gmra.mxu0 %v554
      %v732 = vpop.f32.mrf.mxu0
      %v733 = vadd.f32 0.0, %v732
      %v734 = vpop.f32.mrf.mxu0
      %v735 = vadd.f32 0.0, %v734
      %736 = vmatmul.bf16.gmra.mxu0 %v557
      %v737 = vpop.f32.mrf.mxu0
      %v738 = vadd.f32 0.0, %v737
      %v739 = vpop.f32.mrf.mxu0
      %v740 = vadd.f32 0.0, %v739
      %741 = vmatmul.bf16.gmra.mxu0 %v560
      %v742 = vpop.f32.mrf.mxu0
      %v743 = vadd.f32 0.0, %v742
      %v744 = vpop.f32.mrf.mxu0
      %v745 = vadd.f32 0.0, %v744
      %746 = vdwg.mxu0
      %v747 = vmax.f32 %v579, %v668
      %748 = vmax.xlane.f32.xlu0 %v747
      %v749 = vpop.xlane.xlu0 %748
      %v750 = vmax.f32 %v581, %v670
      %751 = vmax.xlane.f32.xlu0 %v750
      %v752 = vpop.xlane.xlu0 %751
      %v753 = vmax.f32 %v584, %v673
      %754 = vmax.xlane.f32.xlu0 %v753
      %v755 = vpop.xlane.xlu0 %754
      %v756 = vmax.f32 %v586, %v675
      %757 = vmax.xlane.f32.xlu0 %v756
      %v758 = vpop.xlane.xlu0 %757
      %v759 = vmax.f32 %v589, %v678
      %760 = vmax.xlane.f32.xlu0 %v759
      %v761 = vpop.xlane.xlu0 %760
      %v762 = vmax.f32 %v591, %v680
      %763 = vmax.xlane.f32.xlu0 %v762
      %v764 = vpop.xlane.xlu0 %763
      %v765 = vmax.f32 %v594, %v683
      %766 = vmax.xlane.f32.xlu0 %v765
      %v767 = vpop.xlane.xlu0 %766
      %v768 = vmax.f32 %v596, %v685
      %769 = vmax.xlane.f32.xlu0 %v768
      %v770 = vpop.xlane.xlu0 %769
      %v771 = vmax.f32 %v599, %v688
      %772 = vmax.xlane.f32.xlu0 %v771
      %v773 = vpop.xlane.xlu0 %772
      %v774 = vmax.f32 %v601, %v690
      %775 = vmax.xlane.f32.xlu0 %v774
      %v776 = vpop.xlane.xlu0 %775
      %v777 = vmax.f32 %v604, %v693
      %778 = vmax.xlane.f32.xlu0 %v777
      %v779 = vpop.xlane.xlu0 %778
      %v780 = vmax.f32 %v606, %v695
      %781 = vmax.xlane.f32.xlu0 %v780
      %v782 = vpop.xlane.xlu0 %781
      %v783 = vmax.f32 %v609, %v698
      %784 = vmax.xlane.f32.xlu0 %v783
      %v785 = vpop.xlane.xlu0 %784
      %v786 = vmax.f32 %v611, %v700
      %787 = vmax.xlane.f32.xlu0 %v786
      %v788 = vpop.xlane.xlu0 %787
      %v789 = vmax.f32 %v614, %v703
      %790 = vmax.xlane.f32.xlu0 %v789
      %v791 = vpop.xlane.xlu0 %790
      %v792 = vmax.f32 %v616, %v705
      %793 = vmax.xlane.f32.xlu0 %v792
      %v794 = vpop.xlane.xlu0 %793
      %v795 = vmax.f32 %v619, %v708
      %796 = vmax.xlane.f32.xlu0 %v795
      %v797 = vpop.xlane.xlu0 %796
      %v798 = vmax.f32 %v621, %v710
      %799 = vmax.xlane.f32.xlu0 %v798
      %v800 = vpop.xlane.xlu0 %799
      %v801 = vmax.f32 %v624, %v713
      %802 = vmax.xlane.f32.xlu0 %v801
      %v803 = vpop.xlane.xlu0 %802
      %v804 = vmax.f32 %v626, %v715
      %805 = vmax.xlane.f32.xlu0 %v804
      %v806 = vpop.xlane.xlu0 %805
      %v807 = vmax.f32 %v629, %v718
      %808 = vmax.xlane.f32.xlu0 %v807
      %v809 = vpop.xlane.xlu0 %808
      %v810 = vmax.f32 %v631, %v720
      %811 = vmax.xlane.f32.xlu0 %v810
      %v812 = vpop.xlane.xlu0 %811
      %v813 = vmax.f32 %v634, %v723
      %814 = vmax.xlane.f32.xlu0 %v813
      %v815 = vpop.xlane.xlu0 %814
      %v816 = vmax.f32 %v636, %v725
      %817 = vmax.xlane.f32.xlu0 %v816
      %v818 = vpop.xlane.xlu0 %817
      %v819 = vmax.f32 %v639, %v728
      %820 = vmax.xlane.f32.xlu0 %v819
      %v821 = vpop.xlane.xlu0 %820
      %v822 = vmax.f32 %v641, %v730
      %823 = vmax.xlane.f32.xlu0 %v822
      %v824 = vpop.xlane.xlu0 %823
      %v825 = vmax.f32 %v644, %v733
      %826 = vmax.xlane.f32.xlu0 %v825
      %v827 = vpop.xlane.xlu0 %826
      %v828 = vmax.f32 %v646, %v735
      %829 = vmax.xlane.f32.xlu0 %v828
      %v830 = vpop.xlane.xlu0 %829
      %v831 = vmax.f32 %v649, %v738
      %832 = vmax.xlane.f32.xlu0 %v831
      %v833 = vpop.xlane.xlu0 %832
      %v834 = vmax.f32 %v651, %v740
      %835 = vmax.xlane.f32.xlu0 %v834
      %v836 = vpop.xlane.xlu0 %835
      %v837 = vmax.f32 %v654, %v743
      %838 = vmax.xlane.f32.xlu0 %v837
      %v839 = vpop.xlane.xlu0 %838
      %v840 = vmax.f32 %v656, %v745
      %841 = vmax.xlane.f32.xlu0 %v840
      %v842 = vpop.xlane.xlu0 %841
      %v843 = vsub.f32 %v579, %v749
      %v844 = vsub.f32 %v668, %v749
      %v845 = vsub.f32 %v581, %v752
      %v846 = vsub.f32 %v670, %v752
      %v847 = vsub.f32 %v584, %v755
      %v848 = vsub.f32 %v673, %v755
      %v849 = vsub.f32 %v586, %v758
      %v850 = vsub.f32 %v675, %v758
      %v851 = vsub.f32 %v589, %v761
      %v852 = vsub.f32 %v678, %v761
      %v853 = vsub.f32 %v591, %v764
      %v854 = vsub.f32 %v680, %v764
      %v855 = vsub.f32 %v594, %v767
      %v856 = vsub.f32 %v683, %v767
      %v857 = vsub.f32 %v596, %v770
      %v858 = vsub.f32 %v685, %v770
      %v859 = vsub.f32 %v599, %v773
      %v860 = vsub.f32 %v688, %v773
      %v861 = vsub.f32 %v601, %v776
      %v862 = vsub.f32 %v690, %v776
      %v863 = vsub.f32 %v604, %v779
      %v864 = vsub.f32 %v693, %v779
      %v865 = vsub.f32 %v606, %v782
      %v866 = vsub.f32 %v695, %v782
      %v867 = vsub.f32 %v609, %v785
      %v868 = vsub.f32 %v698, %v785
      %v869 = vsub.f32 %v611, %v788
      %v870 = vsub.f32 %v700, %v788
      %v871 = vsub.f32 %v614, %v791
      %v872 = vsub.f32 %v703, %v791
      %v873 = vsub.f32 %v616, %v794
      %v874 = vsub.f32 %v705, %v794
      %v875 = vsub.f32 %v619, %v797
      %v876 = vsub.f32 %v708, %v797
      %v877 = vsub.f32 %v621, %v800
      %v878 = vsub.f32 %v710, %v800
      %v879 = vsub.f32 %v624, %v803
      %v880 = vsub.f32 %v713, %v803
      %v881 = vsub.f32 %v626, %v806
      %v882 = vsub.f32 %v715, %v806
      %v883 = vsub.f32 %v629, %v809
      %v884 = vsub.f32 %v718, %v809
      %v885 = vsub.f32 %v631, %v812
      %v886 = vsub.f32 %v720, %v812
      %v887 = vsub.f32 %v634, %v815
      %v888 = vsub.f32 %v723, %v815
      %v889 = vsub.f32 %v636, %v818
      %v890 = vsub.f32 %v725, %v818
      %v891 = vsub.f32 %v639, %v821
      %v892 = vsub.f32 %v728, %v821
      %v893 = vsub.f32 %v641, %v824
      %v894 = vsub.f32 %v730, %v824
      %v895 = vsub.f32 %v644, %v827
      %v896 = vsub.f32 %v733, %v827
      %v897 = vsub.f32 %v646, %v830
      %v898 = vsub.f32 %v735, %v830
      %v899 = vsub.f32 %v649, %v833
      %v900 = vsub.f32 %v738, %v833
      %v901 = vsub.f32 %v651, %v836
      %v902 = vsub.f32 %v740, %v836
      %v903 = vsub.f32 %v654, %v839
      %v904 = vsub.f32 %v743, %v839
      %v905 = vsub.f32 %v656, %v842
      %v906 = vsub.f32 %v745, %v842
      %v907 = vmul.f32 %v843, 1.442695
      %v908 = vpow.pop %v907
      %v909 = vmul.f32 %v844, 1.442695
      %v910 = vpow.pop %v909
      %v911 = vmul.f32 %v845, 1.442695
      %v912 = vpow.pop %v911
      %v913 = vmul.f32 %v846, 1.442695
      %v914 = vpow.pop %v913
      %v915 = vmul.f32 %v847, 1.442695
      %v916 = vpow.pop %v915
      %v917 = vmul.f32 %v848, 1.442695
      %v918 = vpow.pop %v917
      %v919 = vmul.f32 %v849, 1.442695
      %v920 = vpow.pop %v919
      %v921 = vmul.f32 %v850, 1.442695
      %v922 = vpow.pop %v921
      %v923 = vmul.f32 %v851, 1.442695
      %v924 = vpow.pop %v923
      %v925 = vmul.f32 %v852, 1.442695
      %v926 = vpow.pop %v925
      %v927 = vmul.f32 %v853, 1.442695
      %v928 = vpow.pop %v927
      %v929 = vmul.f32 %v854, 1.442695
      %v930 = vpow.pop %v929
      %v931 = vmul.f32 %v855, 1.442695
      %v932 = vpow.pop %v931
      %v933 = vmul.f32 %v856, 1.442695
      %v934 = vpow.pop %v933
      %v935 = vmul.f32 %v857, 1.442695
      %v936 = vpow.pop %v935
      %v937 = vmul.f32 %v858, 1.442695
      %v938 = vpow.pop %v937
      %v939 = vmul.f32 %v859, 1.442695
      %v940 = vpow.pop %v939
      %v941 = vmul.f32 %v860, 1.442695
      %v942 = vpow.pop %v941
      %v943 = vmul.f32 %v861, 1.442695
      %v944 = vpow.pop %v943
      %v945 = vmul.f32 %v862, 1.442695
      %v946 = vpow.pop %v945
      %v947 = vmul.f32 %v863, 1.442695
      %v948 = vpow.pop %v947
      %v949 = vmul.f32 %v864, 1.442695
      %v950 = vpow.pop %v949
      %v951 = vmul.f32 %v865, 1.442695
      %v952 = vpow.pop %v951
      %v953 = vmul.f32 %v866, 1.442695
      %v954 = vpow.pop %v953
      %v955 = vmul.f32 %v867, 1.442695
      %v956 = vpow.pop %v955
      %v957 = vmul.f32 %v868, 1.442695
      %v958 = vpow.pop %v957
      %v959 = vmul.f32 %v869, 1.442695
      %v960 = vpow.pop %v959
      %v961 = vmul.f32 %v870, 1.442695
      %v962 = vpow.pop %v961
      %v963 = vmul.f32 %v871, 1.442695
      %v964 = vpow.pop %v963
      %v965 = vmul.f32 %v872, 1.442695
      %v966 = vpow.pop %v965
      %v967 = vmul.f32 %v873, 1.442695
      %v968 = vpow.pop %v967
      %v969 = vmul.f32 %v874, 1.442695
      %v970 = vpow.pop %v969
      %v971 = vmul.f32 %v875, 1.442695
      %v972 = vpow.pop %v971
      %v973 = vmul.f32 %v876, 1.442695
      %v974 = vpow.pop %v973
      %v975 = vmul.f32 %v877, 1.442695
      %v976 = vpow.pop %v975
      %v977 = vmul.f32 %v878, 1.442695
      %v978 = vpow.pop %v977
      %v979 = vmul.f32 %v879, 1.442695
      %v980 = vpow.pop %v979
      %v981 = vmul.f32 %v880, 1.442695
      %v982 = vpow.pop %v981
      %v983 = vmul.f32 %v881, 1.442695
      %v984 = vpow.pop %v983
      %v985 = vmul.f32 %v882, 1.442695
      %v986 = vpow.pop %v985
      %v987 = vmul.f32 %v883, 1.442695
      %v988 = vpow.pop %v987
      %v989 = vmul.f32 %v884, 1.442695
      %v990 = vpow.pop %v989
      %v991 = vmul.f32 %v885, 1.442695
      %v992 = vpow.pop %v991
      %v993 = vmul.f32 %v886, 1.442695
      %v994 = vpow.pop %v993
      %v995 = vmul.f32 %v887, 1.442695
      %v996 = vpow.pop %v995
      %v997 = vmul.f32 %v888, 1.442695
      %v998 = vpow.pop %v997
      %v999 = vmul.f32 %v889, 1.442695
      %v1000 = vpow.pop %v999
      %v1001 = vmul.f32 %v890, 1.442695
      %v1002 = vpow.pop %v1001
      %v1003 = vmul.f32 %v891, 1.442695
      %v1004 = vpow.pop %v1003
      %v1005 = vmul.f32 %v892, 1.442695
      %v1006 = vpow.pop %v1005
      %v1007 = vmul.f32 %v893, 1.442695
      %v1008 = vpow.pop %v1007
      %v1009 = vmul.f32 %v894, 1.442695
      %v1010 = vpow.pop %v1009
      %v1011 = vmul.f32 %v895, 1.442695
      %v1012 = vpow.pop %v1011
      %v1013 = vmul.f32 %v896, 1.442695
      %v1014 = vpow.pop %v1013
      %v1015 = vmul.f32 %v897, 1.442695
      %v1016 = vpow.pop %v1015
      %v1017 = vmul.f32 %v898, 1.442695
      %v1018 = vpow.pop %v1017
      %v1019 = vmul.f32 %v899, 1.442695
      %v1020 = vpow.pop %v1019
      %v1021 = vmul.f32 %v900, 1.442695
      %v1022 = vpow.pop %v1021
      %v1023 = vmul.f32 %v901, 1.442695
      %v1024 = vpow.pop %v1023
      %v1025 = vmul.f32 %v902, 1.442695
      %v1026 = vpow.pop %v1025
      %v1027 = vmul.f32 %v903, 1.442695
      %v1028 = vpow.pop %v1027
      %v1029 = vmul.f32 %v904, 1.442695
      %v1030 = vpow.pop %v1029
      %v1031 = vmul.f32 %v905, 1.442695
      %v1032 = vpow.pop %v1031
      %v1033 = vmul.f32 %v906, 1.442695
      %v1034 = vpow.pop %v1033
      %v1035 = vadd.f32 %v908, %v910
      %1036 = vadd.xlane.f32.xlu0 %v1035
      %v1037 = vpop.xlane.xlu0 %1036
      %v1038 = vadd.f32 %v912, %v914
      %1039 = vadd.xlane.f32.xlu0 %v1038
      %v1040 = vpop.xlane.xlu0 %1039
      %v1041 = vadd.f32 %v916, %v918
      %1042 = vadd.xlane.f32.xlu0 %v1041
      %v1043 = vpop.xlane.xlu0 %1042
      %v1044 = vadd.f32 %v920, %v922
      %1045 = vadd.xlane.f32.xlu0 %v1044
      %v1046 = vpop.xlane.xlu0 %1045
      %v1047 = vadd.f32 %v924, %v926
      %1048 = vadd.xlane.f32.xlu0 %v1047
      %v1049 = vpop.xlane.xlu0 %1048
      %v1050 = vadd.f32 %v928, %v930
      %1051 = vadd.xlane.f32.xlu0 %v1050
      %v1052 = vpop.xlane.xlu0 %1051
      %v1053 = vadd.f32 %v932, %v934
      %1054 = vadd.xlane.f32.xlu0 %v1053
      %v1055 = vpop.xlane.xlu0 %1054
      %v1056 = vadd.f32 %v936, %v938
      %1057 = vadd.xlane.f32.xlu0 %v1056
      %v1058 = vpop.xlane.xlu0 %1057
      %v1059 = vadd.f32 %v940, %v942
      %1060 = vadd.xlane.f32.xlu0 %v1059
      %v1061 = vpop.xlane.xlu0 %1060
      %v1062 = vadd.f32 %v944, %v946
      %1063 = vadd.xlane.f32.xlu0 %v1062
      %v1064 = vpop.xlane.xlu0 %1063
      %v1065 = vadd.f32 %v948, %v950
      %1066 = vadd.xlane.f32.xlu0 %v1065
      %v1067 = vpop.xlane.xlu0 %1066
      %v1068 = vadd.f32 %v952, %v954
      %1069 = vadd.xlane.f32.xlu0 %v1068
      %v1070 = vpop.xlane.xlu0 %1069
      %v1071 = vadd.f32 %v956, %v958
      %1072 = vadd.xlane.f32.xlu0 %v1071
      %v1073 = vpop.xlane.xlu0 %1072
      %v1074 = vadd.f32 %v960, %v962
      %1075 = vadd.xlane.f32.xlu0 %v1074
      %v1076 = vpop.xlane.xlu0 %1075
      %v1077 = vadd.f32 %v964, %v966
      %1078 = vadd.xlane.f32.xlu0 %v1077
      %v1079 = vpop.xlane.xlu0 %1078
      %v1080 = vadd.f32 %v968, %v970
      %1081 = vadd.xlane.f32.xlu0 %v1080
      %v1082 = vpop.xlane.xlu0 %1081
      %v1083 = vadd.f32 %v972, %v974
      %1084 = vadd.xlane.f32.xlu0 %v1083
      %v1085 = vpop.xlane.xlu0 %1084
      %v1086 = vadd.f32 %v976, %v978
      %1087 = vadd.xlane.f32.xlu0 %v1086
      %v1088 = vpop.xlane.xlu0 %1087
      %v1089 = vadd.f32 %v980, %v982
      %1090 = vadd.xlane.f32.xlu0 %v1089
      %v1091 = vpop.xlane.xlu0 %1090
      %v1092 = vadd.f32 %v984, %v986
      %1093 = vadd.xlane.f32.xlu0 %v1092
      %v1094 = vpop.xlane.xlu0 %1093
      %v1095 = vadd.f32 %v988, %v990
      %1096 = vadd.xlane.f32.xlu0 %v1095
      %v1097 = vpop.xlane.xlu0 %1096
      %v1098 = vadd.f32 %v992, %v994
      %1099 = vadd.xlane.f32.xlu0 %v1098
      %v1100 = vpop.xlane.xlu0 %1099
      %v1101 = vadd.f32 %v996, %v998
      %1102 = vadd.xlane.f32.xlu0 %v1101
      %v1103 = vpop.xlane.xlu0 %1102
      %v1104 = vadd.f32 %v1000, %v1002
      %1105 = vadd.xlane.f32.xlu0 %v1104
      %v1106 = vpop.xlane.xlu0 %1105
      %v1107 = vadd.f32 %v1004, %v1006
      %1108 = vadd.xlane.f32.xlu0 %v1107
      %v1109 = vpop.xlane.xlu0 %1108
      %v1110 = vadd.f32 %v1008, %v1010
      %1111 = vadd.xlane.f32.xlu0 %v1110
      %v1112 = vpop.xlane.xlu0 %1111
      %v1113 = vadd.f32 %v1012, %v1014
      %1114 = vadd.xlane.f32.xlu0 %v1113
      %v1115 = vpop.xlane.xlu0 %1114
      %v1116 = vadd.f32 %v1016, %v1018
      %1117 = vadd.xlane.f32.xlu0 %v1116
      %v1118 = vpop.xlane.xlu0 %1117
      %v1119 = vadd.f32 %v1020, %v1022
      %1120 = vadd.xlane.f32.xlu0 %v1119
      %v1121 = vpop.xlane.xlu0 %1120
      %v1122 = vadd.f32 %v1024, %v1026
      %1123 = vadd.xlane.f32.xlu0 %v1122
      %v1124 = vpop.xlane.xlu0 %1123
      %v1125 = vadd.f32 %v1028, %v1030
      %1126 = vadd.xlane.f32.xlu0 %v1125
      %v1127 = vpop.xlane.xlu0 %1126
      %v1128 = vadd.f32 %v1032, %v1034
      %1129 = vadd.xlane.f32.xlu0 %v1128
      %v1130 = vpop.xlane.xlu0 %1129
      %v1131 = vpack.c.bf16 %v912, %v908
      %v1132 = vpack.c.bf16 %v914, %v910
      %v1133 = vpack.c.bf16 %v920, %v916
      %v1134 = vpack.c.bf16 %v922, %v918
      %v1135 = vpack.c.bf16 %v928, %v924
      %v1136 = vpack.c.bf16 %v930, %v926
      %v1137 = vpack.c.bf16 %v936, %v932
      %v1138 = vpack.c.bf16 %v938, %v934
      %v1139 = vpack.c.bf16 %v944, %v940
      %v1140 = vpack.c.bf16 %v946, %v942
      %v1141 = vpack.c.bf16 %v952, %v948
      %v1142 = vpack.c.bf16 %v954, %v950
      %v1143 = vpack.c.bf16 %v960, %v956
      %v1144 = vpack.c.bf16 %v962, %v958
      %v1145 = vpack.c.bf16 %v968, %v964
      %v1146 = vpack.c.bf16 %v970, %v966
      %v1147 = vpack.c.bf16 %v976, %v972
      %v1148 = vpack.c.bf16 %v978, %v974
      %v1149 = vpack.c.bf16 %v984, %v980
      %v1150 = vpack.c.bf16 %v986, %v982
      %v1151 = vpack.c.bf16 %v992, %v988
      %v1152 = vpack.c.bf16 %v994, %v990
      %v1153 = vpack.c.bf16 %v1000, %v996
      %v1154 = vpack.c.bf16 %v1002, %v998
      %v1155 = vpack.c.bf16 %v1008, %v1004
      %v1156 = vpack.c.bf16 %v1010, %v1006
      %v1157 = vpack.c.bf16 %v1016, %v1012
      %v1158 = vpack.c.bf16 %v1018, %v1014
      %v1159 = vpack.c.bf16 %v1024, %v1020
      %v1160 = vpack.c.bf16 %v1026, %v1022
      %v1161 = vpack.c.bf16 %v1032, %v1028
      %v1162 = vpack.c.bf16 %v1034, %v1030
      %v1163 = vld [vmem:[%s373] sm:$0xf]
      %v1164 = vld [vmem:[%s373 + $0x4] sm:$0xf]
      %v1165 = vld [vmem:[%s373 + $0x8] sm:$0xf]
      %v1166 = vld [vmem:[%s373 + $0xc] sm:$0xf]
      %v1167 = vld [vmem:[%s373 + $0x10] sm:$0xf]
      %v1168 = vld [vmem:[%s373 + $0x14] sm:$0xf]
      %v1169 = vld [vmem:[%s373 + $0x18] sm:$0xf]
      %v1170 = vld [vmem:[%s373 + $0x1c] sm:$0xf]
      %v1171 = vld [vmem:[%s373 + $0x20] sm:$0xf]
      %v1172 = vld [vmem:[%s373 + $0x24] sm:$0xf]
      %v1173 = vld [vmem:[%s373 + $0x28] sm:$0xf]
      %v1174 = vld [vmem:[%s373 + $0x2c] sm:$0xf]
      %v1175 = vld [vmem:[%s373 + $0x30] sm:$0xf]
      %v1176 = vld [vmem:[%s373 + $0x34] sm:$0xf]
      %v1177 = vld [vmem:[%s373 + $0x38] sm:$0xf]
      %v1178 = vld [vmem:[%s373 + $0x3c] sm:$0xf]
      %v1179 = vld [vmem:[%s373 + $0x40] sm:$0xf]
      %v1180 = vld [vmem:[%s373 + $0x44] sm:$0xf]
      %v1181 = vld [vmem:[%s373 + $0x48] sm:$0xf]
      %v1182 = vld [vmem:[%s373 + $0x4c] sm:$0xf]
      %v1183 = vld [vmem:[%s373 + $0x50] sm:$0xf]
      %v1184 = vld [vmem:[%s373 + $0x54] sm:$0xf]
      %v1185 = vld [vmem:[%s373 + $0x58] sm:$0xf]
      %v1186 = vld [vmem:[%s373 + $0x5c] sm:$0xf]
      %v1187 = vld [vmem:[%s373 + $0x60] sm:$0xf]
      %v1188 = vld [vmem:[%s373 + $0x64] sm:$0xf]
      %v1189 = vld [vmem:[%s373 + $0x68] sm:$0xf]
      %v1190 = vld [vmem:[%s373 + $0x6c] sm:$0xf]
      %v1191 = vld [vmem:[%s373 + $0x70] sm:$0xf]
      %v1192 = vld [vmem:[%s373 + $0x74] sm:$0xf]
      %v1193 = vld [vmem:[%s373 + $0x78] sm:$0xf]
      %v1194 = vld [vmem:[%s373 + $0x7c] sm:$0xf]
      %v1227 = vunpack.c.l.b16 %v1163
      %v1228 = vunpack.c.l.b16 %v1164
      %v1229 = vunpack.c.l.b16 %v1165
      %v1230 = vunpack.c.l.b16 %v1166
      %v1231 = vunpack.c.l.b16 %v1167
      %v1232 = vunpack.c.l.b16 %v1168
      %v1233 = vunpack.c.l.b16 %v1169
      %v1234 = vunpack.c.l.b16 %v1170
      %v1235 = vunpack.c.l.b16 %v1171
      %v1236 = vunpack.c.l.b16 %v1172
      %v1237 = vunpack.c.l.b16 %v1173
      %v1238 = vunpack.c.l.b16 %v1174
      %v1239 = vunpack.c.l.b16 %v1175
      %v1240 = vunpack.c.l.b16 %v1176
      %v1241 = vunpack.c.l.b16 %v1177
      %v1242 = vunpack.c.l.b16 %v1178
      %v1243 = vunpack.c.l.b16 %v1179
      %v1244 = vunpack.c.l.b16 %v1180
      %v1245 = vunpack.c.l.b16 %v1181
      %v1246 = vunpack.c.l.b16 %v1182
      %v1247 = vunpack.c.l.b16 %v1183
      %v1248 = vunpack.c.l.b16 %v1184
      %v1249 = vunpack.c.l.b16 %v1185
      %v1250 = vunpack.c.l.b16 %v1186
      %v1251 = vunpack.c.l.b16 %v1187
      %v1252 = vunpack.c.l.b16 %v1188
      %v1253 = vunpack.c.l.b16 %v1189
      %v1254 = vunpack.c.l.b16 %v1190
      %v1255 = vunpack.c.l.b16 %v1191
      %v1256 = vunpack.c.l.b16 %v1192
      %v1257 = vunpack.c.l.b16 %v1193
      %v1258 = vunpack.c.l.b16 %v1194
      %v1259 = vpack.c.b16 %v1228, %v1227
      %v1260 = vpack.c.b16 %v1230, %v1229
      %v1261 = vpack.c.b16 %v1232, %v1231
      %v1262 = vpack.c.b16 %v1234, %v1233
      %v1263 = vpack.c.b16 %v1236, %v1235
      %v1264 = vpack.c.b16 %v1238, %v1237
      %v1265 = vpack.c.b16 %v1240, %v1239
      %v1266 = vpack.c.b16 %v1242, %v1241
      %v1267 = vpack.c.b16 %v1244, %v1243
      %v1268 = vpack.c.b16 %v1246, %v1245
      %v1269 = vpack.c.b16 %v1248, %v1247
      %v1270 = vpack.c.b16 %v1250, %v1249
      %v1271 = vpack.c.b16 %v1252, %v1251
      %v1272 = vpack.c.b16 %v1254, %v1253
      %v1273 = vpack.c.b16 %v1256, %v1255
      %v1274 = vpack.c.b16 %v1258, %v1257
      %1291 = vmatpush.bf16.msra.mxu0 %v1266
      %1292 = vmatpush.bf16.msra.mxu0 %v1265
      %1293 = vmatpush.bf16.msra.mxu0 %v1264
      %1294 = vmatpush.bf16.msra.mxu0 %v1263
      %1295 = vmatpush.bf16.msra.mxu0 %v1262
      %1296 = vmatpush.bf16.msra.mxu0 %v1261
      %1297 = vmatpush.bf16.msra.mxu0 %v1260
      %1298 = vmatpush.bf16.msra.mxu0 %v1259
      %1299 = vmatmul.bf16.gmra.mxu0 %v1131
      %v1300 = vpop.f32.mrf.mxu0
      %v1301 = vadd.f32 0.0, %v1300
      %v1302 = vpop.f32.mrf.mxu0
      %v1303 = vadd.f32 0.0, %v1302
      %1304 = vmatmul.bf16.gmra.mxu0 %v1133
      %v1305 = vpop.f32.mrf.mxu0
      %v1306 = vadd.f32 0.0, %v1305
      %v1307 = vpop.f32.mrf.mxu0
      %v1308 = vadd.f32 0.0, %v1307
      %1309 = vmatmul.bf16.gmra.mxu0 %v1135
      %v1310 = vpop.f32.mrf.mxu0
      %v1311 = vadd.f32 0.0, %v1310
      %v1312 = vpop.f32.mrf.mxu0
      %v1313 = vadd.f32 0.0, %v1312
      %1314 = vmatmul.bf16.gmra.mxu0 %v1137
      %v1315 = vpop.f32.mrf.mxu0
      %v1316 = vadd.f32 0.0, %v1315
      %v1317 = vpop.f32.mrf.mxu0
      %v1318 = vadd.f32 0.0, %v1317
      %1319 = vmatmul.bf16.gmra.mxu0 %v1139
      %v1320 = vpop.f32.mrf.mxu0
      %v1321 = vadd.f32 0.0, %v1320
      %v1322 = vpop.f32.mrf.mxu0
      %v1323 = vadd.f32 0.0, %v1322
      %1324 = vmatmul.bf16.gmra.mxu0 %v1141
      %v1325 = vpop.f32.mrf.mxu0
      %v1326 = vadd.f32 0.0, %v1325
      %v1327 = vpop.f32.mrf.mxu0
      %v1328 = vadd.f32 0.0, %v1327
      %1329 = vmatmul.bf16.gmra.mxu0 %v1143
      %v1330 = vpop.f32.mrf.mxu0
      %v1331 = vadd.f32 0.0, %v1330
      %v1332 = vpop.f32.mrf.mxu0
      %v1333 = vadd.f32 0.0, %v1332
      %1334 = vmatmul.bf16.gmra.mxu0 %v1145
      %v1335 = vpop.f32.mrf.mxu0
      %v1336 = vadd.f32 0.0, %v1335
      %v1337 = vpop.f32.mrf.mxu0
      %v1338 = vadd.f32 0.0, %v1337
      %1339 = vmatmul.bf16.gmra.mxu0 %v1147
      %v1340 = vpop.f32.mrf.mxu0
      %v1341 = vadd.f32 0.0, %v1340
      %v1342 = vpop.f32.mrf.mxu0
      %v1343 = vadd.f32 0.0, %v1342
      %1344 = vmatmul.bf16.gmra.mxu0 %v1149
      %v1345 = vpop.f32.mrf.mxu0
      %v1346 = vadd.f32 0.0, %v1345
      %v1347 = vpop.f32.mrf.mxu0
      %v1348 = vadd.f32 0.0, %v1347
      %1349 = vmatmul.bf16.gmra.mxu0 %v1151
      %v1350 = vpop.f32.mrf.mxu0
      %v1351 = vadd.f32 0.0, %v1350
      %v1352 = vpop.f32.mrf.mxu0
      %v1353 = vadd.f32 0.0, %v1352
      %1354 = vmatmul.bf16.gmra.mxu0 %v1153
      %v1355 = vpop.f32.mrf.mxu0
      %v1356 = vadd.f32 0.0, %v1355
      %v1357 = vpop.f32.mrf.mxu0
      %v1358 = vadd.f32 0.0, %v1357
      %1359 = vmatmul.bf16.gmra.mxu0 %v1155
      %v1360 = vpop.f32.mrf.mxu0
      %v1361 = vadd.f32 0.0, %v1360
      %v1362 = vpop.f32.mrf.mxu0
      %v1363 = vadd.f32 0.0, %v1362
      %1364 = vmatmul.bf16.gmra.mxu0 %v1157
      %v1365 = vpop.f32.mrf.mxu0
      %v1366 = vadd.f32 0.0, %v1365
      %v1367 = vpop.f32.mrf.mxu0
      %v1368 = vadd.f32 0.0, %v1367
      %1369 = vmatmul.bf16.gmra.mxu0 %v1159
      %v1370 = vpop.f32.mrf.mxu0
      %v1371 = vadd.f32 0.0, %v1370
      %v1372 = vpop.f32.mrf.mxu0
      %v1373 = vadd.f32 0.0, %v1372
      %1374 = vmatmul.bf16.gmra.mxu0 %v1161
      %v1375 = vpop.f32.mrf.mxu0
      %v1376 = vadd.f32 0.0, %v1375
      %v1377 = vpop.f32.mrf.mxu0
      %v1378 = vadd.f32 0.0, %v1377
      %1379 = vdwg.mxu0
      %1380 = vmatpush.bf16.msra.mxu0 %v1274
      %1381 = vmatpush.bf16.msra.mxu0 %v1273
      %1382 = vmatpush.bf16.msra.mxu0 %v1272
      %1383 = vmatpush.bf16.msra.mxu0 %v1271
      %1384 = vmatpush.bf16.msra.mxu0 %v1270
      %1385 = vmatpush.bf16.msra.mxu0 %v1269
      %1386 = vmatpush.bf16.msra.mxu0 %v1268
      %1387 = vmatpush.bf16.msra.mxu0 %v1267
      %1388 = vmatmul.bf16.gmra.mxu0 %v1132
      %v1389 = vpop.f32.mrf.mxu0
      %v1390 = vadd.f32 %v1301, %v1389
      %v1391 = vpop.f32.mrf.mxu0
      %v1392 = vadd.f32 %v1303, %v1391
      %1393 = vmatmul.bf16.gmra.mxu0 %v1134
      %v1394 = vpop.f32.mrf.mxu0
      %v1395 = vadd.f32 %v1306, %v1394
      %v1396 = vpop.f32.mrf.mxu0
      %v1397 = vadd.f32 %v1308, %v1396
      %1398 = vmatmul.bf16.gmra.mxu0 %v1136
      %v1399 = vpop.f32.mrf.mxu0
      %v1400 = vadd.f32 %v1311, %v1399
      %v1401 = vpop.f32.mrf.mxu0
      %v1402 = vadd.f32 %v1313, %v1401
      %1403 = vmatmul.bf16.gmra.mxu0 %v1138
      %v1404 = vpop.f32.mrf.mxu0
      %v1405 = vadd.f32 %v1316, %v1404
      %v1406 = vpop.f32.mrf.mxu0
      %v1407 = vadd.f32 %v1318, %v1406
      %1408 = vmatmul.bf16.gmra.mxu0 %v1140
      %v1409 = vpop.f32.mrf.mxu0
      %v1410 = vadd.f32 %v1321, %v1409
      %v1411 = vpop.f32.mrf.mxu0
      %v1412 = vadd.f32 %v1323, %v1411
      %1413 = vmatmul.bf16.gmra.mxu0 %v1142
      %v1414 = vpop.f32.mrf.mxu0
      %v1415 = vadd.f32 %v1326, %v1414
      %v1416 = vpop.f32.mrf.mxu0
      %v1417 = vadd.f32 %v1328, %v1416
      %1418 = vmatmul.bf16.gmra.mxu0 %v1144
      %v1419 = vpop.f32.mrf.mxu0
      %v1420 = vadd.f32 %v1331, %v1419
      %v1421 = vpop.f32.mrf.mxu0
      %v1422 = vadd.f32 %v1333, %v1421
      %1423 = vmatmul.bf16.gmra.mxu0 %v1146
      %v1424 = vpop.f32.mrf.mxu0
      %v1425 = vadd.f32 %v1336, %v1424
      %v1426 = vpop.f32.mrf.mxu0
      %v1427 = vadd.f32 %v1338, %v1426
      %1428 = vmatmul.bf16.gmra.mxu0 %v1148
      %v1429 = vpop.f32.mrf.mxu0
      %v1430 = vadd.f32 %v1341, %v1429
      %v1431 = vpop.f32.mrf.mxu0
      %v1432 = vadd.f32 %v1343, %v1431
      %1433 = vmatmul.bf16.gmra.mxu0 %v1150
      %v1434 = vpop.f32.mrf.mxu0
      %v1435 = vadd.f32 %v1346, %v1434
      %v1436 = vpop.f32.mrf.mxu0
      %v1437 = vadd.f32 %v1348, %v1436
      %1438 = vmatmul.bf16.gmra.mxu0 %v1152
      %v1439 = vpop.f32.mrf.mxu0
      %v1440 = vadd.f32 %v1351, %v1439
      %v1441 = vpop.f32.mrf.mxu0
      %v1442 = vadd.f32 %v1353, %v1441
      %1443 = vmatmul.bf16.gmra.mxu0 %v1154
      %v1444 = vpop.f32.mrf.mxu0
      %v1445 = vadd.f32 %v1356, %v1444
      %v1446 = vpop.f32.mrf.mxu0
      %v1447 = vadd.f32 %v1358, %v1446
      %1448 = vmatmul.bf16.gmra.mxu0 %v1156
      %v1449 = vpop.f32.mrf.mxu0
      %v1450 = vadd.f32 %v1361, %v1449
      %v1451 = vpop.f32.mrf.mxu0
      %v1452 = vadd.f32 %v1363, %v1451
      %1453 = vmatmul.bf16.gmra.mxu0 %v1158
      %v1454 = vpop.f32.mrf.mxu0
      %v1455 = vadd.f32 %v1366, %v1454
      %v1456 = vpop.f32.mrf.mxu0
      %v1457 = vadd.f32 %v1368, %v1456
      %1458 = vmatmul.bf16.gmra.mxu0 %v1160
      %v1459 = vpop.f32.mrf.mxu0
      %v1460 = vadd.f32 %v1371, %v1459
      %v1461 = vpop.f32.mrf.mxu0
      %v1462 = vadd.f32 %v1373, %v1461
      %1463 = vmatmul.bf16.gmra.mxu0 %v1162
      %v1464 = vpop.f32.mrf.mxu0
      %v1465 = vadd.f32 %v1376, %v1464
      %v1466 = vpop.f32.mrf.mxu0
      %v1467 = vadd.f32 %v1378, %v1466
      %1468 = vdwg.mxu0
      %v1469 = vrcp.pop %v1037
      %v1470 = vmul.f32 %v1037, %v1469
      %v1471 = vsub.f32 1.0, %v1470
      %v1472 = vmul.f32 %v1469, %v1471
      %v1473 = vadd.f32 %v1469, %v1472
      %vm1474 = vweird.f32 %v1037
      %vm1475 = vweird.f32 %v1469
      %vm1476 = vmor %vm1474, %vm1475
      %v1477 = vsel %vm1476, %v1469, %v1473
      %v1478 = vand.u32 2147483647, %v1037
      %vm1479 = vcmp.eq.f32.partialorder %v1478, 8.507059e+37
      %v1480 = vand.u32 %v1037, 2147483648
      %v1481 = vor.u32 1.1754944e-38, %v1480
      %v1482 = vsel %vm1479, %v1481, %v1477
      %v1483 = vmul.f32 1.0, %v1482
      %v1484 = vrcp.pop %v1040
      %v1485 = vmul.f32 %v1040, %v1484
      %v1486 = vsub.f32 1.0, %v1485
      %v1487 = vmul.f32 %v1484, %v1486
      %v1488 = vadd.f32 %v1484, %v1487
      %vm1489 = vweird.f32 %v1040
      %vm1490 = vweird.f32 %v1484
      %vm1491 = vmor %vm1489, %vm1490
      %v1492 = vsel %vm1491, %v1484, %v1488
      %v1493 = vand.u32 2147483647, %v1040
      %vm1494 = vcmp.eq.f32.partialorder %v1493, 8.507059e+37
      %v1495 = vand.u32 %v1040, 2147483648
      %v1496 = vor.u32 1.1754944e-38, %v1495
      %v1497 = vsel %vm1494, %v1496, %v1492
      %v1498 = vmul.f32 1.0, %v1497
      %v1499 = vrcp.pop %v1043
      %v1500 = vmul.f32 %v1043, %v1499
      %v1501 = vsub.f32 1.0, %v1500
      %v1502 = vmul.f32 %v1499, %v1501
      %v1503 = vadd.f32 %v1499, %v1502
      %vm1504 = vweird.f32 %v1043
      %vm1505 = vweird.f32 %v1499
      %vm1506 = vmor %vm1504, %vm1505
      %v1507 = vsel %vm1506, %v1499, %v1503
      %v1508 = vand.u32 2147483647, %v1043
      %vm1509 = vcmp.eq.f32.partialorder %v1508, 8.507059e+37
      %v1510 = vand.u32 %v1043, 2147483648
      %v1511 = vor.u32 1.1754944e-38, %v1510
      %v1512 = vsel %vm1509, %v1511, %v1507
      %v1513 = vmul.f32 1.0, %v1512
      %v1514 = vrcp.pop %v1046
      %v1515 = vmul.f32 %v1046, %v1514
      %v1516 = vsub.f32 1.0, %v1515
      %v1517 = vmul.f32 %v1514, %v1516
      %v1518 = vadd.f32 %v1514, %v1517
      %vm1519 = vweird.f32 %v1046
      %vm1520 = vweird.f32 %v1514
      %vm1521 = vmor %vm1519, %vm1520
      %v1522 = vsel %vm1521, %v1514, %v1518
      %v1523 = vand.u32 2147483647, %v1046
      %vm1524 = vcmp.eq.f32.partialorder %v1523, 8.507059e+37
      %v1525 = vand.u32 %v1046, 2147483648
      %v1526 = vor.u32 1.1754944e-38, %v1525
      %v1527 = vsel %vm1524, %v1526, %v1522
      %v1528 = vmul.f32 1.0, %v1527
      %v1529 = vrcp.pop %v1049
      %v1530 = vmul.f32 %v1049, %v1529
      %v1531 = vsub.f32 1.0, %v1530
      %v1532 = vmul.f32 %v1529, %v1531
      %v1533 = vadd.f32 %v1529, %v1532
      %vm1534 = vweird.f32 %v1049
      %vm1535 = vweird.f32 %v1529
      %vm1536 = vmor %vm1534, %vm1535
      %v1537 = vsel %vm1536, %v1529, %v1533
      %v1538 = vand.u32 2147483647, %v1049
      %vm1539 = vcmp.eq.f32.partialorder %v1538, 8.507059e+37
      %v1540 = vand.u32 %v1049, 2147483648
      %v1541 = vor.u32 1.1754944e-38, %v1540
      %v1542 = vsel %vm1539, %v1541, %v1537
      %v1543 = vmul.f32 1.0, %v1542
      %v1544 = vrcp.pop %v1052
      %v1545 = vmul.f32 %v1052, %v1544
      %v1546 = vsub.f32 1.0, %v1545
      %v1547 = vmul.f32 %v1544, %v1546
      %v1548 = vadd.f32 %v1544, %v1547
      %vm1549 = vweird.f32 %v1052
      %vm1550 = vweird.f32 %v1544
      %vm1551 = vmor %vm1549, %vm1550
      %v1552 = vsel %vm1551, %v1544, %v1548
      %v1553 = vand.u32 2147483647, %v1052
      %vm1554 = vcmp.eq.f32.partialorder %v1553, 8.507059e+37
      %v1555 = vand.u32 %v1052, 2147483648
      %v1556 = vor.u32 1.1754944e-38, %v1555
      %v1557 = vsel %vm1554, %v1556, %v1552
      %v1558 = vmul.f32 1.0, %v1557
      %v1559 = vrcp.pop %v1055
      %v1560 = vmul.f32 %v1055, %v1559
      %v1561 = vsub.f32 1.0, %v1560
      %v1562 = vmul.f32 %v1559, %v1561
      %v1563 = vadd.f32 %v1559, %v1562
      %vm1564 = vweird.f32 %v1055
      %vm1565 = vweird.f32 %v1559
      %vm1566 = vmor %vm1564, %vm1565
      %v1567 = vsel %vm1566, %v1559, %v1563
      %v1568 = vand.u32 2147483647, %v1055
      %vm1569 = vcmp.eq.f32.partialorder %v1568, 8.507059e+37
      %v1570 = vand.u32 %v1055, 2147483648
      %v1571 = vor.u32 1.1754944e-38, %v1570
      %v1572 = vsel %vm1569, %v1571, %v1567
      %v1573 = vmul.f32 1.0, %v1572
      %v1574 = vrcp.pop %v1058
      %v1575 = vmul.f32 %v1058, %v1574
      %v1576 = vsub.f32 1.0, %v1575
      %v1577 = vmul.f32 %v1574, %v1576
      %v1578 = vadd.f32 %v1574, %v1577
      %vm1579 = vweird.f32 %v1058
      %vm1580 = vweird.f32 %v1574
      %vm1581 = vmor %vm1579, %vm1580
      %v1582 = vsel %vm1581, %v1574, %v1578
      %v1583 = vand.u32 2147483647, %v1058
      %vm1584 = vcmp.eq.f32.partialorder %v1583, 8.507059e+37
      %v1585 = vand.u32 %v1058, 2147483648
      %v1586 = vor.u32 1.1754944e-38, %v1585
      %v1587 = vsel %vm1584, %v1586, %v1582
      %v1588 = vmul.f32 1.0, %v1587
      %v1589 = vrcp.pop %v1061
      %v1590 = vmul.f32 %v1061, %v1589
      %v1591 = vsub.f32 1.0, %v1590
      %v1592 = vmul.f32 %v1589, %v1591
      %v1593 = vadd.f32 %v1589, %v1592
      %vm1594 = vweird.f32 %v1061
      %vm1595 = vweird.f32 %v1589
      %vm1596 = vmor %vm1594, %vm1595
      %v1597 = vsel %vm1596, %v1589, %v1593
      %v1598 = vand.u32 2147483647, %v1061
      %vm1599 = vcmp.eq.f32.partialorder %v1598, 8.507059e+37
      %v1600 = vand.u32 %v1061, 2147483648
      %v1601 = vor.u32 1.1754944e-38, %v1600
      %v1602 = vsel %vm1599, %v1601, %v1597
      %v1603 = vmul.f32 1.0, %v1602
      %v1604 = vrcp.pop %v1064
      %v1605 = vmul.f32 %v1064, %v1604
      %v1606 = vsub.f32 1.0, %v1605
      %v1607 = vmul.f32 %v1604, %v1606
      %v1608 = vadd.f32 %v1604, %v1607
      %vm1609 = vweird.f32 %v1064
      %vm1610 = vweird.f32 %v1604
      %vm1611 = vmor %vm1609, %vm1610
      %v1612 = vsel %vm1611, %v1604, %v1608
      %v1613 = vand.u32 2147483647, %v1064
      %vm1614 = vcmp.eq.f32.partialorder %v1613, 8.507059e+37
      %v1615 = vand.u32 %v1064, 2147483648
      %v1616 = vor.u32 1.1754944e-38, %v1615
      %v1617 = vsel %vm1614, %v1616, %v1612
      %v1618 = vmul.f32 1.0, %v1617
      %v1619 = vrcp.pop %v1067
      %v1620 = vmul.f32 %v1067, %v1619
      %v1621 = vsub.f32 1.0, %v1620
      %v1622 = vmul.f32 %v1619, %v1621
      %v1623 = vadd.f32 %v1619, %v1622
      %vm1624 = vweird.f32 %v1067
      %vm1625 = vweird.f32 %v1619
      %vm1626 = vmor %vm1624, %vm1625
      %v1627 = vsel %vm1626, %v1619, %v1623
      %v1628 = vand.u32 2147483647, %v1067
      %vm1629 = vcmp.eq.f32.partialorder %v1628, 8.507059e+37
      %v1630 = vand.u32 %v1067, 2147483648
      %v1631 = vor.u32 1.1754944e-38, %v1630
      %v1632 = vsel %vm1629, %v1631, %v1627
      %v1633 = vmul.f32 1.0, %v1632
      %v1634 = vrcp.pop %v1070
      %v1635 = vmul.f32 %v1070, %v1634
      %v1636 = vsub.f32 1.0, %v1635
      %v1637 = vmul.f32 %v1634, %v1636
      %v1638 = vadd.f32 %v1634, %v1637
      %vm1639 = vweird.f32 %v1070
      %vm1640 = vweird.f32 %v1634
      %vm1641 = vmor %vm1639, %vm1640
      %v1642 = vsel %vm1641, %v1634, %v1638
      %v1643 = vand.u32 2147483647, %v1070
      %vm1644 = vcmp.eq.f32.partialorder %v1643, 8.507059e+37
      %v1645 = vand.u32 %v1070, 2147483648
      %v1646 = vor.u32 1.1754944e-38, %v1645
      %v1647 = vsel %vm1644, %v1646, %v1642
      %v1648 = vmul.f32 1.0, %v1647
      %v1649 = vrcp.pop %v1073
      %v1650 = vmul.f32 %v1073, %v1649
      %v1651 = vsub.f32 1.0, %v1650
      %v1652 = vmul.f32 %v1649, %v1651
      %v1653 = vadd.f32 %v1649, %v1652
      %vm1654 = vweird.f32 %v1073
      %vm1655 = vweird.f32 %v1649
      %vm1656 = vmor %vm1654, %vm1655
      %v1657 = vsel %vm1656, %v1649, %v1653
      %v1658 = vand.u32 2147483647, %v1073
      %vm1659 = vcmp.eq.f32.partialorder %v1658, 8.507059e+37
      %v1660 = vand.u32 %v1073, 2147483648
      %v1661 = vor.u32 1.1754944e-38, %v1660
      %v1662 = vsel %vm1659, %v1661, %v1657
      %v1663 = vmul.f32 1.0, %v1662
      %v1664 = vrcp.pop %v1076
      %v1665 = vmul.f32 %v1076, %v1664
      %v1666 = vsub.f32 1.0, %v1665
      %v1667 = vmul.f32 %v1664, %v1666
      %v1668 = vadd.f32 %v1664, %v1667
      %vm1669 = vweird.f32 %v1076
      %vm1670 = vweird.f32 %v1664
      %vm1671 = vmor %vm1669, %vm1670
      %v1672 = vsel %vm1671, %v1664, %v1668
      %v1673 = vand.u32 2147483647, %v1076
      %vm1674 = vcmp.eq.f32.partialorder %v1673, 8.507059e+37
      %v1675 = vand.u32 %v1076, 2147483648
      %v1676 = vor.u32 1.1754944e-38, %v1675
      %v1677 = vsel %vm1674, %v1676, %v1672
      %v1678 = vmul.f32 1.0, %v1677
      %v1679 = vrcp.pop %v1079
      %v1680 = vmul.f32 %v1079, %v1679
      %v1681 = vsub.f32 1.0, %v1680
      %v1682 = vmul.f32 %v1679, %v1681
      %v1683 = vadd.f32 %v1679, %v1682
      %vm1684 = vweird.f32 %v1079
      %vm1685 = vweird.f32 %v1679
      %vm1686 = vmor %vm1684, %vm1685
      %v1687 = vsel %vm1686, %v1679, %v1683
      %v1688 = vand.u32 2147483647, %v1079
      %vm1689 = vcmp.eq.f32.partialorder %v1688, 8.507059e+37
      %v1690 = vand.u32 %v1079, 2147483648
      %v1691 = vor.u32 1.1754944e-38, %v1690
      %v1692 = vsel %vm1689, %v1691, %v1687
      %v1693 = vmul.f32 1.0, %v1692
      %v1694 = vrcp.pop %v1082
      %v1695 = vmul.f32 %v1082, %v1694
      %v1696 = vsub.f32 1.0, %v1695
      %v1697 = vmul.f32 %v1694, %v1696
      %v1698 = vadd.f32 %v1694, %v1697
      %vm1699 = vweird.f32 %v1082
      %vm1700 = vweird.f32 %v1694
      %vm1701 = vmor %vm1699, %vm1700
      %v1702 = vsel %vm1701, %v1694, %v1698
      %v1703 = vand.u32 2147483647, %v1082
      %vm1704 = vcmp.eq.f32.partialorder %v1703, 8.507059e+37
      %v1705 = vand.u32 %v1082, 2147483648
      %v1706 = vor.u32 1.1754944e-38, %v1705
      %v1707 = vsel %vm1704, %v1706, %v1702
      %v1708 = vmul.f32 1.0, %v1707
      %v1709 = vrcp.pop %v1085
      %v1710 = vmul.f32 %v1085, %v1709
      %v1711 = vsub.f32 1.0, %v1710
      %v1712 = vmul.f32 %v1709, %v1711
      %v1713 = vadd.f32 %v1709, %v1712
      %vm1714 = vweird.f32 %v1085
      %vm1715 = vweird.f32 %v1709
      %vm1716 = vmor %vm1714, %vm1715
      %v1717 = vsel %vm1716, %v1709, %v1713
      %v1718 = vand.u32 2147483647, %v1085
      %vm1719 = vcmp.eq.f32.partialorder %v1718, 8.507059e+37
      %v1720 = vand.u32 %v1085, 2147483648
      %v1721 = vor.u32 1.1754944e-38, %v1720
      %v1722 = vsel %vm1719, %v1721, %v1717
      %v1723 = vmul.f32 1.0, %v1722
      %v1724 = vrcp.pop %v1088
      %v1725 = vmul.f32 %v1088, %v1724
      %v1726 = vsub.f32 1.0, %v1725
      %v1727 = vmul.f32 %v1724, %v1726
      %v1728 = vadd.f32 %v1724, %v1727
      %vm1729 = vweird.f32 %v1088
      %vm1730 = vweird.f32 %v1724
      %vm1731 = vmor %vm1729, %vm1730
      %v1732 = vsel %vm1731, %v1724, %v1728
      %v1733 = vand.u32 2147483647, %v1088
      %vm1734 = vcmp.eq.f32.partialorder %v1733, 8.507059e+37
      %v1735 = vand.u32 %v1088, 2147483648
      %v1736 = vor.u32 1.1754944e-38, %v1735
      %v1737 = vsel %vm1734, %v1736, %v1732
      %v1738 = vmul.f32 1.0, %v1737
      %v1739 = vrcp.pop %v1091
      %v1740 = vmul.f32 %v1091, %v1739
      %v1741 = vsub.f32 1.0, %v1740
      %v1742 = vmul.f32 %v1739, %v1741
      %v1743 = vadd.f32 %v1739, %v1742
      %vm1744 = vweird.f32 %v1091
      %vm1745 = vweird.f32 %v1739
      %vm1746 = vmor %vm1744, %vm1745
      %v1747 = vsel %vm1746, %v1739, %v1743
      %v1748 = vand.u32 2147483647, %v1091
      %vm1749 = vcmp.eq.f32.partialorder %v1748, 8.507059e+37
      %v1750 = vand.u32 %v1091, 2147483648
      %v1751 = vor.u32 1.1754944e-38, %v1750
      %v1752 = vsel %vm1749, %v1751, %v1747
      %v1753 = vmul.f32 1.0, %v1752
      %v1754 = vrcp.pop %v1094
      %v1755 = vmul.f32 %v1094, %v1754
      %v1756 = vsub.f32 1.0, %v1755
      %v1757 = vmul.f32 %v1754, %v1756
      %v1758 = vadd.f32 %v1754, %v1757
      %vm1759 = vweird.f32 %v1094
      %vm1760 = vweird.f32 %v1754
      %vm1761 = vmor %vm1759, %vm1760
      %v1762 = vsel %vm1761, %v1754, %v1758
      %v1763 = vand.u32 2147483647, %v1094
      %vm1764 = vcmp.eq.f32.partialorder %v1763, 8.507059e+37
      %v1765 = vand.u32 %v1094, 2147483648
      %v1766 = vor.u32 1.1754944e-38, %v1765
      %v1767 = vsel %vm1764, %v1766, %v1762
      %v1768 = vmul.f32 1.0, %v1767
      %v1769 = vrcp.pop %v1097
      %v1770 = vmul.f32 %v1097, %v1769
      %v1771 = vsub.f32 1.0, %v1770
      %v1772 = vmul.f32 %v1769, %v1771
      %v1773 = vadd.f32 %v1769, %v1772
      %vm1774 = vweird.f32 %v1097
      %vm1775 = vweird.f32 %v1769
      %vm1776 = vmor %vm1774, %vm1775
      %v1777 = vsel %vm1776, %v1769, %v1773
      %v1778 = vand.u32 2147483647, %v1097
      %vm1779 = vcmp.eq.f32.partialorder %v1778, 8.507059e+37
      %v1780 = vand.u32 %v1097, 2147483648
      %v1781 = vor.u32 1.1754944e-38, %v1780
      %v1782 = vsel %vm1779, %v1781, %v1777
      %v1783 = vmul.f32 1.0, %v1782
      %v1784 = vrcp.pop %v1100
      %v1785 = vmul.f32 %v1100, %v1784
      %v1786 = vsub.f32 1.0, %v1785
      %v1787 = vmul.f32 %v1784, %v1786
      %v1788 = vadd.f32 %v1784, %v1787
      %vm1789 = vweird.f32 %v1100
      %vm1790 = vweird.f32 %v1784
      %vm1791 = vmor %vm1789, %vm1790
      %v1792 = vsel %vm1791, %v1784, %v1788
      %v1793 = vand.u32 2147483647, %v1100
      %vm1794 = vcmp.eq.f32.partialorder %v1793, 8.507059e+37
      %v1795 = vand.u32 %v1100, 2147483648
      %v1796 = vor.u32 1.1754944e-38, %v1795
      %v1797 = vsel %vm1794, %v1796, %v1792
      %v1798 = vmul.f32 1.0, %v1797
      %v1799 = vrcp.pop %v1103
      %v1800 = vmul.f32 %v1103, %v1799
      %v1801 = vsub.f32 1.0, %v1800
      %v1802 = vmul.f32 %v1799, %v1801
      %v1803 = vadd.f32 %v1799, %v1802
      %vm1804 = vweird.f32 %v1103
      %vm1805 = vweird.f32 %v1799
      %vm1806 = vmor %vm1804, %vm1805
      %v1807 = vsel %vm1806, %v1799, %v1803
      %v1808 = vand.u32 2147483647, %v1103
      %vm1809 = vcmp.eq.f32.partialorder %v1808, 8.507059e+37
      %v1810 = vand.u32 %v1103, 2147483648
      %v1811 = vor.u32 1.1754944e-38, %v1810
      %v1812 = vsel %vm1809, %v1811, %v1807
      %v1813 = vmul.f32 1.0, %v1812
      %v1814 = vrcp.pop %v1106
      %v1815 = vmul.f32 %v1106, %v1814
      %v1816 = vsub.f32 1.0, %v1815
      %v1817 = vmul.f32 %v1814, %v1816
      %v1818 = vadd.f32 %v1814, %v1817
      %vm1819 = vweird.f32 %v1106
      %vm1820 = vweird.f32 %v1814
      %vm1821 = vmor %vm1819, %vm1820
      %v1822 = vsel %vm1821, %v1814, %v1818
      %v1823 = vand.u32 2147483647, %v1106
      %vm1824 = vcmp.eq.f32.partialorder %v1823, 8.507059e+37
      %v1825 = vand.u32 %v1106, 2147483648
      %v1826 = vor.u32 1.1754944e-38, %v1825
      %v1827 = vsel %vm1824, %v1826, %v1822
      %v1828 = vmul.f32 1.0, %v1827
      %v1829 = vrcp.pop %v1109
      %v1830 = vmul.f32 %v1109, %v1829
      %v1831 = vsub.f32 1.0, %v1830
      %v1832 = vmul.f32 %v1829, %v1831
      %v1833 = vadd.f32 %v1829, %v1832
      %vm1834 = vweird.f32 %v1109
      %vm1835 = vweird.f32 %v1829
      %vm1836 = vmor %vm1834, %vm1835
      %v1837 = vsel %vm1836, %v1829, %v1833
      %v1838 = vand.u32 2147483647, %v1109
      %vm1839 = vcmp.eq.f32.partialorder %v1838, 8.507059e+37
      %v1840 = vand.u32 %v1109, 2147483648
      %v1841 = vor.u32 1.1754944e-38, %v1840
      %v1842 = vsel %vm1839, %v1841, %v1837
      %v1843 = vmul.f32 1.0, %v1842
      %v1844 = vrcp.pop %v1112
      %v1845 = vmul.f32 %v1112, %v1844
      %v1846 = vsub.f32 1.0, %v1845
      %v1847 = vmul.f32 %v1844, %v1846
      %v1848 = vadd.f32 %v1844, %v1847
      %vm1849 = vweird.f32 %v1112
      %vm1850 = vweird.f32 %v1844
      %vm1851 = vmor %vm1849, %vm1850
      %v1852 = vsel %vm1851, %v1844, %v1848
      %v1853 = vand.u32 2147483647, %v1112
      %vm1854 = vcmp.eq.f32.partialorder %v1853, 8.507059e+37
      %v1855 = vand.u32 %v1112, 2147483648
      %v1856 = vor.u32 1.1754944e-38, %v1855
      %v1857 = vsel %vm1854, %v1856, %v1852
      %v1858 = vmul.f32 1.0, %v1857
      %v1859 = vrcp.pop %v1115
      %v1860 = vmul.f32 %v1115, %v1859
      %v1861 = vsub.f32 1.0, %v1860
      %v1862 = vmul.f32 %v1859, %v1861
      %v1863 = vadd.f32 %v1859, %v1862
      %vm1864 = vweird.f32 %v1115
      %vm1865 = vweird.f32 %v1859
      %vm1866 = vmor %vm1864, %vm1865
      %v1867 = vsel %vm1866, %v1859, %v1863
      %v1868 = vand.u32 2147483647, %v1115
      %vm1869 = vcmp.eq.f32.partialorder %v1868, 8.507059e+37
      %v1870 = vand.u32 %v1115, 2147483648
      %v1871 = vor.u32 1.1754944e-38, %v1870
      %v1872 = vsel %vm1869, %v1871, %v1867
      %v1873 = vmul.f32 1.0, %v1872
      %v1874 = vrcp.pop %v1118
      %v1875 = vmul.f32 %v1118, %v1874
      %v1876 = vsub.f32 1.0, %v1875
      %v1877 = vmul.f32 %v1874, %v1876
      %v1878 = vadd.f32 %v1874, %v1877
      %vm1879 = vweird.f32 %v1118
      %vm1880 = vweird.f32 %v1874
      %vm1881 = vmor %vm1879, %vm1880
      %v1882 = vsel %vm1881, %v1874, %v1878
      %v1883 = vand.u32 2147483647, %v1118
      %vm1884 = vcmp.eq.f32.partialorder %v1883, 8.507059e+37
      %v1885 = vand.u32 %v1118, 2147483648
      %v1886 = vor.u32 1.1754944e-38, %v1885
      %v1887 = vsel %vm1884, %v1886, %v1882
      %v1888 = vmul.f32 1.0, %v1887
      %v1889 = vrcp.pop %v1121
      %v1890 = vmul.f32 %v1121, %v1889
      %v1891 = vsub.f32 1.0, %v1890
      %v1892 = vmul.f32 %v1889, %v1891
      %v1893 = vadd.f32 %v1889, %v1892
      %vm1894 = vweird.f32 %v1121
      %vm1895 = vweird.f32 %v1889
      %vm1896 = vmor %vm1894, %vm1895
      %v1897 = vsel %vm1896, %v1889, %v1893
      %v1898 = vand.u32 2147483647, %v1121
      %vm1899 = vcmp.eq.f32.partialorder %v1898, 8.507059e+37
      %v1900 = vand.u32 %v1121, 2147483648
      %v1901 = vor.u32 1.1754944e-38, %v1900
      %v1902 = vsel %vm1899, %v1901, %v1897
      %v1903 = vmul.f32 1.0, %v1902
      %v1904 = vrcp.pop %v1124
      %v1905 = vmul.f32 %v1124, %v1904
      %v1906 = vsub.f32 1.0, %v1905
      %v1907 = vmul.f32 %v1904, %v1906
      %v1908 = vadd.f32 %v1904, %v1907
      %vm1909 = vweird.f32 %v1124
      %vm1910 = vweird.f32 %v1904
      %vm1911 = vmor %vm1909, %vm1910
      %v1912 = vsel %vm1911, %v1904, %v1908
      %v1913 = vand.u32 2147483647, %v1124
      %vm1914 = vcmp.eq.f32.partialorder %v1913, 8.507059e+37
      %v1915 = vand.u32 %v1124, 2147483648
      %v1916 = vor.u32 1.1754944e-38, %v1915
      %v1917 = vsel %vm1914, %v1916, %v1912
      %v1918 = vmul.f32 1.0, %v1917
      %v1919 = vrcp.pop %v1127
      %v1920 = vmul.f32 %v1127, %v1919
      %v1921 = vsub.f32 1.0, %v1920
      %v1922 = vmul.f32 %v1919, %v1921
      %v1923 = vadd.f32 %v1919, %v1922
      %vm1924 = vweird.f32 %v1127
      %vm1925 = vweird.f32 %v1919
      %vm1926 = vmor %vm1924, %vm1925
      %v1927 = vsel %vm1926, %v1919, %v1923
      %v1928 = vand.u32 2147483647, %v1127
      %vm1929 = vcmp.eq.f32.partialorder %v1928, 8.507059e+37
      %v1930 = vand.u32 %v1127, 2147483648
      %v1931 = vor.u32 1.1754944e-38, %v1930
      %v1932 = vsel %vm1929, %v1931, %v1927
      %v1933 = vmul.f32 1.0, %v1932
      %v1934 = vrcp.pop %v1130
      %v1935 = vmul.f32 %v1130, %v1934
      %v1936 = vsub.f32 1.0, %v1935
      %v1937 = vmul.f32 %v1934, %v1936
      %v1938 = vadd.f32 %v1934, %v1937
      %vm1939 = vweird.f32 %v1130
      %vm1940 = vweird.f32 %v1934
      %vm1941 = vmor %vm1939, %vm1940
      %v1942 = vsel %vm1941, %v1934, %v1938
      %v1943 = vand.u32 2147483647, %v1130
      %vm1944 = vcmp.eq.f32.partialorder %v1943, 8.507059e+37
      %v1945 = vand.u32 %v1130, 2147483648
      %v1946 = vor.u32 1.1754944e-38, %v1945
      %v1947 = vsel %vm1944, %v1946, %v1942
      %v1948 = vmul.f32 1.0, %v1947
      %v1949 = vmul.f32 %v1390, %v1483
      %v1950 = vmul.f32 %v1392, %v1498
      %v1951 = vmul.f32 %v1395, %v1513
      %v1952 = vmul.f32 %v1397, %v1528
      %v1953 = vmul.f32 %v1400, %v1543
      %v1954 = vmul.f32 %v1402, %v1558
      %v1955 = vmul.f32 %v1405, %v1573
      %v1956 = vmul.f32 %v1407, %v1588
      %v1957 = vmul.f32 %v1410, %v1603
      %v1958 = vmul.f32 %v1412, %v1618
      %v1959 = vmul.f32 %v1415, %v1633
      %v1960 = vmul.f32 %v1417, %v1648
      %v1961 = vmul.f32 %v1420, %v1663
      %v1962 = vmul.f32 %v1422, %v1678
      %v1963 = vmul.f32 %v1425, %v1693
      %v1964 = vmul.f32 %v1427, %v1708
      %v1965 = vmul.f32 %v1430, %v1723
      %v1966 = vmul.f32 %v1432, %v1738
      %v1967 = vmul.f32 %v1435, %v1753
      %v1968 = vmul.f32 %v1437, %v1768
      %v1969 = vmul.f32 %v1440, %v1783
      %v1970 = vmul.f32 %v1442, %v1798
      %v1971 = vmul.f32 %v1445, %v1813
      %v1972 = vmul.f32 %v1447, %v1828
      %v1973 = vmul.f32 %v1450, %v1843
      %v1974 = vmul.f32 %v1452, %v1858
      %v1975 = vmul.f32 %v1455, %v1873
      %v1976 = vmul.f32 %v1457, %v1888
      %v1977 = vmul.f32 %v1460, %v1903
      %v1978 = vmul.f32 %v1462, %v1918
      %v1979 = vmul.f32 %v1465, %v1933
      %v1980 = vmul.f32 %v1467, %v1948
      %v1981 = vpack.c.bf16 %v1950, %v1949
      %v1982 = vpack.c.bf16 %v1952, %v1951
      %v1983 = vpack.c.bf16 %v1954, %v1953
      %v1984 = vpack.c.bf16 %v1956, %v1955
      %v1985 = vpack.c.bf16 %v1958, %v1957
      %v1986 = vpack.c.bf16 %v1960, %v1959
      %v1987 = vpack.c.bf16 %v1962, %v1961
      %v1988 = vpack.c.bf16 %v1964, %v1963
      %v1989 = vpack.c.bf16 %v1966, %v1965
      %v1990 = vpack.c.bf16 %v1968, %v1967
      %v1991 = vpack.c.bf16 %v1970, %v1969
      %v1992 = vpack.c.bf16 %v1972, %v1971
      %v1993 = vpack.c.bf16 %v1974, %v1973
      %v1994 = vpack.c.bf16 %v1976, %v1975
      %v1995 = vpack.c.bf16 %v1978, %v1977
      %v1996 = vpack.c.bf16 %v1980, %v1979
      %v1997 = vld [vmem:[%s3] sm:$0xf]
      %v1999 = vsel %vm513, %v1981, 0
      %v2002 = vsel %vm513, %v1982, 0
      %v2005 = vsel %vm513, %v1983, 0
      %v2008 = vsel %vm513, %v1984, 0
      %v2011 = vsel %vm513, %v1985, 0
      %v2014 = vsel %vm513, %v1986, 0
      %v2017 = vsel %vm513, %v1987, 0
      %v2020 = vsel %vm513, %v1988, 0
      %v2023 = vsel %vm513, %v1989, 0
      %v2026 = vsel %vm513, %v1990, 0
      %v2029 = vsel %vm513, %v1991, 0
      %v2032 = vsel %vm513, %v1992, 0
      %v2035 = vsel %vm513, %v1993, 0
      %v2038 = vsel %vm513, %v1994, 0
      %v2041 = vsel %vm513, %v1995, 0
      %v2044 = vsel %vm513, %v1996, 0
      %v2047 = vsel %vm562, %v1997, 0
      %2049 = vmatpush.bf16.msra.mxu0 0
      %2050 = vmatpush.bf16.msra.mxu0 0
      %2051 = vmatpush.bf16.msra.mxu0 0
      %2052 = vmatpush.bf16.msra.mxu0 0
      %2053 = vmatpush.bf16.msra.mxu0 0
      %2054 = vmatpush.bf16.msra.mxu0 0
      %2055 = vmatpush.bf16.msra.mxu0 0
      %2056 = vmatpush.bf16.msra.mxu0 %v2047
      %2057 = vmatmul.bf16.gmra.mxu0 %v1999
      %v2058 = vpop.f32.mrf.mxu0
      %v2059 = vadd.f32 0.0, %v2058
      %v2060 = vpop.f32.mrf.mxu0
      %v2061 = vadd.f32 0.0, %v2060
      %2062 = vmatmul.bf16.gmra.mxu0 %v2002
      %v2063 = vpop.f32.mrf.mxu0
      %v2064 = vadd.f32 0.0, %v2063
      %v2065 = vpop.f32.mrf.mxu0
      %v2066 = vadd.f32 0.0, %v2065
      %2067 = vmatmul.bf16.gmra.mxu0 %v2005
      %v2068 = vpop.f32.mrf.mxu0
      %v2069 = vadd.f32 0.0, %v2068
      %v2070 = vpop.f32.mrf.mxu0
      %v2071 = vadd.f32 0.0, %v2070
      %2072 = vmatmul.bf16.gmra.mxu0 %v2008
      %v2073 = vpop.f32.mrf.mxu0
      %v2074 = vadd.f32 0.0, %v2073
      %v2075 = vpop.f32.mrf.mxu0
      %v2076 = vadd.f32 0.0, %v2075
      %2077 = vmatmul.bf16.gmra.mxu0 %v2011
      %v2078 = vpop.f32.mrf.mxu0
      %v2079 = vadd.f32 0.0, %v2078
      %v2080 = vpop.f32.mrf.mxu0
      %v2081 = vadd.f32 0.0, %v2080
      %2082 = vmatmul.bf16.gmra.mxu0 %v2014
      %v2083 = vpop.f32.mrf.mxu0
      %v2084 = vadd.f32 0.0, %v2083
      %v2085 = vpop.f32.mrf.mxu0
      %v2086 = vadd.f32 0.0, %v2085
      %2087 = vmatmul.bf16.gmra.mxu0 %v2017
      %v2088 = vpop.f32.mrf.mxu0
      %v2089 = vadd.f32 0.0, %v2088
      %v2090 = vpop.f32.mrf.mxu0
      %v2091 = vadd.f32 0.0, %v2090
      %2092 = vmatmul.bf16.gmra.mxu0 %v2020
      %v2093 = vpop.f32.mrf.mxu0
      %v2094 = vadd.f32 0.0, %v2093
      %v2095 = vpop.f32.mrf.mxu0
      %v2096 = vadd.f32 0.0, %v2095
      %2097 = vmatmul.bf16.gmra.mxu0 %v2023
      %v2098 = vpop.f32.mrf.mxu0
      %v2099 = vadd.f32 0.0, %v2098
      %v2100 = vpop.f32.mrf.mxu0
      %v2101 = vadd.f32 0.0, %v2100
      %2102 = vmatmul.bf16.gmra.mxu0 %v2026
      %v2103 = vpop.f32.mrf.mxu0
      %v2104 = vadd.f32 0.0, %v2103
      %v2105 = vpop.f32.mrf.mxu0
      %v2106 = vadd.f32 0.0, %v2105
      %2107 = vmatmul.bf16.gmra.mxu0 %v2029
      %v2108 = vpop.f32.mrf.mxu0
      %v2109 = vadd.f32 0.0, %v2108
      %v2110 = vpop.f32.mrf.mxu0
      %v2111 = vadd.f32 0.0, %v2110
      %2112 = vmatmul.bf16.gmra.mxu0 %v2032
      %v2113 = vpop.f32.mrf.mxu0
      %v2114 = vadd.f32 0.0, %v2113
      %v2115 = vpop.f32.mrf.mxu0
      %v2116 = vadd.f32 0.0, %v2115
      %2117 = vmatmul.bf16.gmra.mxu0 %v2035
      %v2118 = vpop.f32.mrf.mxu0
      %v2119 = vadd.f32 0.0, %v2118
      %v2120 = vpop.f32.mrf.mxu0
      %v2121 = vadd.f32 0.0, %v2120
      %2122 = vmatmul.bf16.gmra.mxu0 %v2038
      %v2123 = vpop.f32.mrf.mxu0
      %v2124 = vadd.f32 0.0, %v2123
      %v2125 = vpop.f32.mrf.mxu0
      %v2126 = vadd.f32 0.0, %v2125
      %2127 = vmatmul.bf16.gmra.mxu0 %v2041
      %v2128 = vpop.f32.mrf.mxu0
      %v2129 = vadd.f32 0.0, %v2128
      %v2130 = vpop.f32.mrf.mxu0
      %v2131 = vadd.f32 0.0, %v2130
      %2132 = vmatmul.bf16.gmra.mxu0 %v2044
      %v2133 = vpop.f32.mrf.mxu0
      %v2134 = vadd.f32 0.0, %v2133
      %v2135 = vpop.f32.mrf.mxu0
      %v2136 = vadd.f32 0.0, %v2135
      %2137 = vdwg.mxu0
      %v2138 = vld [vmem:[%s4] sm:$0x1]
      %v2140 = vperm.slane %v2138, 0
      %v2142 = vmul.f32 %v2059, %v2140
      %v2143 = vmul.f32 %v2061, %v2140
      %v2144 = vmul.f32 %v2064, %v2140
      %v2145 = vmul.f32 %v2066, %v2140
      %v2146 = vmul.f32 %v2069, %v2140
      %v2147 = vmul.f32 %v2071, %v2140
      %v2148 = vmul.f32 %v2074, %v2140
      %v2149 = vmul.f32 %v2076, %v2140
      %v2150 = vmul.f32 %v2079, %v2140
      %v2151 = vmul.f32 %v2081, %v2140
      %v2152 = vmul.f32 %v2084, %v2140
      %v2153 = vmul.f32 %v2086, %v2140
      %v2154 = vmul.f32 %v2089, %v2140
      %v2155 = vmul.f32 %v2091, %v2140
      %v2156 = vmul.f32 %v2094, %v2140
      %v2157 = vmul.f32 %v2096, %v2140
      %v2158 = vmul.f32 %v2099, %v2140
      %v2159 = vmul.f32 %v2101, %v2140
      %v2160 = vmul.f32 %v2104, %v2140
      %v2161 = vmul.f32 %v2106, %v2140
      %v2162 = vmul.f32 %v2109, %v2140
      %v2163 = vmul.f32 %v2111, %v2140
      %v2164 = vmul.f32 %v2114, %v2140
      %v2165 = vmul.f32 %v2116, %v2140
      %v2166 = vmul.f32 %v2119, %v2140
      %v2167 = vmul.f32 %v2121, %v2140
      %v2168 = vmul.f32 %v2124, %v2140
      %v2169 = vmul.f32 %v2126, %v2140
      %v2170 = vmul.f32 %v2129, %v2140
      %v2171 = vmul.f32 %v2131, %v2140
      %v2172 = vmul.f32 %v2134, %v2140
      %v2173 = vmul.f32 %v2136, %v2140
      %v2174 = vld [vmem:[%s5] sm:$0x1]
      %v2176 = vperm.slane %v2174, 0
      %v2178 = vadd.f32 %v2142, %v2176
      %v2179 = vadd.f32 %v2143, %v2176
      %v2180 = vadd.f32 %v2144, %v2176
      %v2181 = vadd.f32 %v2145, %v2176
      %v2182 = vadd.f32 %v2146, %v2176
      %v2183 = vadd.f32 %v2147, %v2176
      %v2184 = vadd.f32 %v2148, %v2176
      %v2185 = vadd.f32 %v2149, %v2176
      %v2186 = vadd.f32 %v2150, %v2176
      %v2187 = vadd.f32 %v2151, %v2176
      %v2188 = vadd.f32 %v2152, %v2176
      %v2189 = vadd.f32 %v2153, %v2176
      %v2190 = vadd.f32 %v2154, %v2176
      %v2191 = vadd.f32 %v2155, %v2176
      %v2192 = vadd.f32 %v2156, %v2176
      %v2193 = vadd.f32 %v2157, %v2176
      %v2194 = vadd.f32 %v2158, %v2176
      %v2195 = vadd.f32 %v2159, %v2176
      %v2196 = vadd.f32 %v2160, %v2176
      %v2197 = vadd.f32 %v2161, %v2176
      %v2198 = vadd.f32 %v2162, %v2176
      %v2199 = vadd.f32 %v2163, %v2176
      %v2200 = vadd.f32 %v2164, %v2176
      %v2201 = vadd.f32 %v2165, %v2176
      %v2202 = vadd.f32 %v2166, %v2176
      %v2203 = vadd.f32 %v2167, %v2176
      %v2204 = vadd.f32 %v2168, %v2176
      %v2205 = vadd.f32 %v2169, %v2176
      %v2206 = vadd.f32 %v2170, %v2176
      %v2207 = vadd.f32 %v2171, %v2176
      %v2208 = vadd.f32 %v2172, %v2176
      %v2209 = vadd.f32 %v2173, %v2176
      %v2210 = vld [vmem:[%s382] sm:$0xff]
      %v2211 = vld [vmem:[%s382 + $0x8] sm:$0xff]
      %v2212 = vld [vmem:[%s382 + $0x10] sm:$0xff]
      %v2213 = vld [vmem:[%s382 + $0x18] sm:$0xff]
      %v2214 = vld [vmem:[%s382 + $0x20] sm:$0xff]
      %v2215 = vld [vmem:[%s382 + $0x28] sm:$0xff]
      %v2216 = vld [vmem:[%s382 + $0x30] sm:$0xff]
      %v2217 = vld [vmem:[%s382 + $0x38] sm:$0xff]
      %v2218 = vld [vmem:[%s382 + $0x40] sm:$0xff]
      %v2219 = vld [vmem:[%s382 + $0x48] sm:$0xff]
      %v2220 = vld [vmem:[%s382 + $0x50] sm:$0xff]
      %v2221 = vld [vmem:[%s382 + $0x58] sm:$0xff]
      %v2222 = vld [vmem:[%s382 + $0x60] sm:$0xff]
      %v2223 = vld [vmem:[%s382 + $0x68] sm:$0xff]
      %v2224 = vld [vmem:[%s382 + $0x70] sm:$0xff]
      %v2225 = vld [vmem:[%s382 + $0x78] sm:$0xff]
      %v2226 = vld [vmem:[%s382 + $0x80] sm:$0xff]
      %v2227 = vld [vmem:[%s382 + $0x88] sm:$0xff]
      %v2228 = vld [vmem:[%s382 + $0x90] sm:$0xff]
      %v2229 = vld [vmem:[%s382 + $0x98] sm:$0xff]
      %v2230 = vld [vmem:[%s382 + $0xa0] sm:$0xff]
      %v2231 = vld [vmem:[%s382 + $0xa8] sm:$0xff]
      %v2232 = vld [vmem:[%s382 + $0xb0] sm:$0xff]
      %v2233 = vld [vmem:[%s382 + $0xb8] sm:$0xff]
      %v2234 = vld [vmem:[%s382 + $0xc0] sm:$0xff]
      %v2235 = vld [vmem:[%s382 + $0xc8] sm:$0xff]
      %v2236 = vld [vmem:[%s382 + $0xd0] sm:$0xff]
      %v2237 = vld [vmem:[%s382 + $0xd8] sm:$0xff]
      %v2238 = vld [vmem:[%s382 + $0xe0] sm:$0xff]
      %v2239 = vld [vmem:[%s382 + $0xe8] sm:$0xff]
      %v2240 = vld [vmem:[%s382 + $0xf0] sm:$0xff]
      %v2241 = vld [vmem:[%s382 + $0xf8] sm:$0xff]
      %v2242 = vadd.f32 %v2178, %v2210
      %v2243 = vadd.f32 %v2179, %v2211
      %v2244 = vadd.f32 %v2180, %v2212
      %v2245 = vadd.f32 %v2181, %v2213
      %v2246 = vadd.f32 %v2182, %v2214
      %v2247 = vadd.f32 %v2183, %v2215
      %v2248 = vadd.f32 %v2184, %v2216
      %v2249 = vadd.f32 %v2185, %v2217
      %v2250 = vadd.f32 %v2186, %v2218
      %v2251 = vadd.f32 %v2187, %v2219
      %v2252 = vadd.f32 %v2188, %v2220
      %v2253 = vadd.f32 %v2189, %v2221
      %v2254 = vadd.f32 %v2190, %v2222
      %v2255 = vadd.f32 %v2191, %v2223
      %v2256 = vadd.f32 %v2192, %v2224
      %v2257 = vadd.f32 %v2193, %v2225
      %v2258 = vadd.f32 %v2194, %v2226
      %v2259 = vadd.f32 %v2195, %v2227
      %v2260 = vadd.f32 %v2196, %v2228
      %v2261 = vadd.f32 %v2197, %v2229
      %v2262 = vadd.f32 %v2198, %v2230
      %v2263 = vadd.f32 %v2199, %v2231
      %v2264 = vadd.f32 %v2200, %v2232
      %v2265 = vadd.f32 %v2201, %v2233
      %v2266 = vadd.f32 %v2202, %v2234
      %v2267 = vadd.f32 %v2203, %v2235
      %v2268 = vadd.f32 %v2204, %v2236
      %v2269 = vadd.f32 %v2205, %v2237
      %v2270 = vadd.f32 %v2206, %v2238
      %v2271 = vadd.f32 %v2207, %v2239
      %v2272 = vadd.f32 %v2208, %v2240
      %v2273 = vadd.f32 %v2209, %v2241
      %vm2274 = vcmask 130048
      %2275 = vst.msk [vmem:[%s392] sm:$0xff] %vm2274, %v2242
      %2276 = vst.msk [vmem:[%s392 + $0x8] sm:$0xff] %vm2274, %v2243
      %2277 = vst.msk [vmem:[%s392 + $0x10] sm:$0xff] %vm2274, %v2244
      %2278 = vst.msk [vmem:[%s392 + $0x18] sm:$0xff] %vm2274, %v2245
      %2279 = vst.msk [vmem:[%s392 + $0x20] sm:$0xff] %vm2274, %v2246
      %2280 = vst.msk [vmem:[%s392 + $0x28] sm:$0xff] %vm2274, %v2247
      %2281 = vst.msk [vmem:[%s392 + $0x30] sm:$0xff] %vm2274, %v2248
      %2282 = vst.msk [vmem:[%s392 + $0x38] sm:$0xff] %vm2274, %v2249
      %2283 = vst.msk [vmem:[%s392 + $0x40] sm:$0xff] %vm2274, %v2250
      %2284 = vst.msk [vmem:[%s392 + $0x48] sm:$0xff] %vm2274, %v2251
      %2285 = vst.msk [vmem:[%s392 + $0x50] sm:$0xff] %vm2274, %v2252
      %2286 = vst.msk [vmem:[%s392 + $0x58] sm:$0xff] %vm2274, %v2253
      %2287 = vst.msk [vmem:[%s392 + $0x60] sm:$0xff] %vm2274, %v2254
      %2288 = vst.msk [vmem:[%s392 + $0x68] sm:$0xff] %vm2274, %v2255
      %2289 = vst.msk [vmem:[%s392 + $0x70] sm:$0xff] %vm2274, %v2256
      %2290 = vst.msk [vmem:[%s392 + $0x78] sm:$0xff] %vm2274, %v2257
      %2291 = vst.msk [vmem:[%s392 + $0x80] sm:$0xff] %vm2274, %v2258
      %2292 = vst.msk [vmem:[%s392 + $0x88] sm:$0xff] %vm2274, %v2259
      %2293 = vst.msk [vmem:[%s392 + $0x90] sm:$0xff] %vm2274, %v2260
      %2294 = vst.msk [vmem:[%s392 + $0x98] sm:$0xff] %vm2274, %v2261
      %2295 = vst.msk [vmem:[%s392 + $0xa0] sm:$0xff] %vm2274, %v2262
      %2296 = vst.msk [vmem:[%s392 + $0xa8] sm:$0xff] %vm2274, %v2263
      %2297 = vst.msk [vmem:[%s392 + $0xb0] sm:$0xff] %vm2274, %v2264
      %2298 = vst.msk [vmem:[%s392 + $0xb8] sm:$0xff] %vm2274, %v2265
      %2299 = vst.msk [vmem:[%s392 + $0xc0] sm:$0xff] %vm2274, %v2266
      %2300 = vst.msk [vmem:[%s392 + $0xc8] sm:$0xff] %vm2274, %v2267
      %2301 = vst.msk [vmem:[%s392 + $0xd0] sm:$0xff] %vm2274, %v2268
      %2302 = vst.msk [vmem:[%s392 + $0xd8] sm:$0xff] %vm2274, %v2269
      %2303 = vst.msk [vmem:[%s392 + $0xe0] sm:$0xff] %vm2274, %v2270
      %2304 = vst.msk [vmem:[%s392 + $0xe8] sm:$0xff] %vm2274, %v2271
      %2305 = vst.msk [vmem:[%s392 + $0xf0] sm:$0xff] %vm2274, %v2272
      %2306 = vst.msk [vmem:[%s392 + $0xf8] sm:$0xff] %vm2274, %v2273
      %s2307 = smul.u32 32, %s23
      %p2308 = scmp.lt.s32.totalorder %s22, 1
      %s2309 = scalar_select %p2308, %s22, 1
      %p2310 = scmp.lt.s32.totalorder %s2307, 127
      %s2311 = scalar_select %p2310, %s2307, 127
      %s2312 = smul.addr %s2309, 128
      %s2313 = sadd.s32 %s2311, %s2312
      %s2314 = smul.addr %s2313, 8
      %s2315 = scalar_lea.vmem %s7, %s2314
      // Predicated region
      $region49: #{nonlocal_block_forward.3} parent=47 // pred_check
        %p2316 = pneg %p221
      $region50: #{nonlocal_block_forward.3} parent=47 // pred_check_branch
        %2318 = sbr.rel (%p2316) target = $region52
      $region51: #{nonlocal_block_forward.3} parent=47 // pred_region
        %s2319 = smul.u32 32, %s23
      $region52: #{nonlocal_block_forward.3} parent=47 // pred_fallthru
        _
    $region48: #{nonlocal_block_forward.3} parent=5 // pred_fallthru
      _
    %p2320 = scmp.le.s32.totalorder 2, %s13
    // Predicated region
    $region53: #{nonlocal_block_forward.3} parent=5 // pred_check
      %p2321 = pneg %p2320
    $region54: #{nonlocal_block_forward.3} parent=5 // pred_check_branch
      %2323 = sbr.rel (%p2321) target = $region56
    $region55: #{nonlocal_block_forward.3} parent=5 // pred_region
      %s2324 = ssub.s32 %s13, 2
      // Predicated region
      $region57: #{nonlocal_block_forward.3} parent=55 // pred_check
        %p2325 = pneg %p227
      $region58: #{nonlocal_block_forward.3} parent=55 // pred_check_branch
        %2327 = sbr.rel (%p2325) target = $region60
      $region59: #{nonlocal_block_forward.3} parent=55 // pred_region
        %s2328 = smul.u32 32, %s25
        %p2329 = scmp.lt.s32.totalorder %s24, 1
        %s2330 = scalar_select %p2329, %s24, 1
        %p2331 = scmp.lt.s32.totalorder %s2328, 127
        %s2332 = scalar_select %p2331, %s2328, 127
        %s2333 = smul.addr %s2330, 128
        %s2334 = sadd.s32 %s2332, %s2333
        %s2335 = smul.addr %s2334, 8
        %s2336 = scalar_lea.vmem %s7, %s2335
      $region60: #{nonlocal_block_forward.3} parent=55 // pred_fallthru
        _
    $region56: #{nonlocal_block_forward.3} parent=5 // pred_fallthru
      _
  $region6: #{nonlocal_block_forward.3} parent=0 // loop_footer
    %s17 = sadd.s32 1, %s13
  $region7: #{nonlocal_block_forward.3} parent=0 // loop_footer_branch
    %12 = sbr.rel target = $region3
  $region8: #{nonlocal_block_forward.3} parent=0 // loop_exit
    _

// kernel: nonlocal_block_forward.2
$region0: #{nonlocal_block_forward.2}
  #allocation0 [shape = 'u32[]', space=smem, size = 0x4, offset = 0x4, fixed_abs, tag = 'smem constant byte address 0x4 - core index']
  #allocation1 [shape = 'u32[72,128]{1,0:T(1,128)}', space=vmem, size = 0x9000, scoped, tag = 'internal scratch']
  #allocation2 [shape = 'f32[256,8]{1,0:T(8,128)}', space=vmem, size = 0x20000, scoped, tag = 'scratch operand']
  #allocation3 [shape = 'f32[256,8]{1,0:T(8,128)}', space=vmem, size = 0x20000, scoped, tag = 'scratch operand']
  %s0 = inlined_call_operand.vmem [shape: f32[2,1024,16], index: 0, kind: input, shape index: {}]
  %s1 = inlined_call_operand.vmem [shape: bf16[16,8], index: 1, kind: input, shape index: {}]
  %s2 = inlined_call_operand.vmem [shape: bf16[16,8], index: 2, kind: input, shape index: {}]
  %s3 = inlined_call_operand.vmem [shape: bf16[16,8], index: 3, kind: input, shape index: {}]
  %s4 = inlined_call_operand.vmem [shape: f32[1,8], index: 4, kind: input, shape index: {}]
  %s5 = inlined_call_operand.vmem [shape: f32[1,8], index: 5, kind: input, shape index: {}]
  %s6 = inlined_call_operand.vmem [shape: f32[1,8], index: 6, kind: input, shape index: {}]
  %s7 = inlined_call_operand.vmem [shape: bf16[2,1024,8], index: 7, kind: output, shape index: {0}]
  %s8 = inlined_call_operand.vmem [shape: bf16[2,256,8], index: 8, kind: output, shape index: {1}]
  %s9 = inlined_call_operand.vmem [shape: bf16[2,256,8], index: 9, kind: output, shape index: {2}]
  %10 = xla_tuple %s7, %s8, %s9
  %s11 = sld [smem:[#allocation0]]
  $region77: #{nonlocal_block_forward.2} parent=0
    _
  %s13 = ssub.s32 1, %s11
  %s14 = scalar_select 0, %s13, %s11
  loop: start=0, step=1, limit=6
  $region2: #{nonlocal_block_forward.2} parent=0 // loop_pre_header
    _
  $region3: #{nonlocal_block_forward.2} parent=0 // loop_header
    %s16 = sphi 0, %s20
    %p17 = scmp.ge.s32.totalorder %s16, 6
    %s23 = sphi 0, %s35
    %s24 = sphi 0, %s31
    %s25 = sphi 0, %s23
    %s26 = sphi 0, %s24
    %s27 = sphi 0, %s25
    %s28 = sphi 0, %s26
    %s40 = sphi 0, %s42
    %s43 = sphi 0, %s40
    %s44 = sphi 0, %s43
    %s60 = sphi 0, %s44
    %s64 = sphi 0, %s64
    %s66 = sphi 0, %s64
    %s67 = sphi 0, %s66
    %s81 = sphi 0, %s67
    %s85 = sphi 0, %s85
    %s87 = sphi 0, %s85
    %s88 = sphi 0, %s87
    %s102 = sphi 0, %s88
    %s106 = sphi 0, %s106
    %s108 = sphi 0, %s106
    %s109 = sphi 0, %s108
    %s123 = sphi 0, %s109
    %s127 = sphi 0, %s127
    %s129 = sphi 0, %s127
    %s130 = sphi 0, %s129
    %s144 = sphi 0, %s130
    %s148 = sphi 0, %s148
    %s150 = sphi 0, %s148
    %s151 = sphi 0, %s150
    %s165 = sphi 0, %s151
    %s169 = sphi 0, %s169
    %s171 = sphi 0, %s169
    %s172 = sphi 0, %s171
    %s186 = sphi 0, %s172
    %s194 = sphi 0, %s196
    %s197 = sphi 0, %s194
    %s198 = sphi 0, %s197
    %s214 = sphi 0, %s198
    %s222 = sphi 0, %s224
    %s225 = sphi 0, %s222
    %s226 = sphi 0, %s225
    %s242 = sphi 0, %s226
    %s250 = sphi 0, %s252
    %s253 = sphi 0, %s250
    %s254 = sphi 0, %s253
    %s270 = sphi 0, %s254
  $region4: #{nonlocal_block_forward.2} parent=0 // loop_header_branch
    %19 = sbr.rel (%p17) target = $region8
  $region5: #{nonlocal_block_forward.2} parent=0 // loop_body
    %s21 = ssub.s32 %s16, 1
    %s22 = ssub.s32 %s16, 2
    %s29 = sadd.s32 1, %s24
    %p30 = scmp.ge.s32.totalorder %s29, 2
    %s31 = scalar_select %p30, 0, %s29
    %s32 = sadd.s32 1, %s23
    %s33 = scalar_select %p30, %s32, %s23
    %p34 = scmp.ge.s32.totalorder %s33, 2
    %s35 = scalar_select %p34, 0, %s33
    %s36 = ssub.s32 %s23, %s35
    %s37 = ssub.s32 %s24, %s31
    %s38 = sor.u32 %s36, %s37
    %p39 = scmp.eq.s32.totalorder %s38, 0
    %s41 = sadd.s32 %s40, 1
    %s42 = scalar_select %p39, %s40, %s41
    %p45 = pneg %p39
    %p46 = scmp.eq.s32.totalorder %s16, 3
    %p47 = por %p45, %p46
    %p48 = scmp.ne.s32.totalorder %s40, %s43
    %p49 = scmp.eq.s32.totalorder %s16, 0
    %p50 = por %p48, %p49
    %p51 = scmp.ne.s32.totalorder %s40, %s43
    %p52 = scmp.eq.s32.totalorder %s21, 3
    %p53 = por %p51, %p52
    %p54 = scmp.ne.s32.totalorder %s43, %s44
    %p55 = scmp.eq.s32.totalorder %s21, 0
    %p56 = por %p54, %p55
    %p57 = scmp.ne.s32.totalorder %s43, %s44
    %p58 = scmp.eq.s32.totalorder %s22, 3
    %p59 = por %p57, %p58
    %p61 = scmp.ne.s32.totalorder %s44, %s60
    %p62 = scmp.eq.s32.totalorder %s22, 0
    %p63 = por %p61, %p62
    %s65 = sadd.s32 %s64, 1
    %p68 = scmp.eq.s32.totalorder %s16, 3
    %p69 = scmp.ne.s32.totalorder %s64, %s66
    %p70 = scmp.eq.s32.totalorder %s16, 0
    %p71 = por %p69, %p70
    %p72 = scmp.ne.s32.totalorder %s64, %s66
    %p73 = scmp.eq.s32.totalorder %s21, 3
    %p74 = por %p72, %p73
    %p75 = scmp.ne.s32.totalorder %s66, %s67
    %p76 = scmp.eq.s32.totalorder %s21, 0
    %p77 = por %p75, %p76
    %p78 = scmp.ne.s32.totalorder %s66, %s67
    %p79 = scmp.eq.s32.totalorder %s22, 3
    %p80 = por %p78, %p79
    %p82 = scmp.ne.s32.totalorder %s67, %s81
    %p83 = scmp.eq.s32.totalorder %s22, 0
    %p84 = por %p82, %p83
    %s86 = sadd.s32 %s85, 1
    %p89 = scmp.eq.s32.totalorder %s16, 3
    %p90 = scmp.ne.s32.totalorder %s85, %s87
    %p91 = scmp.eq.s32.totalorder %s16, 0
    %p92 = por %p90, %p91
    %p93 = scmp.ne.s32.totalorder %s85, %s87
    %p94 = scmp.eq.s32.totalorder %s21, 3
    %p95 = por %p93, %p94
    %p96 = scmp.ne.s32.totalorder %s87, %s88
    %p97 = scmp.eq.s32.totalorder %s21, 0
    %p98 = por %p96, %p97
    %p99 = scmp.ne.s32.totalorder %s87, %s88
    %p100 = scmp.eq.s32.totalorder %s22, 3
    %p101 = por %p99, %p100
    %p103 = scmp.ne.s32.totalorder %s88, %s102
    %p104 = scmp.eq.s32.totalorder %s22, 0
    %p105 = por %p103, %p104
    %s107 = sadd.s32 %s106, 1
    %p110 = scmp.eq.s32.totalorder %s16, 3
    %p111 = scmp.ne.s32.totalorder %s106, %s108
    %p112 = scmp.eq.s32.totalorder %s16, 0
    %p113 = por %p111, %p112
    %p114 = scmp.ne.s32.totalorder %s106, %s108
    %p115 = scmp.eq.s32.totalorder %s21, 3
    %p116 = por %p114, %p115
    %p117 = scmp.ne.s32.totalorder %s108, %s109
    %p118 = scmp.eq.s32.totalorder %s21, 0
    %p119 = por %p117, %p118
    %p120 = scmp.ne.s32.totalorder %s108, %s109
    %p121 = scmp.eq.s32.totalorder %s22, 3
    %p122 = por %p120, %p121
    %p124 = scmp.ne.s32.totalorder %s109, %s123
    %p125 = scmp.eq.s32.totalorder %s22, 0
    %p126 = por %p124, %p125
    %s128 = sadd.s32 %s127, 1
    %p131 = scmp.eq.s32.totalorder %s16, 3
    %p132 = scmp.ne.s32.totalorder %s127, %s129
    %p133 = scmp.eq.s32.totalorder %s16, 0
    %p134 = por %p132, %p133
    %p135 = scmp.ne.s32.totalorder %s127, %s129
    %p136 = scmp.eq.s32.totalorder %s21, 3
    %p137 = por %p135, %p136
    %p138 = scmp.ne.s32.totalorder %s129, %s130
    %p139 = scmp.eq.s32.totalorder %s21, 0
    %p140 = por %p138, %p139
    %p141 = scmp.ne.s32.totalorder %s129, %s130
    %p142 = scmp.eq.s32.totalorder %s22, 3
    %p143 = por %p141, %p142
    %p145 = scmp.ne.s32.totalorder %s130, %s144
    %p146 = scmp.eq.s32.totalorder %s22, 0
    %p147 = por %p145, %p146
    %s149 = sadd.s32 %s148, 1
    %p152 = scmp.eq.s32.totalorder %s16, 3
    %p153 = scmp.ne.s32.totalorder %s148, %s150
    %p154 = scmp.eq.s32.totalorder %s16, 0
    %p155 = por %p153, %p154
    %p156 = scmp.ne.s32.totalorder %s148, %s150
    %p157 = scmp.eq.s32.totalorder %s21, 3
    %p158 = por %p156, %p157
    %p159 = scmp.ne.s32.totalorder %s150, %s151
    %p160 = scmp.eq.s32.totalorder %s21, 0
    %p161 = por %p159, %p160
    %p162 = scmp.ne.s32.totalorder %s150, %s151
    %p163 = scmp.eq.s32.totalorder %s22, 3
    %p164 = por %p162, %p163
    %p166 = scmp.ne.s32.totalorder %s151, %s165
    %p167 = scmp.eq.s32.totalorder %s22, 0
    %p168 = por %p166, %p167
    %s170 = sadd.s32 %s169, 1
    %p173 = scmp.eq.s32.totalorder %s16, 3
    %p174 = scmp.ne.s32.totalorder %s169, %s171
    %p175 = scmp.eq.s32.totalorder %s16, 0
    %p176 = por %p174, %p175
    %p177 = scmp.ne.s32.totalorder %s169, %s171
    %p178 = scmp.eq.s32.totalorder %s21, 3
    %p179 = por %p177, %p178
    %p180 = scmp.ne.s32.totalorder %s171, %s172
    %p181 = scmp.eq.s32.totalorder %s21, 0
    %p182 = por %p180, %p181
    %p183 = scmp.ne.s32.totalorder %s171, %s172
    %p184 = scmp.eq.s32.totalorder %s22, 3
    %p185 = por %p183, %p184
    %p187 = scmp.ne.s32.totalorder %s172, %s186
    %p188 = scmp.eq.s32.totalorder %s22, 0
    %p189 = por %p187, %p188
    %s190 = ssub.s32 %s23, %s35
    %s191 = ssub.s32 %s24, %s31
    %s192 = sor.u32 %s190, %s191
    %p193 = scmp.eq.s32.totalorder %s192, 0
    %s195 = sadd.s32 %s194, 1
    %s196 = scalar_select %p193, %s194, %s195
    %p199 = pneg %p193
    %p200 = scmp.eq.s32.totalorder %s16, 3
    %p201 = por %p199, %p200
    %p202 = scmp.ne.s32.totalorder %s194, %s197
    %p203 = scmp.eq.s32.totalorder %s16, 0
    %p204 = por %p202, %p203
    %p205 = scmp.ne.s32.totalorder %s194, %s197
    %p206 = scmp.eq.s32.totalorder %s21, 3
    %p207 = por %p205, %p206
    %p208 = scmp.ne.s32.totalorder %s197, %s198
    %p209 = scmp.eq.s32.totalorder %s21, 0
    %p210 = por %p208, %p209
    %p211 = scmp.ne.s32.totalorder %s197, %s198
    %p212 = scmp.eq.s32.totalorder %s22, 3
    %p213 = por %p211, %p212
    %p215 = scmp.ne.s32.totalorder %s198, %s214
    %p216 = scmp.eq.s32.totalorder %s22, 0
    %p217 = por %p215, %p216
    %s218 = ssub.s32 %s23, %s35
    %s219 = ssub.s32 %s24, %s31
    %s220 = sor.u32 %s218, %s219
    %p221 = scmp.eq.s32.totalorder %s220, 0
    %s223 = sadd.s32 %s222, 1
    %s224 = scalar_select %p221, %s222, %s223
    %p227 = pneg %p221
    %p228 = scmp.eq.s32.totalorder %s16, 3
    %p229 = por %p227, %p228
    %p230 = scmp.ne.s32.totalorder %s222, %s225
    %p231 = scmp.eq.s32.totalorder %s16, 0
    %p232 = por %p230, %p231
    %p233 = scmp.ne.s32.totalorder %s222, %s225
    %p234 = scmp.eq.s32.totalorder %s21, 3
    %p235 = por %p233, %p234
    %p236 = scmp.ne.s32.totalorder %s225, %s226
    %p237 = scmp.eq.s32.totalorder %s21, 0
    %p238 = por %p236, %p237
    %p239 = scmp.ne.s32.totalorder %s225, %s226
    %p240 = scmp.eq.s32.totalorder %s22, 3
    %p241 = por %p239, %p240
    %p243 = scmp.ne.s32.totalorder %s226, %s242
    %p244 = scmp.eq.s32.totalorder %s22, 0
    %p245 = por %p243, %p244
    %s246 = ssub.s32 %s23, %s35
    %s247 = ssub.s32 %s24, %s31
    %s248 = sor.u32 %s246, %s247
    %p249 = scmp.eq.s32.totalorder %s248, 0
    %s251 = sadd.s32 %s250, 1
    %s252 = scalar_select %p249, %s250, %s251
    %p255 = pneg %p249
    %p256 = scmp.eq.s32.totalorder %s16, 3
    %p257 = por %p255, %p256
    %p258 = scmp.ne.s32.totalorder %s250, %s253
    %p259 = scmp.eq.s32.totalorder %s16, 0
    %p260 = por %p258, %p259
    %p261 = scmp.ne.s32.totalorder %s250, %s253
    %p262 = scmp.eq.s32.totalorder %s21, 3
    %p263 = por %p261, %p262
    %p264 = scmp.ne.s32.totalorder %s253, %s254
    %p265 = scmp.eq.s32.totalorder %s21, 0
    %p266 = por %p264, %p265
    %p267 = scmp.ne.s32.totalorder %s253, %s254
    %p268 = scmp.eq.s32.totalorder %s22, 3
    %p269 = por %p267, %p268
    %p271 = scmp.ne.s32.totalorder %s254, %s270
    %p272 = scmp.eq.s32.totalorder %s22, 0
    %p273 = por %p271, %p272
    %p274 = scmp.le.s32.totalorder 1, %s16
    %p275 = scmp.lt.s32.totalorder %s16, 5
    %p276 = pnand %p274, %p275
    %p277 = pneg %p276
    // Predicated region
    $region9: #{nonlocal_block_forward.2} parent=5 // pred_check
      _
    $region10: #{nonlocal_block_forward.2} parent=5 // pred_check_branch
      %279 = sbr.rel (%p276) target = $region12
    $region11: #{nonlocal_block_forward.2} parent=5 // pred_region
      %s280 = ssub.s32 %s16, 1
      // Predicated region
      $region13: #{nonlocal_block_forward.2} parent=11 // pred_check
        %p281 = pneg %p77
      $region14: #{nonlocal_block_forward.2} parent=11 // pred_check_branch
        %283 = sbr.rel (%p281) target = $region16
      $region15: #{nonlocal_block_forward.2} parent=11 // pred_region
        _
      $region16: #{nonlocal_block_forward.2} parent=11 // pred_fallthru
        _
      // Predicated region
      $region17: #{nonlocal_block_forward.2} parent=11 // pred_check
        %p284 = pneg %p98
      $region18: #{nonlocal_block_forward.2} parent=11 // pred_check_branch
        %286 = sbr.rel (%p284) target = $region20
      $region19: #{nonlocal_block_forward.2} parent=11 // pred_region
        _
      $region20: #{nonlocal_block_forward.2} parent=11 // pred_fallthru
        _
      // Predicated region
      $region21: #{nonlocal_block_forward.2} parent=11 // pred_check
        %p287 = pneg %p119
      $region22: #{nonlocal_block_forward.2} parent=11 // pred_check_branch
        %289 = sbr.rel (%p287) target = $region24
      $region23: #{nonlocal_block_forward.2} parent=11 // pred_region
        _
      $region24: #{nonlocal_block_forward.2} parent=11 // pred_fallthru
        _
      // Predicated region
      $region25: #{nonlocal_block_forward.2} parent=11 // pred_check
        %p290 = pneg %p140
      $region26: #{nonlocal_block_forward.2} parent=11 // pred_check_branch
        %292 = sbr.rel (%p290) target = $region28
      $region27: #{nonlocal_block_forward.2} parent=11 // pred_region
        _
      $region28: #{nonlocal_block_forward.2} parent=11 // pred_fallthru
        _
      // Predicated region
      $region29: #{nonlocal_block_forward.2} parent=11 // pred_check
        %p293 = pneg %p161
      $region30: #{nonlocal_block_forward.2} parent=11 // pred_check_branch
        %295 = sbr.rel (%p293) target = $region32
      $region31: #{nonlocal_block_forward.2} parent=11 // pred_region
        _
      $region32: #{nonlocal_block_forward.2} parent=11 // pred_fallthru
        _
      // Predicated region
      $region33: #{nonlocal_block_forward.2} parent=11 // pred_check
        %p296 = pneg %p182
      $region34: #{nonlocal_block_forward.2} parent=11 // pred_check_branch
        %298 = sbr.rel (%p296) target = $region36
      $region35: #{nonlocal_block_forward.2} parent=11 // pred_region
        _
      $region36: #{nonlocal_block_forward.2} parent=11 // pred_fallthru
        _
    $region12: #{nonlocal_block_forward.2} parent=5 // pred_fallthru
      _
    %p299 = scmp.lt.s32.totalorder %s16, 4
    // Predicated region
    $region37: #{nonlocal_block_forward.2} parent=5 // pred_check
      %p300 = pneg %p299
    $region38: #{nonlocal_block_forward.2} parent=5 // pred_check_branch
      %302 = sbr.rel (%p300) target = $region40
    $region39: #{nonlocal_block_forward.2} parent=5 // pred_region
      // Predicated region
      $region41: #{nonlocal_block_forward.2} parent=39 // pred_check
        %p303 = pneg %p50
      $region42: #{nonlocal_block_forward.2} parent=39 // pred_check_branch
        %305 = sbr.rel (%p303) target = $region44
      $region43: #{nonlocal_block_forward.2} parent=39 // pred_region
        %s306 = smul.u32 64, %s24
        %p307 = scmp.lt.s32.totalorder %s23, 1
        %s308 = scalar_select %p307, %s23, 1
        %p309 = scmp.lt.s32.totalorder %s306, 127
        %s310 = scalar_select %p309, %s306, 127
        %s311 = smul.addr %s308, 128
        %s312 = sadd.s32 %s310, %s311
        %s313 = smul.addr %s312, 8
        %s314 = scalar_lea.vmem %s0, %s313
        %s315 = smul.u32 64, %s24
      $region44: #{nonlocal_block_forward.2} parent=39 // pred_fallthru
        _
    $region40: #{nonlocal_block_forward.2} parent=5 // pred_fallthru
      _
    %p316 = scmp.le.s32.totalorder 1, %s16
    %p317 = scmp.lt.s32.totalorder %s16, 5
    %p318 = pnand %p316, %p317
    %p319 = pneg %p318
    // Predicated region
    $region45: #{nonlocal_block_forward.2} parent=5 // pred_check
      _
    $region46: #{nonlocal_block_forward.2} parent=5 // pred_check_branch
      %321 = sbr.rel (%p318) target = $region48
    $region47: #{nonlocal_block_forward.2} parent=5 // pred_region
      %s322 = ssub.s32 %s16, 1
      %s323 = smul.u32 64, %s26
      %p324 = scmp.lt.s32.totalorder %s25, 1
      %s325 = scalar_select %p324, %s25, 1
      %p326 = scmp.lt.s32.totalorder %s323, 127
      %s327 = scalar_select %p326, %s323, 127
      %s328 = smul.addr %s325, 128
      %s329 = sadd.s32 %s327, %s328
      %s330 = smul.addr %s329, 8
      %s331 = scalar_lea.vmem %s0, %s330
      %p332 = pneg %p56
      %p333 = pneg %p53
      %p334 = pneg %p77
      %p335 = pneg %p74
      %p336 = pneg %p98
      %p337 = pneg %p95
      %p338 = pneg %p119
      %p339 = pneg %p116
      %p340 = pneg %p140
      %p341 = pneg %p137
      %p342 = pneg %p161
      %p343 = pneg %p158
      %p344 = pneg %p182
      %p345 = pneg %p179
      %p346 = pneg %p210
      %p347 = pneg %p207
      %s348 = smul.u32 64, %s26
      %p349 = scmp.lt.s32.totalorder %s25, 1
      %s350 = scalar_select %p349, %s25, 1
      %p351 = scmp.lt.s32.totalorder %s348, 127
      %s352 = scalar_select %p351, %s348, 127
      %s353 = smul.addr %s350, 128
      %s354 = sadd.s32 %s352, %s353
      %s355 = smul.addr %s354, 4
      %s356 = scalar_lea.vmem %s7, %s355
      %p357 = pneg %p238
      %p358 = pneg %p235
      %s359 = smul.u32 16, %s26
      %p360 = scmp.lt.s32.totalorder %s25, 1
      %s361 = scalar_select %p360, %s25, 1
      %p362 = scmp.lt.s32.totalorder %s359, 31
      %s363 = scalar_select %p362, %s359, 31
      %s364 = smul.addr %s361, 32
      %s365 = sadd.s32 %s363, %s364
      %s366 = smul.addr %s365, 4
      %s367 = scalar_lea.vmem %s8, %s366
      %p368 = pneg %p266
      %p369 = pneg %p263
      %s370 = smul.u32 16, %s26
      %p371 = scmp.lt.s32.totalorder %s25, 1
      %s372 = scalar_select %p371, %s25, 1
      %p373 = scmp.lt.s32.totalorder %s370, 31
      %s374 = scalar_select %p373, %s370, 31
      %s375 = smul.addr %s372, 32
      %s376 = sadd.s32 %s374, %s375
      %s377 = smul.addr %s376, 4
      %s378 = scalar_lea.vmem %s9, %s377
      %s379 = smul.u32 64, %s26
      %p380 = scmp.lt.s32.totalorder %s25, 1
      %s381 = scalar_select %p380, %s25, 1
      %p382 = scmp.lt.s32.totalorder %s379, 127
      %s383 = scalar_select %p382, %s379, 127
      %s384 = smul.addr %s381, 128
      %s385 = sadd.s32 %s383, %s384
      %s386 = smul.addr %s385, 8
      %s387 = scalar_lea.vmem %s0, %s386
      %s388 = smul.u32 64, %s26
      %s389 = smul.u32 64, %s26
      %p390 = scmp.lt.s32.totalorder %s25, 1
      %s391 = scalar_select %p390, %s25, 1
      %p392 = scmp.lt.s32.totalorder %s389, 127
      %s393 = scalar_select %p392, %s389, 127
      %s394 = smul.addr %s391, 128
      %s395 = sadd.s32 %s393, %s394
      %s396 = smul.addr %s395, 4
      %s397 = scalar_lea.vmem %s7, %s396
      %s398 = smul.u32 64, %s26
      %s399 = smul.u32 16, %s26
      %p400 = scmp.lt.s32.totalorder %s25, 1
      %s401 = scalar_select %p400, %s25, 1
      %p402 = scmp.lt.s32.totalorder %s399, 31
      %s403 = scalar_select %p402, %s399, 31
      %s404 = smul.addr %s401, 32
      %s405 = sadd.s32 %s403, %s404
      %s406 = smul.addr %s405, 4
      %s407 = scalar_lea.vmem %s8, %s406
      %s408 = smul.u32 16, %s26
      %s409 = smul.u32 16, %s26
      %p410 = scmp.lt.s32.totalorder %s25, 1
      %s411 = scalar_select %p410, %s25, 1
      %p412 = scmp.lt.s32.totalorder %s409, 31
      %s413 = scalar_select %p412, %s409, 31
      %s414 = smul.addr %s411, 32
      %s415 = sadd.s32 %s413, %s414
      %s416 = smul.addr %s415, 4
      %s417 = scalar_lea.vmem %s9, %s416
      %s418 = smul.u32 16, %s26
      %v420 = vld [vmem:[%s387] sm:$0xff]
      %v421 = vld [vmem:[%s387 + $0x8] sm:$0xff]
      %v422 = vld [vmem:[%s387 + $0x10] sm:$0xff]
      %v423 = vld [vmem:[%s387 + $0x18] sm:$0xff]
      %v424 = vld [vmem:[%s387 + $0x20] sm:$0xff]
      %v425 = vld [vmem:[%s387 + $0x28] sm:$0xff]
      %v426 = vld [vmem:[%s387 + $0x30] sm:$0xff]
      %v427 = vld [vmem:[%s387 + $0x38] sm:$0xff]
      %v428 = vld [vmem:[%s387 + $0x40] sm:$0xff]
      %v429 = vld [vmem:[%s387 + $0x48] sm:$0xff]
      %v430 = vld [vmem:[%s387 + $0x50] sm:$0xff]
      %v431 = vld [vmem:[%s387 + $0x58] sm:$0xff]
      %v432 = vld [vmem:[%s387 + $0x60] sm:$0xff]
      %v433 = vld [vmem:[%s387 + $0x68] sm:$0xff]
      %v434 = vld [vmem:[%s387 + $0x70] sm:$0xff]
      %v435 = vld [vmem:[%s387 + $0x78] sm:$0xff]
      %v436 = vld [vmem:[%s387 + $0x80] sm:$0xff]
      %v437 = vld [vmem:[%s387 + $0x88] sm:$0xff]
      %v438 = vld [vmem:[%s387 + $0x90] sm:$0xff]
      %v439 = vld [vmem:[%s387 + $0x98] sm:$0xff]
      %v440 = vld [vmem:[%s387 + $0xa0] sm:$0xff]
      %v441 = vld [vmem:[%s387 + $0xa8] sm:$0xff]
      %v442 = vld [vmem:[%s387 + $0xb0] sm:$0xff]
      %v443 = vld [vmem:[%s387 + $0xb8] sm:$0xff]
      %v444 = vld [vmem:[%s387 + $0xc0] sm:$0xff]
      %v445 = vld [vmem:[%s387 + $0xc8] sm:$0xff]
      %v446 = vld [vmem:[%s387 + $0xd0] sm:$0xff]
      %v447 = vld [vmem:[%s387 + $0xd8] sm:$0xff]
      %v448 = vld [vmem:[%s387 + $0xe0] sm:$0xff]
      %v449 = vld [vmem:[%s387 + $0xe8] sm:$0xff]
      %v450 = vld [vmem:[%s387 + $0xf0] sm:$0xff]
      %v451 = vld [vmem:[%s387 + $0xf8] sm:$0xff]
      %v452 = vld [vmem:[%s387 + $0x100] sm:$0xff]
      %v453 = vld [vmem:[%s387 + $0x108] sm:$0xff]
      %v454 = vld [vmem:[%s387 + $0x110] sm:$0xff]
      %v455 = vld [vmem:[%s387 + $0x118] sm:$0xff]
      %v456 = vld [vmem:[%s387 + $0x120] sm:$0xff]
      %v457 = vld [vmem:[%s387 + $0x128] sm:$0xff]
      %v458 = vld [vmem:[%s387 + $0x130] sm:$0xff]
      %v459 = vld [vmem:[%s387 + $0x138] sm:$0xff]
      %v460 = vld [vmem:[%s387 + $0x140] sm:$0xff]
      %v461 = vld [vmem:[%s387 + $0x148] sm:$0xff]
      %v462 = vld [vmem:[%s387 + $0x150] sm:$0xff]
      %v463 = vld [vmem:[%s387 + $0x158] sm:$0xff]
      %v464 = vld [vmem:[%s387 + $0x160] sm:$0xff]
      %v465 = vld [vmem:[%s387 + $0x168] sm:$0xff]
      %v466 = vld [vmem:[%s387 + $0x170] sm:$0xff]
      %v467 = vld [vmem:[%s387 + $0x178] sm:$0xff]
      %v468 = vld [vmem:[%s387 + $0x180] sm:$0xff]
      %v469 = vld [vmem:[%s387 + $0x188] sm:$0xff]
      %v470 = vld [vmem:[%s387 + $0x190] sm:$0xff]
      %v471 = vld [vmem:[%s387 + $0x198] sm:$0xff]
      %v472 = vld [vmem:[%s387 + $0x1a0] sm:$0xff]
      %v473 = vld [vmem:[%s387 + $0x1a8] sm:$0xff]
      %v474 = vld [vmem:[%s387 + $0x1b0] sm:$0xff]
      %v475 = vld [vmem:[%s387 + $0x1b8] sm:$0xff]
      %v476 = vld [vmem:[%s387 + $0x1c0] sm:$0xff]
      %v477 = vld [vmem:[%s387 + $0x1c8] sm:$0xff]
      %v478 = vld [vmem:[%s387 + $0x1d0] sm:$0xff]
      %v479 = vld [vmem:[%s387 + $0x1d8] sm:$0xff]
      %v480 = vld [vmem:[%s387 + $0x1e0] sm:$0xff]
      %v481 = vld [vmem:[%s387 + $0x1e8] sm:$0xff]
      %v482 = vld [vmem:[%s387 + $0x1f0] sm:$0xff]
      %v483 = vld [vmem:[%s387 + $0x1f8] sm:$0xff]
      %v484 = vpack.c.bf16 %v421, %v420
      %v485 = vpack.c.bf16 %v423, %v422
      %v486 = vpack.c.bf16 %v425, %v424
      %v487 = vpack.c.bf16 %v427, %v426
      %v488 = vpack.c.bf16 %v429, %v428
      %v489 = vpack.c.bf16 %v431, %v430
      %v490 = vpack.c.bf16 %v433, %v432
      %v491 = vpack.c.bf16 %v435, %v434
      %v492 = vpack.c.bf16 %v437, %v436
      %v493 = vpack.c.bf16 %v439, %v438
      %v494 = vpack.c.bf16 %v441, %v440
      %v495 = vpack.c.bf16 %v443, %v442
      %v496 = vpack.c.bf16 %v445, %v444
      %v497 = vpack.c.bf16 %v447, %v446
      %v498 = vpack.c.bf16 %v449, %v448
      %v499 = vpack.c.bf16 %v451, %v450
      %v500 = vpack.c.bf16 %v453, %v452
      %v501 = vpack.c.bf16 %v455, %v454
      %v502 = vpack.c.bf16 %v457, %v456
      %v503 = vpack.c.bf16 %v459, %v458
      %v504 = vpack.c.bf16 %v461, %v460
      %v505 = vpack.c.bf16 %v463, %v462
      %v506 = vpack.c.bf16 %v465, %v464
      %v507 = vpack.c.bf16 %v467, %v466
      %v508 = vpack.c.bf16 %v469, %v468
      %v509 = vpack.c.bf16 %v471, %v470
      %v510 = vpack.c.bf16 %v473, %v472
      %v511 = vpack.c.bf16 %v475, %v474
      %v512 = vpack.c.bf16 %v477, %v476
      %v513 = vpack.c.bf16 %v479, %v478
      %v514 = vpack.c.bf16 %v481, %v480
      %v515 = vpack.c.bf16 %v483, %v482
      %v516 = vld [vmem:[%s1] sm:$0xf]
      %v517 = vld [vmem:[%s1 + $0x4] sm:$0xf]
      %v518 = vld [vmem:[%s4] sm:$0x1]
      %v520 = vperm.slane %v518, 0
      %v524 = vunpack.c.l.b16 %v516
      %v525 = vunpack.c.l.b16 %v517
      %v526 = vpack.c.b16 %v525, %v524
      %vm528 = vcmask 130048
      %v530 = vsel %vm528, %v484, 0
      %v533 = vsel %vm528, %v485, 0
      %v536 = vsel %vm528, %v486, 0
      %v539 = vsel %vm528, %v487, 0
      %v542 = vsel %vm528, %v488, 0
      %v545 = vsel %vm528, %v489, 0
      %v548 = vsel %vm528, %v490, 0
      %v551 = vsel %vm528, %v491, 0
      %v554 = vsel %vm528, %v492, 0
      %v557 = vsel %vm528, %v493, 0
      %v560 = vsel %vm528, %v494, 0
      %v563 = vsel %vm528, %v495, 0
      %v566 = vsel %vm528, %v496, 0
      %v569 = vsel %vm528, %v497, 0
      %v572 = vsel %vm528, %v498, 0
      %v575 = vsel %vm528, %v499, 0
      %v578 = vsel %vm528, %v500, 0
      %v581 = vsel %vm528, %v501, 0
      %v584 = vsel %vm528, %v502, 0
      %v587 = vsel %vm528, %v503, 0
      %v590 = vsel %vm528, %v504, 0
      %v593 = vsel %vm528, %v505, 0
      %v596 = vsel %vm528, %v506, 0
      %v599 = vsel %vm528, %v507, 0
      %v602 = vsel %vm528, %v508, 0
      %v605 = vsel %vm528, %v509, 0
      %v608 = vsel %vm528, %v510, 0
      %v611 = vsel %vm528, %v511, 0
      %v614 = vsel %vm528, %v512, 0
      %v617 = vsel %vm528, %v513, 0
      %v620 = vsel %vm528, %v514, 0
      %v623 = vsel %vm528, %v515, 0
      %625 = vmatpush.bf16.msra.mxu0 0
      %626 = vmatpush.bf16.msra.mxu0 0
      %627 = vmatpush.bf16.msra.mxu0 0
      %628 = vmatpush.bf16.msra.mxu0 0
      %629 = vmatpush.bf16.msra.mxu0 0
      %630 = vmatpush.bf16.msra.mxu0 0
      %631 = vmatpush.bf16.msra.mxu0 0
      %632 = vmatpush.bf16.msra.mxu0 %v526
      %633 = vmatmul.bf16.gmra.mxu0 %v530
      %v634 = vpop.f32.mrf.mxu0
      %v635 = vadd.f32 %v520, %v634
      %v636 = vpop.f32.mrf.mxu0
      %v637 = vadd.f32 %v520, %v636
      %638 = vmatmul.bf16.gmra.mxu0 %v533
      %v639 = vpop.f32.mrf.mxu0
      %v640 = vadd.f32 %v520, %v639
      %v641 = vpop.f32.mrf.mxu0
      %v642 = vadd.f32 %v520, %v641
      %643 = vmatmul.bf16.gmra.mxu0 %v536
      %v644 = vpop.f32.mrf.mxu0
      %v645 = vadd.f32 %v520, %v644
      %v646 = vpop.f32.mrf.mxu0
      %v647 = vadd.f32 %v520, %v646
      %648 = vmatmul.bf16.gmra.mxu0 %v539
      %v649 = vpop.f32.mrf.mxu0
      %v650 = vadd.f32 %v520, %v649
      %v651 = vpop.f32.mrf.mxu0
      %v652 = vadd.f32 %v520, %v651
      %653 = vmatmul.bf16.gmra.mxu0 %v542
      %v654 = vpop.f32.mrf.mxu0
      %v655 = vadd.f32 %v520, %v654
      %v656 = vpop.f32.mrf.mxu0
      %v657 = vadd.f32 %v520, %v656
      %658 = vmatmul.bf16.gmra.mxu0 %v545
      %v659 = vpop.f32.mrf.mxu0
      %v660 = vadd.f32 %v520, %v659
      %v661 = vpop.f32.mrf.mxu0
      %v662 = vadd.f32 %v520, %v661
      %663 = vmatmul.bf16.gmra.mxu0 %v548
      %v664 = vpop.f32.mrf.mxu0
      %v665 = vadd.f32 %v520, %v664
      %v666 = vpop.f32.mrf.mxu0
      %v667 = vadd.f32 %v520, %v666
      %668 = vmatmul.bf16.gmra.mxu0 %v551
      %v669 = vpop.f32.mrf.mxu0
      %v670 = vadd.f32 %v520, %v669
      %v671 = vpop.f32.mrf.mxu0
      %v672 = vadd.f32 %v520, %v671
      %673 = vmatmul.bf16.gmra.mxu0 %v554
      %v674 = vpop.f32.mrf.mxu0
      %v675 = vadd.f32 %v520, %v674
      %v676 = vpop.f32.mrf.mxu0
      %v677 = vadd.f32 %v520, %v676
      %678 = vmatmul.bf16.gmra.mxu0 %v557
      %v679 = vpop.f32.mrf.mxu0
      %v680 = vadd.f32 %v520, %v679
      %v681 = vpop.f32.mrf.mxu0
      %v682 = vadd.f32 %v520, %v681
      %683 = vmatmul.bf16.gmra.mxu0 %v560
      %v684 = vpop.f32.mrf.mxu0
      %v685 = vadd.f32 %v520, %v684
      %v686 = vpop.f32.mrf.mxu0
      %v687 = vadd.f32 %v520, %v686
      %688 = vmatmul.bf16.gmra.mxu0 %v563
      %v689 = vpop.f32.mrf.mxu0
      %v690 = vadd.f32 %v520, %v689
      %v691 = vpop.f32.mrf.mxu0
      %v692 = vadd.f32 %v520, %v691
      %693 = vmatmul.bf16.gmra.mxu0 %v566
      %v694 = vpop.f32.mrf.mxu0
      %v695 = vadd.f32 %v520, %v694
      %v696 = vpop.f32.mrf.mxu0
      %v697 = vadd.f32 %v520, %v696
      %698 = vmatmul.bf16.gmra.mxu0 %v569
      %v699 = vpop.f32.mrf.mxu0
      %v700 = vadd.f32 %v520, %v699
      %v701 = vpop.f32.mrf.mxu0
      %v702 = vadd.f32 %v520, %v701
      %703 = vmatmul.bf16.gmra.mxu0 %v572
      %v704 = vpop.f32.mrf.mxu0
      %v705 = vadd.f32 %v520, %v704
      %v706 = vpop.f32.mrf.mxu0
      %v707 = vadd.f32 %v520, %v706
      %708 = vmatmul.bf16.gmra.mxu0 %v575
      %v709 = vpop.f32.mrf.mxu0
      %v710 = vadd.f32 %v520, %v709
      %v711 = vpop.f32.mrf.mxu0
      %v712 = vadd.f32 %v520, %v711
      %713 = vmatmul.bf16.gmra.mxu0 %v578
      %v714 = vpop.f32.mrf.mxu0
      %v715 = vadd.f32 %v520, %v714
      %v716 = vpop.f32.mrf.mxu0
      %v717 = vadd.f32 %v520, %v716
      %718 = vmatmul.bf16.gmra.mxu0 %v581
      %v719 = vpop.f32.mrf.mxu0
      %v720 = vadd.f32 %v520, %v719
      %v721 = vpop.f32.mrf.mxu0
      %v722 = vadd.f32 %v520, %v721
      %723 = vmatmul.bf16.gmra.mxu0 %v584
      %v724 = vpop.f32.mrf.mxu0
      %v725 = vadd.f32 %v520, %v724
      %v726 = vpop.f32.mrf.mxu0
      %v727 = vadd.f32 %v520, %v726
      %728 = vmatmul.bf16.gmra.mxu0 %v587
      %v729 = vpop.f32.mrf.mxu0
      %v730 = vadd.f32 %v520, %v729
      %v731 = vpop.f32.mrf.mxu0
      %v732 = vadd.f32 %v520, %v731
      %733 = vmatmul.bf16.gmra.mxu0 %v590
      %v734 = vpop.f32.mrf.mxu0
      %v735 = vadd.f32 %v520, %v734
      %v736 = vpop.f32.mrf.mxu0
      %v737 = vadd.f32 %v520, %v736
      %738 = vmatmul.bf16.gmra.mxu0 %v593
      %v739 = vpop.f32.mrf.mxu0
      %v740 = vadd.f32 %v520, %v739
      %v741 = vpop.f32.mrf.mxu0
      %v742 = vadd.f32 %v520, %v741
      %743 = vmatmul.bf16.gmra.mxu0 %v596
      %v744 = vpop.f32.mrf.mxu0
      %v745 = vadd.f32 %v520, %v744
      %v746 = vpop.f32.mrf.mxu0
      %v747 = vadd.f32 %v520, %v746
      %748 = vmatmul.bf16.gmra.mxu0 %v599
      %v749 = vpop.f32.mrf.mxu0
      %v750 = vadd.f32 %v520, %v749
      %v751 = vpop.f32.mrf.mxu0
      %v752 = vadd.f32 %v520, %v751
      %753 = vmatmul.bf16.gmra.mxu0 %v602
      %v754 = vpop.f32.mrf.mxu0
      %v755 = vadd.f32 %v520, %v754
      %v756 = vpop.f32.mrf.mxu0
      %v757 = vadd.f32 %v520, %v756
      %758 = vmatmul.bf16.gmra.mxu0 %v605
      %v759 = vpop.f32.mrf.mxu0
      %v760 = vadd.f32 %v520, %v759
      %v761 = vpop.f32.mrf.mxu0
      %v762 = vadd.f32 %v520, %v761
      %763 = vmatmul.bf16.gmra.mxu0 %v608
      %v764 = vpop.f32.mrf.mxu0
      %v765 = vadd.f32 %v520, %v764
      %v766 = vpop.f32.mrf.mxu0
      %v767 = vadd.f32 %v520, %v766
      %768 = vmatmul.bf16.gmra.mxu0 %v611
      %v769 = vpop.f32.mrf.mxu0
      %v770 = vadd.f32 %v520, %v769
      %v771 = vpop.f32.mrf.mxu0
      %v772 = vadd.f32 %v520, %v771
      %773 = vmatmul.bf16.gmra.mxu0 %v614
      %v774 = vpop.f32.mrf.mxu0
      %v775 = vadd.f32 %v520, %v774
      %v776 = vpop.f32.mrf.mxu0
      %v777 = vadd.f32 %v520, %v776
      %778 = vmatmul.bf16.gmra.mxu0 %v617
      %v779 = vpop.f32.mrf.mxu0
      %v780 = vadd.f32 %v520, %v779
      %v781 = vpop.f32.mrf.mxu0
      %v782 = vadd.f32 %v520, %v781
      %783 = vmatmul.bf16.gmra.mxu0 %v620
      %v784 = vpop.f32.mrf.mxu0
      %v785 = vadd.f32 %v520, %v784
      %v786 = vpop.f32.mrf.mxu0
      %v787 = vadd.f32 %v520, %v786
      %788 = vmatmul.bf16.gmra.mxu0 %v623
      %v789 = vpop.f32.mrf.mxu0
      %v790 = vadd.f32 %v520, %v789
      %v791 = vpop.f32.mrf.mxu0
      %v792 = vadd.f32 %v520, %v791
      %793 = vdwg.mxu0
      %v794 = vpack.c.bf16 %v635, %v635
      %v795 = vpack.c.bf16 %v637, %v637
      %v796 = vpack.c.bf16 %v640, %v640
      %v797 = vpack.c.bf16 %v642, %v642
      %v798 = vpack.c.bf16 %v645, %v645
      %v799 = vpack.c.bf16 %v647, %v647
      %v800 = vpack.c.bf16 %v650, %v650
      %v801 = vpack.c.bf16 %v652, %v652
      %v802 = vpack.c.bf16 %v655, %v655
      %v803 = vpack.c.bf16 %v657, %v657
      %v804 = vpack.c.bf16 %v660, %v660
      %v805 = vpack.c.bf16 %v662, %v662
      %v806 = vpack.c.bf16 %v665, %v665
      %v807 = vpack.c.bf16 %v667, %v667
      %v808 = vpack.c.bf16 %v670, %v670
      %v809 = vpack.c.bf16 %v672, %v672
      %v810 = vpack.c.bf16 %v675, %v675
      %v811 = vpack.c.bf16 %v677, %v677
      %v812 = vpack.c.bf16 %v680, %v680
      %v813 = vpack.c.bf16 %v682, %v682
      %v814 = vpack.c.bf16 %v685, %v685
      %v815 = vpack.c.bf16 %v687, %v687
      %v816 = vpack.c.bf16 %v690, %v690
      %v817 = vpack.c.bf16 %v692, %v692
      %v818 = vpack.c.bf16 %v695, %v695
      %v819 = vpack.c.bf16 %v697, %v697
      %v820 = vpack.c.bf16 %v700, %v700
      %v821 = vpack.c.bf16 %v702, %v702
      %v822 = vpack.c.bf16 %v705, %v705
      %v823 = vpack.c.bf16 %v707, %v707
      %v824 = vpack.c.bf16 %v710, %v710
      %v825 = vpack.c.bf16 %v712, %v712
      %v826 = vpack.c.bf16 %v715, %v715
      %v827 = vpack.c.bf16 %v717, %v717
      %v828 = vpack.c.bf16 %v720, %v720
      %v829 = vpack.c.bf16 %v722, %v722
      %v830 = vpack.c.bf16 %v725, %v725
      %v831 = vpack.c.bf16 %v727, %v727
      %v832 = vpack.c.bf16 %v730, %v730
      %v833 = vpack.c.bf16 %v732, %v732
      %v834 = vpack.c.bf16 %v735, %v735
      %v835 = vpack.c.bf16 %v737, %v737
      %v836 = vpack.c.bf16 %v740, %v740
      %v837 = vpack.c.bf16 %v742, %v742
      %v838 = vpack.c.bf16 %v745, %v745
      %v839 = vpack.c.bf16 %v747, %v747
      %v840 = vpack.c.bf16 %v750, %v750
      %v841 = vpack.c.bf16 %v752, %v752
      %v842 = vpack.c.bf16 %v755, %v755
      %v843 = vpack.c.bf16 %v757, %v757
      %v844 = vpack.c.bf16 %v760, %v760
      %v845 = vpack.c.bf16 %v762, %v762
      %v846 = vpack.c.bf16 %v765, %v765
      %v847 = vpack.c.bf16 %v767, %v767
      %v848 = vpack.c.bf16 %v770, %v770
      %v849 = vpack.c.bf16 %v772, %v772
      %v850 = vpack.c.bf16 %v775, %v775
      %v851 = vpack.c.bf16 %v777, %v777
      %v852 = vpack.c.bf16 %v780, %v780
      %v853 = vpack.c.bf16 %v782, %v782
      %v854 = vpack.c.bf16 %v785, %v785
      %v855 = vpack.c.bf16 %v787, %v787
      %v856 = vpack.c.bf16 %v790, %v790
      %v857 = vpack.c.bf16 %v792, %v792
      %vm858 = vcmask 60416
      %859 = vst.msk [vmem:[%s397] sm:$0xf] %vm858, %v794
      %860 = vst.msk [vmem:[%s397 + $0x4] sm:$0xf] %vm858, %v795
      %861 = vst.msk [vmem:[%s397 + $0x8] sm:$0xf] %vm858, %v796
      %862 = vst.msk [vmem:[%s397 + $0xc] sm:$0xf] %vm858, %v797
      %863 = vst.msk [vmem:[%s397 + $0x10] sm:$0xf] %vm858, %v798
      %864 = vst.msk [vmem:[%s397 + $0x14] sm:$0xf] %vm858, %v799
      %865 = vst.msk [vmem:[%s397 + $0x18] sm:$0xf] %vm858, %v800
      %866 = vst.msk [vmem:[%s397 + $0x1c] sm:$0xf] %vm858, %v801
      %867 = vst.msk [vmem:[%s397 + $0x20] sm:$0xf] %vm858, %v802
      %868 = vst.msk [vmem:[%s397 + $0x24] sm:$0xf] %vm858, %v803
      %869 = vst.msk [vmem:[%s397 + $0x28] sm:$0xf] %vm858, %v804
      %870 = vst.msk [vmem:[%s397 + $0x2c] sm:$0xf] %vm858, %v805
      %871 = vst.msk [vmem:[%s397 + $0x30] sm:$0xf] %vm858, %v806
      %872 = vst.msk [vmem:[%s397 + $0x34] sm:$0xf] %vm858, %v807
      %873 = vst.msk [vmem:[%s397 + $0x38] sm:$0xf] %vm858, %v808
      %874 = vst.msk [vmem:[%s397 + $0x3c] sm:$0xf] %vm858, %v809
      %875 = vst.msk [vmem:[%s397 + $0x40] sm:$0xf] %vm858, %v810
      %876 = vst.msk [vmem:[%s397 + $0x44] sm:$0xf] %vm858, %v811
      %877 = vst.msk [vmem:[%s397 + $0x48] sm:$0xf] %vm858, %v812
      %878 = vst.msk [vmem:[%s397 + $0x4c] sm:$0xf] %vm858, %v813
      %879 = vst.msk [vmem:[%s397 + $0x50] sm:$0xf] %vm858, %v814
      %880 = vst.msk [vmem:[%s397 + $0x54] sm:$0xf] %vm858, %v815
      %881 = vst.msk [vmem:[%s397 + $0x58] sm:$0xf] %vm858, %v816
      %882 = vst.msk [vmem:[%s397 + $0x5c] sm:$0xf] %vm858, %v817
      %883 = vst.msk [vmem:[%s397 + $0x60] sm:$0xf] %vm858, %v818
      %884 = vst.msk [vmem:[%s397 + $0x64] sm:$0xf] %vm858, %v819
      %885 = vst.msk [vmem:[%s397 + $0x68] sm:$0xf] %vm858, %v820
      %886 = vst.msk [vmem:[%s397 + $0x6c] sm:$0xf] %vm858, %v821
      %887 = vst.msk [vmem:[%s397 + $0x70] sm:$0xf] %vm858, %v822
      %888 = vst.msk [vmem:[%s397 + $0x74] sm:$0xf] %vm858, %v823
      %889 = vst.msk [vmem:[%s397 + $0x78] sm:$0xf] %vm858, %v824
      %890 = vst.msk [vmem:[%s397 + $0x7c] sm:$0xf] %vm858, %v825
      %891 = vst.msk [vmem:[%s397 + $0x80] sm:$0xf] %vm858, %v826
      %892 = vst.msk [vmem:[%s397 + $0x84] sm:$0xf] %vm858, %v827
      %893 = vst.msk [vmem:[%s397 + $0x88] sm:$0xf] %vm858, %v828
      %894 = vst.msk [vmem:[%s397 + $0x8c] sm:$0xf] %vm858, %v829
      %895 = vst.msk [vmem:[%s397 + $0x90] sm:$0xf] %vm858, %v830
      %896 = vst.msk [vmem:[%s397 + $0x94] sm:$0xf] %vm858, %v831
      %897 = vst.msk [vmem:[%s397 + $0x98] sm:$0xf] %vm858, %v832
      %898 = vst.msk [vmem:[%s397 + $0x9c] sm:$0xf] %vm858, %v833
      %899 = vst.msk [vmem:[%s397 + $0xa0] sm:$0xf] %vm858, %v834
      %900 = vst.msk [vmem:[%s397 + $0xa4] sm:$0xf] %vm858, %v835
      %901 = vst.msk [vmem:[%s397 + $0xa8] sm:$0xf] %vm858, %v836
      %902 = vst.msk [vmem:[%s397 + $0xac] sm:$0xf] %vm858, %v837
      %903 = vst.msk [vmem:[%s397 + $0xb0] sm:$0xf] %vm858, %v838
      %904 = vst.msk [vmem:[%s397 + $0xb4] sm:$0xf] %vm858, %v839
      %905 = vst.msk [vmem:[%s397 + $0xb8] sm:$0xf] %vm858, %v840
      %906 = vst.msk [vmem:[%s397 + $0xbc] sm:$0xf] %vm858, %v841
      %907 = vst.msk [vmem:[%s397 + $0xc0] sm:$0xf] %vm858, %v842
      %908 = vst.msk [vmem:[%s397 + $0xc4] sm:$0xf] %vm858, %v843
      %909 = vst.msk [vmem:[%s397 + $0xc8] sm:$0xf] %vm858, %v844
      %910 = vst.msk [vmem:[%s397 + $0xcc] sm:$0xf] %vm858, %v845
      %911 = vst.msk [vmem:[%s397 + $0xd0] sm:$0xf] %vm858, %v846
      %912 = vst.msk [vmem:[%s397 + $0xd4] sm:$0xf] %vm858, %v847
      %913 = vst.msk [vmem:[%s397 + $0xd8] sm:$0xf] %vm858, %v848
      %914 = vst.msk [vmem:[%s397 + $0xdc] sm:$0xf] %vm858, %v849
      %915 = vst.msk [vmem:[%s397 + $0xe0] sm:$0xf] %vm858, %v850
      %916 = vst.msk [vmem:[%s397 + $0xe4] sm:$0xf] %vm858, %v851
      %917 = vst.msk [vmem:[%s397 + $0xe8] sm:$0xf] %vm858, %v852
      %918 = vst.msk [vmem:[%s397 + $0xec] sm:$0xf] %vm858, %v853
      %919 = vst.msk [vmem:[%s397 + $0xf0] sm:$0xf] %vm858, %v854
      %920 = vst.msk [vmem:[%s397 + $0xf4] sm:$0xf] %vm858, %v855
      %921 = vst.msk [vmem:[%s397 + $0xf8] sm:$0xf] %vm858, %v856
      %922 = vst.msk [vmem:[%s397 + $0xfc] sm:$0xf] %vm858, %v857
      %v923 = vld [vmem:[%s2] sm:$0xf]
      %v924 = vld [vmem:[%s2 + $0x4] sm:$0xf]
      %v925 = vld [vmem:[%s5] sm:$0x1]
      %v927 = vperm.slane %v925, 0
      %v931 = vunpack.c.l.b16 %v923
      %v932 = vunpack.c.l.b16 %v924
      %v933 = vpack.c.b16 %v932, %v931
      %935 = vmatpush.bf16.msra.mxu0 0
      %936 = vmatpush.bf16.msra.mxu0 0
      %937 = vmatpush.bf16.msra.mxu0 0
      %938 = vmatpush.bf16.msra.mxu0 0
      %939 = vmatpush.bf16.msra.mxu0 0
      %940 = vmatpush.bf16.msra.mxu0 0
      %941 = vmatpush.bf16.msra.mxu0 0
      %942 = vmatpush.bf16.msra.mxu0 %v933
      %943 = vmatmul.bf16.gmra.mxu0 %v530
      %v944 = vpop.f32.mrf.mxu0
      %v945 = vadd.f32 %v927, %v944
      %v946 = vpop.f32.mrf.mxu0
      %v947 = vadd.f32 %v927, %v946
      %948 = vmatmul.bf16.gmra.mxu0 %v533
      %v949 = vpop.f32.mrf.mxu0
      %v950 = vadd.f32 %v927, %v949
      %v951 = vpop.f32.mrf.mxu0
      %v952 = vadd.f32 %v927, %v951
      %953 = vmatmul.bf16.gmra.mxu0 %v536
      %v954 = vpop.f32.mrf.mxu0
      %v955 = vadd.f32 %v927, %v954
      %v956 = vpop.f32.mrf.mxu0
      %v957 = vadd.f32 %v927, %v956
      %958 = vmatmul.bf16.gmra.mxu0 %v539
      %v959 = vpop.f32.mrf.mxu0
      %v960 = vadd.f32 %v927, %v959
      %v961 = vpop.f32.mrf.mxu0
      %v962 = vadd.f32 %v927, %v961
      %963 = vmatmul.bf16.gmra.mxu0 %v542
      %v964 = vpop.f32.mrf.mxu0
      %v965 = vadd.f32 %v927, %v964
      %v966 = vpop.f32.mrf.mxu0
      %v967 = vadd.f32 %v927, %v966
      %968 = vmatmul.bf16.gmra.mxu0 %v545
      %v969 = vpop.f32.mrf.mxu0
      %v970 = vadd.f32 %v927, %v969
      %v971 = vpop.f32.mrf.mxu0
      %v972 = vadd.f32 %v927, %v971
      %973 = vmatmul.bf16.gmra.mxu0 %v548
      %v974 = vpop.f32.mrf.mxu0
      %v975 = vadd.f32 %v927, %v974
      %v976 = vpop.f32.mrf.mxu0
      %v977 = vadd.f32 %v927, %v976
      %978 = vmatmul.bf16.gmra.mxu0 %v551
      %v979 = vpop.f32.mrf.mxu0
      %v980 = vadd.f32 %v927, %v979
      %v981 = vpop.f32.mrf.mxu0
      %v982 = vadd.f32 %v927, %v981
      %983 = vmatmul.bf16.gmra.mxu0 %v554
      %v984 = vpop.f32.mrf.mxu0
      %v985 = vadd.f32 %v927, %v984
      %v986 = vpop.f32.mrf.mxu0
      %v987 = vadd.f32 %v927, %v986
      %988 = vmatmul.bf16.gmra.mxu0 %v557
      %v989 = vpop.f32.mrf.mxu0
      %v990 = vadd.f32 %v927, %v989
      %v991 = vpop.f32.mrf.mxu0
      %v992 = vadd.f32 %v927, %v991
      %993 = vmatmul.bf16.gmra.mxu0 %v560
      %v994 = vpop.f32.mrf.mxu0
      %v995 = vadd.f32 %v927, %v994
      %v996 = vpop.f32.mrf.mxu0
      %v997 = vadd.f32 %v927, %v996
      %998 = vmatmul.bf16.gmra.mxu0 %v563
      %v999 = vpop.f32.mrf.mxu0
      %v1000 = vadd.f32 %v927, %v999
      %v1001 = vpop.f32.mrf.mxu0
      %v1002 = vadd.f32 %v927, %v1001
      %1003 = vmatmul.bf16.gmra.mxu0 %v566
      %v1004 = vpop.f32.mrf.mxu0
      %v1005 = vadd.f32 %v927, %v1004
      %v1006 = vpop.f32.mrf.mxu0
      %v1007 = vadd.f32 %v927, %v1006
      %1008 = vmatmul.bf16.gmra.mxu0 %v569
      %v1009 = vpop.f32.mrf.mxu0
      %v1010 = vadd.f32 %v927, %v1009
      %v1011 = vpop.f32.mrf.mxu0
      %v1012 = vadd.f32 %v927, %v1011
      %1013 = vmatmul.bf16.gmra.mxu0 %v572
      %v1014 = vpop.f32.mrf.mxu0
      %v1015 = vadd.f32 %v927, %v1014
      %v1016 = vpop.f32.mrf.mxu0
      %v1017 = vadd.f32 %v927, %v1016
      %1018 = vmatmul.bf16.gmra.mxu0 %v575
      %v1019 = vpop.f32.mrf.mxu0
      %v1020 = vadd.f32 %v927, %v1019
      %v1021 = vpop.f32.mrf.mxu0
      %v1022 = vadd.f32 %v927, %v1021
      %1023 = vmatmul.bf16.gmra.mxu0 %v578
      %v1024 = vpop.f32.mrf.mxu0
      %v1025 = vadd.f32 %v927, %v1024
      %v1026 = vpop.f32.mrf.mxu0
      %v1027 = vadd.f32 %v927, %v1026
      %1028 = vmatmul.bf16.gmra.mxu0 %v581
      %v1029 = vpop.f32.mrf.mxu0
      %v1030 = vadd.f32 %v927, %v1029
      %v1031 = vpop.f32.mrf.mxu0
      %v1032 = vadd.f32 %v927, %v1031
      %1033 = vmatmul.bf16.gmra.mxu0 %v584
      %v1034 = vpop.f32.mrf.mxu0
      %v1035 = vadd.f32 %v927, %v1034
      %v1036 = vpop.f32.mrf.mxu0
      %v1037 = vadd.f32 %v927, %v1036
      %1038 = vmatmul.bf16.gmra.mxu0 %v587
      %v1039 = vpop.f32.mrf.mxu0
      %v1040 = vadd.f32 %v927, %v1039
      %v1041 = vpop.f32.mrf.mxu0
      %v1042 = vadd.f32 %v927, %v1041
      %1043 = vmatmul.bf16.gmra.mxu0 %v590
      %v1044 = vpop.f32.mrf.mxu0
      %v1045 = vadd.f32 %v927, %v1044
      %v1046 = vpop.f32.mrf.mxu0
      %v1047 = vadd.f32 %v927, %v1046
      %1048 = vmatmul.bf16.gmra.mxu0 %v593
      %v1049 = vpop.f32.mrf.mxu0
      %v1050 = vadd.f32 %v927, %v1049
      %v1051 = vpop.f32.mrf.mxu0
      %v1052 = vadd.f32 %v927, %v1051
      %1053 = vmatmul.bf16.gmra.mxu0 %v596
      %v1054 = vpop.f32.mrf.mxu0
      %v1055 = vadd.f32 %v927, %v1054
      %v1056 = vpop.f32.mrf.mxu0
      %v1057 = vadd.f32 %v927, %v1056
      %1058 = vmatmul.bf16.gmra.mxu0 %v599
      %v1059 = vpop.f32.mrf.mxu0
      %v1060 = vadd.f32 %v927, %v1059
      %v1061 = vpop.f32.mrf.mxu0
      %v1062 = vadd.f32 %v927, %v1061
      %1063 = vmatmul.bf16.gmra.mxu0 %v602
      %v1064 = vpop.f32.mrf.mxu0
      %v1065 = vadd.f32 %v927, %v1064
      %v1066 = vpop.f32.mrf.mxu0
      %v1067 = vadd.f32 %v927, %v1066
      %1068 = vmatmul.bf16.gmra.mxu0 %v605
      %v1069 = vpop.f32.mrf.mxu0
      %v1070 = vadd.f32 %v927, %v1069
      %v1071 = vpop.f32.mrf.mxu0
      %v1072 = vadd.f32 %v927, %v1071
      %1073 = vmatmul.bf16.gmra.mxu0 %v608
      %v1074 = vpop.f32.mrf.mxu0
      %v1075 = vadd.f32 %v927, %v1074
      %v1076 = vpop.f32.mrf.mxu0
      %v1077 = vadd.f32 %v927, %v1076
      %1078 = vmatmul.bf16.gmra.mxu0 %v611
      %v1079 = vpop.f32.mrf.mxu0
      %v1080 = vadd.f32 %v927, %v1079
      %v1081 = vpop.f32.mrf.mxu0
      %v1082 = vadd.f32 %v927, %v1081
      %1083 = vmatmul.bf16.gmra.mxu0 %v614
      %v1084 = vpop.f32.mrf.mxu0
      %v1085 = vadd.f32 %v927, %v1084
      %v1086 = vpop.f32.mrf.mxu0
      %v1087 = vadd.f32 %v927, %v1086
      %1088 = vmatmul.bf16.gmra.mxu0 %v617
      %v1089 = vpop.f32.mrf.mxu0
      %v1090 = vadd.f32 %v927, %v1089
      %v1091 = vpop.f32.mrf.mxu0
      %v1092 = vadd.f32 %v927, %v1091
      %1093 = vmatmul.bf16.gmra.mxu0 %v620
      %v1094 = vpop.f32.mrf.mxu0
      %v1095 = vadd.f32 %v927, %v1094
      %v1096 = vpop.f32.mrf.mxu0
      %v1097 = vadd.f32 %v927, %v1096
      %1098 = vmatmul.bf16.gmra.mxu0 %v623
      %v1099 = vpop.f32.mrf.mxu0
      %v1100 = vadd.f32 %v927, %v1099
      %v1101 = vpop.f32.mrf.mxu0
      %v1102 = vadd.f32 %v927, %v1101
      %1103 = vdwg.mxu0
      %v1104 = vld [vmem:[%s3] sm:$0xf]
      %v1105 = vld [vmem:[%s3 + $0x4] sm:$0xf]
      %v1106 = vld [vmem:[%s6] sm:$0x1]
      %v1108 = vperm.slane %v1106, 0
      %v1112 = vunpack.c.l.b16 %v1104
      %v1113 = vunpack.c.l.b16 %v1105
      %v1114 = vpack.c.b16 %v1113, %v1112
      %1116 = vmatpush.bf16.msra.mxu0 0
      %1117 = vmatpush.bf16.msra.mxu0 0
      %1118 = vmatpush.bf16.msra.mxu0 0
      %1119 = vmatpush.bf16.msra.mxu0 0
      %1120 = vmatpush.bf16.msra.mxu0 0
      %1121 = vmatpush.bf16.msra.mxu0 0
      %1122 = vmatpush.bf16.msra.mxu0 0
      %1123 = vmatpush.bf16.msra.mxu0 %v1114
      %1124 = vmatmul.bf16.gmra.mxu0 %v530
      %v1125 = vpop.f32.mrf.mxu0
      %v1126 = vadd.f32 %v1108, %v1125
      %v1127 = vpop.f32.mrf.mxu0
      %v1128 = vadd.f32 %v1108, %v1127
      %1129 = vmatmul.bf16.gmra.mxu0 %v533
      %v1130 = vpop.f32.mrf.mxu0
      %v1131 = vadd.f32 %v1108, %v1130
      %v1132 = vpop.f32.mrf.mxu0
      %v1133 = vadd.f32 %v1108, %v1132
      %1134 = vmatmul.bf16.gmra.mxu0 %v536
      %v1135 = vpop.f32.mrf.mxu0
      %v1136 = vadd.f32 %v1108, %v1135
      %v1137 = vpop.f32.mrf.mxu0
      %v1138 = vadd.f32 %v1108, %v1137
      %1139 = vmatmul.bf16.gmra.mxu0 %v539
      %v1140 = vpop.f32.mrf.mxu0
      %v1141 = vadd.f32 %v1108, %v1140
      %v1142 = vpop.f32.mrf.mxu0
      %v1143 = vadd.f32 %v1108, %v1142
      %1144 = vmatmul.bf16.gmra.mxu0 %v542
      %v1145 = vpop.f32.mrf.mxu0
      %v1146 = vadd.f32 %v1108, %v1145
      %v1147 = vpop.f32.mrf.mxu0
      %v1148 = vadd.f32 %v1108, %v1147
      %1149 = vmatmul.bf16.gmra.mxu0 %v545
      %v1150 = vpop.f32.mrf.mxu0
      %v1151 = vadd.f32 %v1108, %v1150
      %v1152 = vpop.f32.mrf.mxu0
      %v1153 = vadd.f32 %v1108, %v1152
      %1154 = vmatmul.bf16.gmra.mxu0 %v548
      %v1155 = vpop.f32.mrf.mxu0
      %v1156 = vadd.f32 %v1108, %v1155
      %v1157 = vpop.f32.mrf.mxu0
      %v1158 = vadd.f32 %v1108, %v1157
      %1159 = vmatmul.bf16.gmra.mxu0 %v551
      %v1160 = vpop.f32.mrf.mxu0
      %v1161 = vadd.f32 %v1108, %v1160
      %v1162 = vpop.f32.mrf.mxu0
      %v1163 = vadd.f32 %v1108, %v1162
      %1164 = vmatmul.bf16.gmra.mxu0 %v554
      %v1165 = vpop.f32.mrf.mxu0
      %v1166 = vadd.f32 %v1108, %v1165
      %v1167 = vpop.f32.mrf.mxu0
      %v1168 = vadd.f32 %v1108, %v1167
      %1169 = vmatmul.bf16.gmra.mxu0 %v557
      %v1170 = vpop.f32.mrf.mxu0
      %v1171 = vadd.f32 %v1108, %v1170
      %v1172 = vpop.f32.mrf.mxu0
      %v1173 = vadd.f32 %v1108, %v1172
      %1174 = vmatmul.bf16.gmra.mxu0 %v560
      %v1175 = vpop.f32.mrf.mxu0
      %v1176 = vadd.f32 %v1108, %v1175
      %v1177 = vpop.f32.mrf.mxu0
      %v1178 = vadd.f32 %v1108, %v1177
      %1179 = vmatmul.bf16.gmra.mxu0 %v563
      %v1180 = vpop.f32.mrf.mxu0
      %v1181 = vadd.f32 %v1108, %v1180
      %v1182 = vpop.f32.mrf.mxu0
      %v1183 = vadd.f32 %v1108, %v1182
      %1184 = vmatmul.bf16.gmra.mxu0 %v566
      %v1185 = vpop.f32.mrf.mxu0
      %v1186 = vadd.f32 %v1108, %v1185
      %v1187 = vpop.f32.mrf.mxu0
      %v1188 = vadd.f32 %v1108, %v1187
      %1189 = vmatmul.bf16.gmra.mxu0 %v569
      %v1190 = vpop.f32.mrf.mxu0
      %v1191 = vadd.f32 %v1108, %v1190
      %v1192 = vpop.f32.mrf.mxu0
      %v1193 = vadd.f32 %v1108, %v1192
      %1194 = vmatmul.bf16.gmra.mxu0 %v572
      %v1195 = vpop.f32.mrf.mxu0
      %v1196 = vadd.f32 %v1108, %v1195
      %v1197 = vpop.f32.mrf.mxu0
      %v1198 = vadd.f32 %v1108, %v1197
      %1199 = vmatmul.bf16.gmra.mxu0 %v575
      %v1200 = vpop.f32.mrf.mxu0
      %v1201 = vadd.f32 %v1108, %v1200
      %v1202 = vpop.f32.mrf.mxu0
      %v1203 = vadd.f32 %v1108, %v1202
      %1204 = vmatmul.bf16.gmra.mxu0 %v578
      %v1205 = vpop.f32.mrf.mxu0
      %v1206 = vadd.f32 %v1108, %v1205
      %v1207 = vpop.f32.mrf.mxu0
      %v1208 = vadd.f32 %v1108, %v1207
      %1209 = vmatmul.bf16.gmra.mxu0 %v581
      %v1210 = vpop.f32.mrf.mxu0
      %v1211 = vadd.f32 %v1108, %v1210
      %v1212 = vpop.f32.mrf.mxu0
      %v1213 = vadd.f32 %v1108, %v1212
      %1214 = vmatmul.bf16.gmra.mxu0 %v584
      %v1215 = vpop.f32.mrf.mxu0
      %v1216 = vadd.f32 %v1108, %v1215
      %v1217 = vpop.f32.mrf.mxu0
      %v1218 = vadd.f32 %v1108, %v1217
      %1219 = vmatmul.bf16.gmra.mxu0 %v587
      %v1220 = vpop.f32.mrf.mxu0
      %v1221 = vadd.f32 %v1108, %v1220
      %v1222 = vpop.f32.mrf.mxu0
      %v1223 = vadd.f32 %v1108, %v1222
      %1224 = vmatmul.bf16.gmra.mxu0 %v590
      %v1225 = vpop.f32.mrf.mxu0
      %v1226 = vadd.f32 %v1108, %v1225
      %v1227 = vpop.f32.mrf.mxu0
      %v1228 = vadd.f32 %v1108, %v1227
      %1229 = vmatmul.bf16.gmra.mxu0 %v593
      %v1230 = vpop.f32.mrf.mxu0
      %v1231 = vadd.f32 %v1108, %v1230
      %v1232 = vpop.f32.mrf.mxu0
      %v1233 = vadd.f32 %v1108, %v1232
      %1234 = vmatmul.bf16.gmra.mxu0 %v596
      %v1235 = vpop.f32.mrf.mxu0
      %v1236 = vadd.f32 %v1108, %v1235
      %v1237 = vpop.f32.mrf.mxu0
      %v1238 = vadd.f32 %v1108, %v1237
      %1239 = vmatmul.bf16.gmra.mxu0 %v599
      %v1240 = vpop.f32.mrf.mxu0
      %v1241 = vadd.f32 %v1108, %v1240
      %v1242 = vpop.f32.mrf.mxu0
      %v1243 = vadd.f32 %v1108, %v1242
      %1244 = vmatmul.bf16.gmra.mxu0 %v602
      %v1245 = vpop.f32.mrf.mxu0
      %v1246 = vadd.f32 %v1108, %v1245
      %v1247 = vpop.f32.mrf.mxu0
      %v1248 = vadd.f32 %v1108, %v1247
      %1249 = vmatmul.bf16.gmra.mxu0 %v605
      %v1250 = vpop.f32.mrf.mxu0
      %v1251 = vadd.f32 %v1108, %v1250
      %v1252 = vpop.f32.mrf.mxu0
      %v1253 = vadd.f32 %v1108, %v1252
      %1254 = vmatmul.bf16.gmra.mxu0 %v608
      %v1255 = vpop.f32.mrf.mxu0
      %v1256 = vadd.f32 %v1108, %v1255
      %v1257 = vpop.f32.mrf.mxu0
      %v1258 = vadd.f32 %v1108, %v1257
      %1259 = vmatmul.bf16.gmra.mxu0 %v611
      %v1260 = vpop.f32.mrf.mxu0
      %v1261 = vadd.f32 %v1108, %v1260
      %v1262 = vpop.f32.mrf.mxu0
      %v1263 = vadd.f32 %v1108, %v1262
      %1264 = vmatmul.bf16.gmra.mxu0 %v614
      %v1265 = vpop.f32.mrf.mxu0
      %v1266 = vadd.f32 %v1108, %v1265
      %v1267 = vpop.f32.mrf.mxu0
      %v1268 = vadd.f32 %v1108, %v1267
      %1269 = vmatmul.bf16.gmra.mxu0 %v617
      %v1270 = vpop.f32.mrf.mxu0
      %v1271 = vadd.f32 %v1108, %v1270
      %v1272 = vpop.f32.mrf.mxu0
      %v1273 = vadd.f32 %v1108, %v1272
      %1274 = vmatmul.bf16.gmra.mxu0 %v620
      %v1275 = vpop.f32.mrf.mxu0
      %v1276 = vadd.f32 %v1108, %v1275
      %v1277 = vpop.f32.mrf.mxu0
      %v1278 = vadd.f32 %v1108, %v1277
      %1279 = vmatmul.bf16.gmra.mxu0 %v623
      %v1280 = vpop.f32.mrf.mxu0
      %v1281 = vadd.f32 %v1108, %v1280
      %v1282 = vpop.f32.mrf.mxu0
      %v1283 = vadd.f32 %v1108, %v1282
      %1284 = vdwg.mxu0
      %v1285 = vmax.f32 %v945, %v955
      %v1286 = vmax.f32 %v947, %v957
      %v1287 = vmax.f32 %v950, %v960
      %v1288 = vmax.f32 %v952, %v962
      %vm1289 = vcmask 64512
      %1290 = vst.msk [vmem:[#allocation2] sm:$0xff] %vm1289, %v1285
      %1291 = vst.msk [vmem:[#allocation2 + $0x8] sm:$0xff] %vm1289, %v1286
      %1292 = vst.msk [vmem:[#allocation2 + $0x10] sm:$0xff] %vm1289, %v1287
      %1293 = vst.msk [vmem:[#allocation2 + $0x18] sm:$0xff] %vm1289, %v1288
      %v1294 = vmax.f32 %v1126, %v1136
      %v1295 = vmax.f32 %v1128, %v1138
      %v1296 = vmax.f32 %v1131, %v1141
      %v1297 = vmax.f32 %v1133, %v1143
      %1298 = vst.msk [vmem:[#allocation3] sm:$0xff] %vm1289, %v1294
      %1299 = vst.msk [vmem:[#allocation3 + $0x8] sm:$0xff] %vm1289, %v1295
      %1300 = vst.msk [vmem:[#allocation3 + $0x10] sm:$0xff] %vm1289, %v1296
      %1301 = vst.msk [vmem:[#allocation3 + $0x18] sm:$0xff] %vm1289, %v1297
      %v1302 = vmax.f32 %v965, %v975
      %v1303 = vmax.f32 %v967, %v977
      %v1304 = vmax.f32 %v970, %v980
      %v1305 = vmax.f32 %v972, %v982
      %1306 = vst.msk [vmem:[#allocation2 + $0x20] sm:$0xff] %vm1289, %v1302
      %1307 = vst.msk [vmem:[#allocation2 + $0x28] sm:$0xff] %vm1289, %v1303
      %1308 = vst.msk [vmem:[#allocation2 + $0x30] sm:$0xff] %vm1289, %v1304
      %1309 = vst.msk [vmem:[#allocation2 + $0x38] sm:$0xff] %vm1289, %v1305
      %v1310 = vmax.f32 %v1146, %v1156
      %v1311 = vmax.f32 %v1148, %v1158
      %v1312 = vmax.f32 %v1151, %v1161
      %v1313 = vmax.f32 %v1153, %v1163
      %1314 = vst.msk [vmem:[#allocation3 + $0x20] sm:$0xff] %vm1289, %v1310
      %1315 = vst.msk [vmem:[#allocation3 + $0x28] sm:$0xff] %vm1289, %v1311
      %1316 = vst.msk [vmem:[#allocation3 + $0x30] sm:$0xff] %vm1289, %v1312
      %1317 = vst.msk [vmem:[#allocation3 + $0x38] sm:$0xff] %vm1289, %v1313
      %v1318 = vmax.f32 %v985, %v995
      %v1319 = vmax.f32 %v987, %v997
      %v1320 = vmax.f32 %v990, %v1000
      %v1321 = vmax.f32 %v992, %v1002
      %1322 = vst.msk [vmem:[#allocation2 + $0x40] sm:$0xff] %vm1289, %v1318
      %1323 = vst.msk [vmem:[#allocation2 + $0x48] sm:$0xff] %vm1289, %v1319
      %1324 = vst.msk [vmem:[#allocation2 + $0x50] sm:$0xff] %vm1289, %v1320
      %1325 = vst.msk [vmem:[#allocation2 + $0x58] sm:$0xff] %vm1289, %v1321
      %v1326 = vmax.f32 %v1166, %v1176
      %v1327 = vmax.f32 %v1168, %v1178
      %v1328 = vmax.f32 %v1171, %v1181
      %v1329 = vmax.f32 %v1173, %v1183
      %1330 = vst.msk [vmem:[#allocation3 + $0x40] sm:$0xff] %vm1289, %v1326
      %1331 = vst.msk [vmem:[#allocation3 + $0x48] sm:$0xff] %vm1289, %v1327
      %1332 = vst.msk [vmem:[#allocation3 + $0x50] sm:$0xff] %vm1289, %v1328
      %1333 = vst.msk [vmem:[#allocation3 + $0x58] sm:$0xff] %vm1289, %v1329
      %v1334 = vmax.f32 %v1005, %v1015
      %v1335 = vmax.f32 %v1007, %v1017
      %v1336 = vmax.f32 %v1010, %v1020
      %v1337 = vmax.f32 %v1012, %v1022
      %1338 = vst.msk [vmem:[#allocation2 + $0x60] sm:$0xff] %vm1289, %v1334
      %1339 = vst.msk [vmem:[#allocation2 + $0x68] sm:$0xff] %vm1289, %v1335
      %1340 = vst.msk [vmem:[#allocation2 + $0x70] sm:$0xff] %vm1289, %v1336
      %1341 = vst.msk [vmem:[#allocation2 + $0x78] sm:$0xff] %vm1289, %v1337
      %v1342 = vmax.f32 %v1186, %v1196
      %v1343 = vmax.f32 %v1188, %v1198
      %v1344 = vmax.f32 %v1191, %v1201
      %v1345 = vmax.f32 %v1193, %v1203
      %1346 = vst.msk [vmem:[#allocation3 + $0x60] sm:$0xff] %vm1289, %v1342
      %1347 = vst.msk [vmem:[#allocation3 + $0x68] sm:$0xff] %vm1289, %v1343
      %1348 = vst.msk [vmem:[#allocation3 + $0x70] sm:$0xff] %vm1289, %v1344
      %1349 = vst.msk [vmem:[#allocation3 + $0x78] sm:$0xff] %vm1289, %v1345
      %v1350 = vmax.f32 %v1025, %v1035
      %v1351 = vmax.f32 %v1027, %v1037
      %v1352 = vmax.f32 %v1030, %v1040
      %v1353 = vmax.f32 %v1032, %v1042
      %1354 = vst.msk [vmem:[#allocation2 + $0x80] sm:$0xff] %vm1289, %v1350
      %1355 = vst.msk [vmem:[#allocation2 + $0x88] sm:$0xff] %vm1289, %v1351
      %1356 = vst.msk [vmem:[#allocation2 + $0x90] sm:$0xff] %vm1289, %v1352
      %1357 = vst.msk [vmem:[#allocation2 + $0x98] sm:$0xff] %vm1289, %v1353
      %v1358 = vmax.f32 %v1206, %v1216
      %v1359 = vmax.f32 %v1208, %v1218
      %v1360 = vmax.f32 %v1211, %v1221
      %v1361 = vmax.f32 %v1213, %v1223
      %1362 = vst.msk [vmem:[#allocation3 + $0x80] sm:$0xff] %vm1289, %v1358
      %1363 = vst.msk [vmem:[#allocation3 + $0x88] sm:$0xff] %vm1289, %v1359
      %1364 = vst.msk [vmem:[#allocation3 + $0x90] sm:$0xff] %vm1289, %v1360
      %1365 = vst.msk [vmem:[#allocation3 + $0x98] sm:$0xff] %vm1289, %v1361
      %v1366 = vmax.f32 %v1045, %v1055
      %v1367 = vmax.f32 %v1047, %v1057
      %v1368 = vmax.f32 %v1050, %v1060
      %v1369 = vmax.f32 %v1052, %v1062
      %1370 = vst.msk [vmem:[#allocation2 + $0xa0] sm:$0xff] %vm1289, %v1366
      %1371 = vst.msk [vmem:[#allocation2 + $0xa8] sm:$0xff] %vm1289, %v1367
      %1372 = vst.msk [vmem:[#allocation2 + $0xb0] sm:$0xff] %vm1289, %v1368
      %1373 = vst.msk [vmem:[#allocation2 + $0xb8] sm:$0xff] %vm1289, %v1369
      %v1374 = vmax.f32 %v1226, %v1236
      %v1375 = vmax.f32 %v1228, %v1238
      %v1376 = vmax.f32 %v1231, %v1241
      %v1377 = vmax.f32 %v1233, %v1243
      %1378 = vst.msk [vmem:[#allocation3 + $0xa0] sm:$0xff] %vm1289, %v1374
      %1379 = vst.msk [vmem:[#allocation3 + $0xa8] sm:$0xff] %vm1289, %v1375
      %1380 = vst.msk [vmem:[#allocation3 + $0xb0] sm:$0xff] %vm1289, %v1376
      %1381 = vst.msk [vmem:[#allocation3 + $0xb8] sm:$0xff] %vm1289, %v1377
      %v1382 = vmax.f32 %v1065, %v1075
      %v1383 = vmax.f32 %v1067, %v1077
      %v1384 = vmax.f32 %v1070, %v1080
      %v1385 = vmax.f32 %v1072, %v1082
      %1386 = vst.msk [vmem:[#allocation2 + $0xc0] sm:$0xff] %vm1289, %v1382
      %1387 = vst.msk [vmem:[#allocation2 + $0xc8] sm:$0xff] %vm1289, %v1383
      %1388 = vst.msk [vmem:[#allocation2 + $0xd0] sm:$0xff] %vm1289, %v1384
      %1389 = vst.msk [vmem:[#allocation2 + $0xd8] sm:$0xff] %vm1289, %v1385
      %v1390 = vmax.f32 %v1246, %v1256
      %v1391 = vmax.f32 %v1248, %v1258
      %v1392 = vmax.f32 %v1251, %v1261
      %v1393 = vmax.f32 %v1253, %v1263
      %1394 = vst.msk [vmem:[#allocation3 + $0xc0] sm:$0xff] %vm1289, %v1390
      %1395 = vst.msk [vmem:[#allocation3 + $0xc8] sm:$0xff] %vm1289, %v1391
      %1396 = vst.msk [vmem:[#allocation3 + $0xd0] sm:$0xff] %vm1289, %v1392
      %1397 = vst.msk [vmem:[#allocation3 + $0xd8] sm:$0xff] %vm1289, %v1393
      %v1398 = vmax.f32 %v1085, %v1095
      %v1399 = vmax.f32 %v1087, %v1097
      %v1400 = vmax.f32 %v1090, %v1100
      %v1401 = vmax.f32 %v1092, %v1102
      %1402 = vst.msk [vmem:[#allocation2 + $0xe0] sm:$0xff] %vm1289, %v1398
      %1403 = vst.msk [vmem:[#allocation2 + $0xe8] sm:$0xff] %vm1289, %v1399
      %1404 = vst.msk [vmem:[#allocation2 + $0xf0] sm:$0xff] %vm1289, %v1400
      %1405 = vst.msk [vmem:[#allocation2 + $0xf8] sm:$0xff] %vm1289, %v1401
      %v1406 = vmax.f32 %v1266, %v1276
      %v1407 = vmax.f32 %v1268, %v1278
      %v1408 = vmax.f32 %v1271, %v1281
      %v1409 = vmax.f32 %v1273, %v1283
      %1410 = vst.msk [vmem:[#allocation3 + $0xe0] sm:$0xff] %vm1289, %v1406
      %1411 = vst.msk [vmem:[#allocation3 + $0xe8] sm:$0xff] %vm1289, %v1407
      %1412 = vst.msk [vmem:[#allocation3 + $0xf0] sm:$0xff] %vm1289, %v1408
      %1413 = vst.msk [vmem:[#allocation3 + $0xf8] sm:$0xff] %vm1289, %v1409
      %v1414 = vld [vmem:[#allocation2] ss:$2 sm:$0xff]
      %s1415 = scalar_lea.vmem [#allocation2], 16
      %v1416 = vld [vmem:[%s1415] ss:$2 sm:$0xff]
      %s1417 = scalar_lea.vmem [#allocation2], 32
      %v1418 = vld [vmem:[%s1417] ss:$2 sm:$0xff]
      %s1419 = scalar_lea.vmem [#allocation2], 48
      %v1420 = vld [vmem:[%s1419] ss:$2 sm:$0xff]
      %s1421 = scalar_lea.vmem [#allocation2], 64
      %v1422 = vld [vmem:[%s1421] ss:$2 sm:$0xff]
      %s1423 = scalar_lea.vmem [#allocation2], 80
      %v1424 = vld [vmem:[%s1423] ss:$2 sm:$0xff]
      %s1425 = scalar_lea.vmem [#allocation2], 96
      %v1426 = vld [vmem:[%s1425] ss:$2 sm:$0xff]
      %s1427 = scalar_lea.vmem [#allocation2], 112
      %v1428 = vld [vmem:[%s1427] ss:$2 sm:$0xff]
      %s1429 = scalar_lea.vmem [#allocation2], 128
      %v1430 = vld [vmem:[%s1429] ss:$2 sm:$0xff]
      %s1431 = scalar_lea.vmem [#allocation2], 144
      %v1432 = vld [vmem:[%s1431] ss:$2 sm:$0xff]
      %s1433 = scalar_lea.vmem [#allocation2], 160
      %v1434 = vld [vmem:[%s1433] ss:$2 sm:$0xff]
      %s1435 = scalar_lea.vmem [#allocation2], 176
      %v1436 = vld [vmem:[%s1435] ss:$2 sm:$0xff]
      %s1437 = scalar_lea.vmem [#allocation2], 192
      %v1438 = vld [vmem:[%s1437] ss:$2 sm:$0xff]
      %s1439 = scalar_lea.vmem [#allocation2], 208
      %v1440 = vld [vmem:[%s1439] ss:$2 sm:$0xff]
      %s1441 = scalar_lea.vmem [#allocation2], 224
      %v1442 = vld [vmem:[%s1441] ss:$2 sm:$0xff]
      %s1443 = scalar_lea.vmem [#allocation2], 240
      %v1444 = vld [vmem:[%s1443] ss:$2 sm:$0xff]
      %s1445 = scalar_lea.vmem [#allocation2], 1
      %v1446 = vld [vmem:[%s1445] ss:$2 sm:$0xff]
      %s1447 = scalar_lea.vmem [#allocation2], 17
      %v1448 = vld [vmem:[%s1447] ss:$2 sm:$0xff]
      %s1449 = scalar_lea.vmem [#allocation2], 33
      %v1450 = vld [vmem:[%s1449] ss:$2 sm:$0xff]
      %s1451 = scalar_lea.vmem [#allocation2], 49
      %v1452 = vld [vmem:[%s1451] ss:$2 sm:$0xff]
      %s1453 = scalar_lea.vmem [#allocation2], 65
      %v1454 = vld [vmem:[%s1453] ss:$2 sm:$0xff]
      %s1455 = scalar_lea.vmem [#allocation2], 81
      %v1456 = vld [vmem:[%s1455] ss:$2 sm:$0xff]
      %s1457 = scalar_lea.vmem [#allocation2], 97
      %v1458 = vld [vmem:[%s1457] ss:$2 sm:$0xff]
      %s1459 = scalar_lea.vmem [#allocation2], 113
      %v1460 = vld [vmem:[%s1459] ss:$2 sm:$0xff]
      %s1461 = scalar_lea.vmem [#allocation2], 129
      %v1462 = vld [vmem:[%s1461] ss:$2 sm:$0xff]
      %s1463 = scalar_lea.vmem [#allocation2], 145
      %v1464 = vld [vmem:[%s1463] ss:$2 sm:$0xff]
      %s1465 = scalar_lea.vmem [#allocation2], 161
      %v1466 = vld [vmem:[%s1465] ss:$2 sm:$0xff]
      %s1467 = scalar_lea.vmem [#allocation2], 177
      %v1468 = vld [vmem:[%s1467] ss:$2 sm:$0xff]
      %s1469 = scalar_lea.vmem [#allocation2], 193
      %v1470 = vld [vmem:[%s1469] ss:$2 sm:$0xff]
      %s1471 = scalar_lea.vmem [#allocation2], 209
      %v1472 = vld [vmem:[%s1471] ss:$2 sm:$0xff]
      %s1473 = scalar_lea.vmem [#allocation2], 225
      %v1474 = vld [vmem:[%s1473] ss:$2 sm:$0xff]
      %s1475 = scalar_lea.vmem [#allocation2], 241
      %v1476 = vld [vmem:[%s1475] ss:$2 sm:$0xff]
      %v1477 = vmax.f32 %v1414, %v1446
      %v1478 = vmax.f32 %v1416, %v1448
      %v1479 = vmax.f32 %v1418, %v1450
      %v1480 = vmax.f32 %v1420, %v1452
      %v1481 = vmax.f32 %v1422, %v1454
      %v1482 = vmax.f32 %v1424, %v1456
      %v1483 = vmax.f32 %v1426, %v1458
      %v1484 = vmax.f32 %v1428, %v1460
      %v1485 = vmax.f32 %v1430, %v1462
      %v1486 = vmax.f32 %v1432, %v1464
      %v1487 = vmax.f32 %v1434, %v1466
      %v1488 = vmax.f32 %v1436, %v1468
      %v1489 = vmax.f32 %v1438, %v1470
      %v1490 = vmax.f32 %v1440, %v1472
      %v1491 = vmax.f32 %v1442, %v1474
      %v1492 = vmax.f32 %v1444, %v1476
      %v1493 = vpack.c.bf16 %v1477, %v1477
      %v1494 = vpack.c.bf16 %v1478, %v1478
      %v1495 = vpack.c.bf16 %v1479, %v1479
      %v1496 = vpack.c.bf16 %v1480, %v1480
      %v1497 = vpack.c.bf16 %v1481, %v1481
      %v1498 = vpack.c.bf16 %v1482, %v1482
      %v1499 = vpack.c.bf16 %v1483, %v1483
      %v1500 = vpack.c.bf16 %v1484, %v1484
      %v1501 = vpack.c.bf16 %v1485, %v1485
      %v1502 = vpack.c.bf16 %v1486, %v1486
      %v1503 = vpack.c.bf16 %v1487, %v1487
      %v1504 = vpack.c.bf16 %v1488, %v1488
      %v1505 = vpack.c.bf16 %v1489, %v1489
      %v1506 = vpack.c.bf16 %v1490, %v1490
      %v1507 = vpack.c.bf16 %v1491, %v1491
      %v1508 = vpack.c.bf16 %v1492, %v1492
      %1509 = vst.msk [vmem:[%s407] sm:$0xf] %vm858, %v1493
      %1510 = vst.msk [vmem:[%s407 + $0x4] sm:$0xf] %vm858, %v1494
      %1511 = vst.msk [vmem:[%s407 + $0x8] sm:$0xf] %vm858, %v1495
      %1512 = vst.msk [vmem:[%s407 + $0xc] sm:$0xf] %vm858, %v1496
      %1513 = vst.msk [vmem:[%s407 + $0x10] sm:$0xf] %vm858, %v1497
      %1514 = vst.msk [vmem:[%s407 + $0x14] sm:$0xf] %vm858, %v1498
      %1515 = vst.msk [vmem:[%s407 + $0x18] sm:$0xf] %vm858, %v1499
      %1516 = vst.msk [vmem:[%s407 + $0x1c] sm:$0xf] %vm858, %v1500
      %1517 = vst.msk [vmem:[%s407 + $0x20] sm:$0xf] %vm858, %v1501
      %1518 = vst.msk [vmem:[%s407 + $0x24] sm:$0xf] %vm858, %v1502
      %1519 = vst.msk [vmem:[%s407 + $0x28] sm:$0xf] %vm858, %v1503
      %1520 = vst.msk [vmem:[%s407 + $0x2c] sm:$0xf] %vm858, %v1504
      %1521 = vst.msk [vmem:[%s407 + $0x30] sm:$0xf] %vm858, %v1505
      %1522 = vst.msk [vmem:[%s407 + $0x34] sm:$0xf] %vm858, %v1506
      %1523 = vst.msk [vmem:[%s407 + $0x38] sm:$0xf] %vm858, %v1507
      %1524 = vst.msk [vmem:[%s407 + $0x3c] sm:$0xf] %vm858, %v1508
      %v1525 = vld [vmem:[#allocation3] ss:$2 sm:$0xff]
      %s1526 = scalar_lea.vmem [#allocation3], 16
      %v1527 = vld [vmem:[%s1526] ss:$2 sm:$0xff]
      %s1528 = scalar_lea.vmem [#allocation3], 32
      %v1529 = vld [vmem:[%s1528] ss:$2 sm:$0xff]
      %s1530 = scalar_lea.vmem [#allocation3], 48
      %v1531 = vld [vmem:[%s1530] ss:$2 sm:$0xff]
      %s1532 = scalar_lea.vmem [#allocation3], 64
      %v1533 = vld [vmem:[%s1532] ss:$2 sm:$0xff]
      %s1534 = scalar_lea.vmem [#allocation3], 80
      %v1535 = vld [vmem:[%s1534] ss:$2 sm:$0xff]
      %s1536 = scalar_lea.vmem [#allocation3], 96
      %v1537 = vld [vmem:[%s1536] ss:$2 sm:$0xff]
      %s1538 = scalar_lea.vmem [#allocation3], 112
      %v1539 = vld [vmem:[%s1538] ss:$2 sm:$0xff]
      %s1540 = scalar_lea.vmem [#allocation3], 128
      %v1541 = vld [vmem:[%s1540] ss:$2 sm:$0xff]
      %s1542 = scalar_lea.vmem [#allocation3], 144
      %v1543 = vld [vmem:[%s1542] ss:$2 sm:$0xff]
      %s1544 = scalar_lea.vmem [#allocation3], 160
      %v1545 = vld [vmem:[%s1544] ss:$2 sm:$0xff]
      %s1546 = scalar_lea.vmem [#allocation3], 176
      %v1547 = vld [vmem:[%s1546] ss:$2 sm:$0xff]
      %s1548 = scalar_lea.vmem [#allocation3], 192
      %v1549 = vld [vmem:[%s1548] ss:$2 sm:$0xff]
      %s1550 = scalar_lea.vmem [#allocation3], 208
      %v1551 = vld [vmem:[%s1550] ss:$2 sm:$0xff]
      %s1552 = scalar_lea.vmem [#allocation3], 224
      %v1553 = vld [vmem:[%s1552] ss:$2 sm:$0xff]
      %s1554 = scalar_lea.vmem [#allocation3], 240
      %v1555 = vld [vmem:[%s1554] ss:$2 sm:$0xff]
      %s1556 = scalar_lea.vmem [#allocation3], 1
      %v1557 = vld [vmem:[%s1556] ss:$2 sm:$0xff]
      %s1558 = scalar_lea.vmem [#allocation3], 17
      %v1559 = vld [vmem:[%s1558] ss:$2 sm:$0xff]
      %s1560 = scalar_lea.vmem [#allocation3], 33
      %v1561 = vld [vmem:[%s1560] ss:$2 sm:$0xff]
      %s1562 = scalar_lea.vmem [#allocation3], 49
      %v1563 = vld [vmem:[%s1562] ss:$2 sm:$0xff]
      %s1564 = scalar_lea.vmem [#allocation3], 65
      %v1565 = vld [vmem:[%s1564] ss:$2 sm:$0xff]
      %s1566 = scalar_lea.vmem [#allocation3], 81
      %v1567 = vld [vmem:[%s1566] ss:$2 sm:$0xff]
      %s1568 = scalar_lea.vmem [#allocation3], 97
      %v1569 = vld [vmem:[%s1568] ss:$2 sm:$0xff]
      %s1570 = scalar_lea.vmem [#allocation3], 113
      %v1571 = vld [vmem:[%s1570] ss:$2 sm:$0xff]
      %s1572 = scalar_lea.vmem [#allocation3], 129
      %v1573 = vld [vmem:[%s1572] ss:$2 sm:$0xff]
      %s1574 = scalar_lea.vmem [#allocation3], 145
      %v1575 = vld [vmem:[%s1574] ss:$2 sm:$0xff]
      %s1576 = scalar_lea.vmem [#allocation3], 161
      %v1577 = vld [vmem:[%s1576] ss:$2 sm:$0xff]
      %s1578 = scalar_lea.vmem [#allocation3], 177
      %v1579 = vld [vmem:[%s1578] ss:$2 sm:$0xff]
      %s1580 = scalar_lea.vmem [#allocation3], 193
      %v1581 = vld [vmem:[%s1580] ss:$2 sm:$0xff]
      %s1582 = scalar_lea.vmem [#allocation3], 209
      %v1583 = vld [vmem:[%s1582] ss:$2 sm:$0xff]
      %s1584 = scalar_lea.vmem [#allocation3], 225
      %v1585 = vld [vmem:[%s1584] ss:$2 sm:$0xff]
      %s1586 = scalar_lea.vmem [#allocation3], 241
      %v1587 = vld [vmem:[%s1586] ss:$2 sm:$0xff]
      %v1588 = vmax.f32 %v1525, %v1557
      %v1589 = vmax.f32 %v1527, %v1559
      %v1590 = vmax.f32 %v1529, %v1561
      %v1591 = vmax.f32 %v1531, %v1563
      %v1592 = vmax.f32 %v1533, %v1565
      %v1593 = vmax.f32 %v1535, %v1567
      %v1594 = vmax.f32 %v1537, %v1569
      %v1595 = vmax.f32 %v1539, %v1571
      %v1596 = vmax.f32 %v1541, %v1573
      %v1597 = vmax.f32 %v1543, %v1575
      %v1598 = vmax.f32 %v1545, %v1577
      %v1599 = vmax.f32 %v1547, %v1579
      %v1600 = vmax.f32 %v1549, %v1581
      %v1601 = vmax.f32 %v1551, %v1583
      %v1602 = vmax.f32 %v1553, %v1585
      %v1603 = vmax.f32 %v1555, %v1587
      %v1604 = vpack.c.bf16 %v1588, %v1588
      %v1605 = vpack.c.bf16 %v1589, %v1589
      %v1606 = vpack.c.bf16 %v1590, %v1590
      %v1607 = vpack.c.bf16 %v1591, %v1591
      %v1608 = vpack.c.bf16 %v1592, %v1592
      %v1609 = vpack.c.bf16 %v1593, %v1593
      %v1610 = vpack.c.bf16 %v1594, %v1594
      %v1611 = vpack.c.bf16 %v1595, %v1595
      %v1612 = vpack.c.bf16 %v1596, %v1596
      %v1613 = vpack.c.bf16 %v1597, %v1597
      %v1614 = vpack.c.bf16 %v1598, %v1598
      %v1615 = vpack.c.bf16 %v1599, %v1599
      %v1616 = vpack.c.bf16 %v1600, %v1600
      %v1617 = vpack.c.bf16 %v1601, %v1601
      %v1618 = vpack.c.bf16 %v1602, %v1602
      %v1619 = vpack.c.bf16 %v1603, %v1603
      %1620 = vst.msk [vmem:[%s417] sm:$0xf] %vm858, %v1604
      %1621 = vst.msk [vmem:[%s417 + $0x4] sm:$0xf] %vm858, %v1605
      %1622 = vst.msk [vmem:[%s417 + $0x8] sm:$0xf] %vm858, %v1606
      %1623 = vst.msk [vmem:[%s417 + $0xc] sm:$0xf] %vm858, %v1607
      %1624 = vst.msk [vmem:[%s417 + $0x10] sm:$0xf] %vm858, %v1608
      %1625 = vst.msk [vmem:[%s417 + $0x14] sm:$0xf] %vm858, %v1609
      %1626 = vst.msk [vmem:[%s417 + $0x18] sm:$0xf] %vm858, %v1610
      %1627 = vst.msk [vmem:[%s417 + $0x1c] sm:$0xf] %vm858, %v1611
      %1628 = vst.msk [vmem:[%s417 + $0x20] sm:$0xf] %vm858, %v1612
      %1629 = vst.msk [vmem:[%s417 + $0x24] sm:$0xf] %vm858, %v1613
      %1630 = vst.msk [vmem:[%s417 + $0x28] sm:$0xf] %vm858, %v1614
      %1631 = vst.msk [vmem:[%s417 + $0x2c] sm:$0xf] %vm858, %v1615
      %1632 = vst.msk [vmem:[%s417 + $0x30] sm:$0xf] %vm858, %v1616
      %1633 = vst.msk [vmem:[%s417 + $0x34] sm:$0xf] %vm858, %v1617
      %1634 = vst.msk [vmem:[%s417 + $0x38] sm:$0xf] %vm858, %v1618
      %1635 = vst.msk [vmem:[%s417 + $0x3c] sm:$0xf] %vm858, %v1619
      %s1636 = smul.u32 64, %s26
      %p1637 = scmp.lt.s32.totalorder %s25, 1
      %s1638 = scalar_select %p1637, %s25, 1
      %p1639 = scmp.lt.s32.totalorder %s1636, 127
      %s1640 = scalar_select %p1639, %s1636, 127
      %s1641 = smul.addr %s1638, 128
      %s1642 = sadd.s32 %s1640, %s1641
      %s1643 = smul.addr %s1642, 4
      %s1644 = scalar_lea.vmem %s7, %s1643
      %s1645 = smul.u32 16, %s26
      %p1646 = scmp.lt.s32.totalorder %s25, 1
      %s1647 = scalar_select %p1646, %s25, 1
      %p1648 = scmp.lt.s32.totalorder %s1645, 31
      %s1649 = scalar_select %p1648, %s1645, 31
      %s1650 = smul.addr %s1647, 32
      %s1651 = sadd.s32 %s1649, %s1650
      %s1652 = smul.addr %s1651, 4
      %s1653 = scalar_lea.vmem %s8, %s1652
      %s1654 = smul.u32 16, %s26
      %p1655 = scmp.lt.s32.totalorder %s25, 1
      %s1656 = scalar_select %p1655, %s25, 1
      %p1657 = scmp.lt.s32.totalorder %s1654, 31
      %s1658 = scalar_select %p1657, %s1654, 31
      %s1659 = smul.addr %s1656, 32
      %s1660 = sadd.s32 %s1658, %s1659
      %s1661 = smul.addr %s1660, 4
      %s1662 = scalar_lea.vmem %s9, %s1661
      // Predicated region
      $region49: #{nonlocal_block_forward.2} parent=47 // pred_check
        %p1663 = pneg %p207
      $region50: #{nonlocal_block_forward.2} parent=47 // pred_check_branch
        %1665 = sbr.rel (%p1663) target = $region52
      $region51: #{nonlocal_block_forward.2} parent=47 // pred_region
        %s1666 = smul.u32 64, %s26
      $region52: #{nonlocal_block_forward.2} parent=47 // pred_fallthru
        _
      // Predicated region
      $region53: #{nonlocal_block_forward.2} parent=47 // pred_check
        %p1667 = pneg %p235
      $region54: #{nonlocal_block_forward.2} parent=47 // pred_check_branch
        %1669 = sbr.rel (%p1667) target = $region56
      $region55: #{nonlocal_block_forward.2} parent=47 // pred_region
        %s1670 = smul.u32 16, %s26
      $region56: #{nonlocal_block_forward.2} parent=47 // pred_fallthru
        _
      // Predicated region
      $region57: #{nonlocal_block_forward.2} parent=47 // pred_check
        %p1671 = pneg %p263
      $region58: #{nonlocal_block_forward.2} parent=47 // pred_check_branch
        %1673 = sbr.rel (%p1671) target = $region60
      $region59: #{nonlocal_block_forward.2} parent=47 // pred_region
        %s1674 = smul.u32 16, %s26
      $region60: #{nonlocal_block_forward.2} parent=47 // pred_fallthru
        _
    $region48: #{nonlocal_block_forward.2} parent=5 // pred_fallthru
      _
    %p1675 = scmp.le.s32.totalorder 2, %s16
    // Predicated region
    $region61: #{nonlocal_block_forward.2} parent=5 // pred_check
      %p1676 = pneg %p1675
    $region62: #{nonlocal_block_forward.2} parent=5 // pred_check_branch
      %1678 = sbr.rel (%p1676) target = $region64
    $region63: #{nonlocal_block_forward.2} parent=5 // pred_region
      %s1679 = ssub.s32 %s16, 2
      // Predicated region
      $region65: #{nonlocal_block_forward.2} parent=63 // pred_check
        %p1680 = pneg %p213
      $region66: #{nonlocal_block_forward.2} parent=63 // pred_check_branch
        %1682 = sbr.rel (%p1680) target = $region68
      $region67: #{nonlocal_block_forward.2} parent=63 // pred_region
        %s1683 = smul.u32 64, %s28
        %p1684 = scmp.lt.s32.totalorder %s27, 1
        %s1685 = scalar_select %p1684, %s27, 1
        %p1686 = scmp.lt.s32.totalorder %s1683, 127
        %s1687 = scalar_select %p1686, %s1683, 127
        %s1688 = smul.addr %s1685, 128
        %s1689 = sadd.s32 %s1687, %s1688
        %s1690 = smul.addr %s1689, 4
        %s1691 = scalar_lea.vmem %s7, %s1690
      $region68: #{nonlocal_block_forward.2} parent=63 // pred_fallthru
        _
      // Predicated region
      $region69: #{nonlocal_block_forward.2} parent=63 // pred_check
        %p1692 = pneg %p241
      $region70: #{nonlocal_block_forward.2} parent=63 // pred_check_branch
        %1694 = sbr.rel (%p1692) target = $region72
      $region71: #{nonlocal_block_forward.2} parent=63 // pred_region
        %s1695 = smul.u32 16, %s28
        %p1696 = scmp.lt.s32.totalorder %s27, 1
        %s1697 = scalar_select %p1696, %s27, 1
        %p1698 = scmp.lt.s32.totalorder %s1695, 31
        %s1699 = scalar_select %p1698, %s1695, 31
        %s1700 = smul.addr %s1697, 32
        %s1701 = sadd.s32 %s1699, %s1700
        %s1702 = smul.addr %s1701, 4
        %s1703 = scalar_lea.vmem %s8, %s1702
      $region72: #{nonlocal_block_forward.2} parent=63 // pred_fallthru
        _
      // Predicated region
      $region73: #{nonlocal_block_forward.2} parent=63 // pred_check
        %p1704 = pneg %p269
      $region74: #{nonlocal_block_forward.2} parent=63 // pred_check_branch
        %1706 = sbr.rel (%p1704) target = $region76
      $region75: #{nonlocal_block_forward.2} parent=63 // pred_region
        %s1707 = smul.u32 16, %s28
        %p1708 = scmp.lt.s32.totalorder %s27, 1
        %s1709 = scalar_select %p1708, %s27, 1
        %p1710 = scmp.lt.s32.totalorder %s1707, 31
        %s1711 = scalar_select %p1710, %s1707, 31
        %s1712 = smul.addr %s1709, 32
        %s1713 = sadd.s32 %s1711, %s1712
        %s1714 = smul.addr %s1713, 4
        %s1715 = scalar_lea.vmem %s9, %s1714
      $region76: #{nonlocal_block_forward.2} parent=63 // pred_fallthru
        _
    $region64: #{nonlocal_block_forward.2} parent=5 // pred_fallthru
      _
  $region6: #{nonlocal_block_forward.2} parent=0 // loop_footer
    %s20 = sadd.s32 1, %s16
  $region7: #{nonlocal_block_forward.2} parent=0 // loop_footer_branch
    %15 = sbr.rel target = $region3
  $region8: #{nonlocal_block_forward.2} parent=0 // loop_exit
    _

</llo_original>
